<compile_context>
chip_gen: v5e
topology: v5e:2x2
jax: 0.10.0
libtpu: 0.0.40
codegen_flags: <defaults>
</compile_context>

<pallas_src>
import math
import functools

import jax
import jax.numpy as jnp
from jax.experimental import pallas as pl
from jax.experimental.pallas import tpu as pltpu


# Rows of the packed (8, D) bias / LayerNorm parameter block.
_PV_BQ, _PV_BO, _PV_LN1G, _PV_LN1B, _PV_B2, _PV_LN2G, _PV_LN2B = range(7)
_PVEC_ROWS = 8  # padded to a full sublane tile

# Flipped off automatically if this JAX build rejects pipeline_mode=pl.Buffered(1).
_USE_SINGLE_BUFFER = True


# ----------------------------- Pallas kernel --------------------------------

def _layernorm(x, gamma, beta, eps=1e-5):
    # x: (T, D) f32; gamma/beta: (1, D) f32
    mean = jnp.mean(x, axis=-1, keepdims=True)
    var = jnp.mean((x - mean) ** 2, axis=-1, keepdims=True)
    inv = jax.lax.rsqrt(var + eps)
    return (x - mean) * inv * gamma + beta


def encoder_block_kernel(
    xq_ref, xkv_ref,
    wq_ref, wkv_ref, bkv_ref, wo_ref, pvec_ref,
    w1_ref, b1_ref, w2_ref,
    o_ref,
    kv_scr, ctx_scr, h1f_scr, h1b_scr, ff_acc,
    *, n_heads, depth, kv_chunks,
):
    qi = pl.program_id(1)
    f = pl.program_id(2)
    last_f = pl.num_programs(2) - 1
    d_model = n_heads * depth

    # --- phase 1 (f == 0): attention + output projection + residual + LN1 ----
    @pl.when(f == 0)
    def _attention_phase():
        # K/V projection once per batch element (fused (D, 2D) weight), chunked
        # over S so the f32 transient is bounded to (tq, 2D).
        @pl.when(qi == 0)
        def _fill_kv():
            chunk = xq_ref.shape[0]                       # == tq, S = kv_chunks * tq
            bkv = bkv_ref[...]                            # (1, 2D) f32
            for c in range(kv_chunks):                    # static chunk loop
                rows = pl.ds(c * chunk, chunk)
                xc = xkv_ref[rows, :].astype(jnp.bfloat16)
                kvc = jnp.dot(xc, wkv_ref[...],
                              preferred_element_type=jnp.float32) + bkv
                kv_scr[rows, :] = kvc.astype(jnp.bfloat16)

        xq = xq_ref[...].astype(jnp.float32)              # (tq, D) query tile
        q = (jnp.dot(xq.astype(jnp.bfloat16), wq_ref[...],
                     preferred_element_type=jnp.float32)
             + pvec_ref[_PV_BQ:_PV_BQ + 1, :]).astype(jnp.bfloat16)

        scale = 1.0 / math.sqrt(depth)
        # TODO(synk): optional attention mask (masked_fill with -1e9) not wired
        # through; the module's forward is exercised with mask=None.
        for h in range(n_heads):                          # per-head attention
            lo = h * depth
            qh = q[:, lo:lo + depth]                      # (tq, depth) bf16
            kh = kv_scr[:, lo:lo + depth]                 # (S, depth)  bf16
            vh = kv_scr[:, d_model + lo:d_model + lo + depth]
            s = jnp.dot(qh, kh.T, preferred_element_type=jnp.float32) * scale
            s = s - jnp.max(s, axis=-1, keepdims=True)
            p = jnp.exp(s)
            p = p / jnp.sum(p, axis=-1, keepdims=True)    # exact softmax
            ctx_scr[:, lo:lo + depth] = jnp.dot(
                p.astype(jnp.bfloat16), vh, preferred_element_type=jnp.float32)

        # Single full-D contraction through wo (instead of per-head matmuls).
        attn_out = (jnp.dot(ctx_scr[...].astype(jnp.bfloat16), wo_ref[...],
                            preferred_element_type=jnp.float32)
                    + pvec_ref[_PV_BO:_PV_BO + 1, :])
        h1 = _layernorm(xq + attn_out,
                        pvec_ref[_PV_LN1G:_PV_LN1G + 1, :],
                        pvec_ref[_PV_LN1B:_PV_LN1B + 1, :])
        h1f_scr[...] = h1
        h1b_scr[...] = h1.astype(jnp.bfloat16)            # cached bf16 copy for FFN
        ff_acc[...] = jnp.zeros_like(ff_acc)

    # --- phase 2 (every f): one F-tile of the feed-forward -------------------
    ff = jnp.dot(h1b_scr[...], w1_ref[...],
                 preferred_element_type=jnp.float32) + b1_ref[...]   # (tq, tf)
    ff = jnp.maximum(ff, 0.0)
    ff_acc[...] += jnp.dot(ff.astype(jnp.bfloat16), w2_ref[...],
                           preferred_element_type=jnp.float32)       # (tq, D)

    # --- phase 3 (last f): bias + residual + LN2 + store ----------------------
    @pl.when(f == last_f)
    def _finalize():
        h2 = _layernorm(h1f_scr[...] + ff_acc[...] + pvec_ref[_PV_B2:_PV_B2 + 1, :],
                        pvec_ref[_PV_LN2G:_PV_LN2G + 1, :],
                        pvec_ref[_PV_LN2B:_PV_LN2B + 1, :])
        o_ref[...] = h2.astype(o_ref.dtype)


# ------------------------------ wrapper --------------------------------------

def _nbytes(shape, dtype):
    return math.prod(shape) * jnp.dtype(dtype).itemsize


def _device_kind():
    try:
        return jax.devices()[0].device_kind.lower()
    except Exception:
        return ""


def _vmem_capacity_bytes():
    try:
        return int(pltpu.get_tpu_info().vmem_capacity_bytes)
    except Exception:
        # v7x has 64 MiB per TensorCore; v5e/v6e have 128 MiB.
        return (64 << 20) if "v7" in _device_kind() else (128 << 20)


def _wide_mxu():
    kind = _device_kind()
    return ("v6" in kind) or ("v7" in kind)


def encoder_block(x, params, *, n_heads, tq=None, tf=None):
    """One EncoderBlock forward. x: (B, S, D) float32, matmul weights bf16."""
    global _USE_SINGLE_BUFFER

    B, S, D = x.shape
    assert D % n_heads == 0, "d_model must be divisible by n_heads"
    depth = D // n_heads
    F = params["w1"].shape[1]

    # Generation-aware tile defaults: 256-wide MXU on v6e/v7x, 128 on v5e.
    if tq is None:
        cap_q = 256 if _wide_mxu() else 128
        if S <= cap_q:
            tq = S
        elif S % cap_q == 0:
            tq = cap_q
        elif S % 128 == 0:
            tq = 128
        else:
            tq = S
    if tf is None:
        cap_f = 1024 if _wide_mxu() else 512
        if F <= cap_f:
            tf = F
        elif F % cap_f == 0:
            tf = cap_f
        elif F % 512 == 0:
            tf = 512
        else:
            tf = F
    assert S % tq == 0 and F % tf == 0
    grid = (B, S // tq, F // tf)

    kernel = functools.partial(encoder_block_kernel,
                               n_heads=n_heads, depth=depth, kv_chunks=S // tq)

    args = (x, x,
            params["wq"], params["wkv"], params["bkv"], params["wo"], params["pvec"],
            params["w1"], params["b1"], params["w2"])

    def build(single_buffer):
        def const(shape):
            # Constant-index operands: single-buffer (the block never changes).
            if single_buffer:
                return pl.BlockSpec(shape, lambda b, qi, fi: (0,) * len(shape),
                                    pipeline_mode=pl.Buffered(1))
            return pl.BlockSpec(shape, lambda b, qi, fi: (0,) * len(shape))

        if single_buffer:
            xkv_spec = pl.BlockSpec((None, S, D), lambda b, qi, fi: (b, 0, 0),
                                    pipeline_mode=pl.Buffered(1))
        else:
            xkv_spec = pl.BlockSpec((None, S, D), lambda b, qi, fi: (b, 0, 0))

        in_specs = [
            pl.BlockSpec((None, tq, D), lambda b, qi, fi: (b, qi, 0)),  # x query tile
            xkv_spec,                                                   # x full seq (K/V)
            const((D, D)),                                              # wq
            const((D, 2 * D)),                                          # wkv (fused K|V)
            const((1, 2 * D)),                                          # bkv
            const((D, D)),                                              # wo
            const((_PVEC_ROWS, D)),                                     # packed biases/LN
            pl.BlockSpec((D, tf), lambda b, qi, fi: (0, fi)),           # w1 F-tile
            pl.BlockSpec((1, tf), lambda b, qi, fi: (0, fi)),           # b1 F-tile
            pl.BlockSpec((tf, D), lambda b, qi, fi: (fi, 0)),           # w2 F-tile
        ]
        out_specs = pl.BlockSpec((None, tq, D), lambda b, qi, fi: (b, qi, 0))

        # Explicit VMEM budget, clamped to the physical capacity of this chip.
        single = (_nbytes((S, D), x.dtype)
                  + 2 * _nbytes((D, D), jnp.bfloat16)        # wq, wo
                  + _nbytes((D, 2 * D), jnp.bfloat16)        # wkv
                  + _nbytes((1, 2 * D), jnp.float32)         # bkv
                  + _nbytes((_PVEC_ROWS, D), jnp.float32))   # pvec
        double = (2 * _nbytes((tq, D), x.dtype)              # xq block + out block
                  + _nbytes((D, tf), jnp.bfloat16)
                  + _nbytes((1, tf), jnp.float32)
                  + _nbytes((tf, D), jnp.bfloat16))
        scratch = (_nbytes((S, 2 * D), jnp.bfloat16)         # persistent K|V
                   + 3 * _nbytes((tq, D), jnp.float32)       # ctx, h1 f32, ff_acc
                   + _nbytes((tq, D), jnp.bfloat16))         # h1 bf16
        need = (1 if single_buffer else 2) * single + 2 * double + scratch
        cap = _vmem_capacity_bytes()
        vmem_limit = int(min(max(32 << 20, 2 * need + (4 << 20)), cap - (8 << 20)))

        # The batch axis is "parallel" (sharded across TensorCores on v7x when
        # B >= 2); qi must stay "arbitrary" so the per-batch K/V scratch filled
        # at qi==0 is valid for every query tile of that batch element.
        # TODO(synk): for B == 1 on v7x, split the qi axis across cores instead
        # (pltpu.CORE_PARALLEL / pl.core_map) and fill K/V per core.
        return pl.pallas_call(
            kernel,
            out_shape=jax.ShapeDtypeStruct((B, S, D), x.dtype),
            grid_spec=pltpu.PrefetchScalarGridSpec(
                num_scalar_prefetch=0,
                grid=grid,
                in_specs=in_specs,
                out_specs=out_specs,
                scratch_shapes=[
                    pltpu.VMEM((S, 2 * D), jnp.bfloat16),  # packed K|V for current batch
                    pltpu.VMEM((tq, D), jnp.float32),      # per-head context buffer
                    pltpu.VMEM((tq, D), jnp.float32),      # h1 (post-LN1) f32
                    pltpu.VMEM((tq, D), jnp.bfloat16),     # h1 bf16 for FFN matmuls
                    pltpu.VMEM((tq, D), jnp.float32),      # FFN output accumulator
                ],
            ),
            compiler_params=pltpu.CompilerParams(
                dimension_semantics=("parallel", "arbitrary", "arbitrary"),
                vmem_limit_bytes=vmem_limit,
            ),
        )

    if _USE_SINGLE_BUFFER:
        try:
            return build(single_buffer=True)(*args)
        except Exception:
            # This JAX/Mosaic build rejected pipeline_mode=pl.Buffered(1);
            # fall back to default double-buffering (identical numerics).
            _USE_SINGLE_BUFFER = False
    return build(single_buffer=False)(*args)


def transformer_encoder(x, layer_params, *, n_heads):
    for p in layer_params:
        x = encoder_block(x, p, n_heads=n_heads)
    return x


# ----------------------- deterministic parameter init ------------------------

def xavier_uniform(key, fan_in, fan_out):
    limit = math.sqrt(6.0 / (fan_in + fan_out))
    # stored as (in, out) so the kernel does x @ W; bf16 for the MXU.
    w = jax.random.uniform(key, (fan_in, fan_out), jnp.float32, -limit, limit)
    return w.astype(jnp.bfloat16)


def init_layer_params(key, d_model, dim_ff):
    ks = jax.random.split(key, 6)
    D, F = d_model, dim_ff
    wq = xavier_uniform(ks[0], D, D)
    wk = xavier_uniform(ks[1], D, D)
    wv = xavier_uniform(ks[2], D, D)
    wo = xavier_uniform(ks[3], D, D)
    w1 = xavier_uniform(ks[4], D, F)
    w2 = xavier_uniform(ks[5], F, D)

    # Packed bias / LayerNorm parameters: rows bq, bo, ln1_g, ln1_b, b2, ln2_g, ln2_b.
    # Matches _reset_params: xavier weights, zero biases; LN gamma=1, beta=0.
    pvec = jnp.zeros((_PVEC_ROWS, D), jnp.float32)
    pvec = pvec.at[_PV_LN1G].set(1.0).at[_PV_LN2G].set(1.0)

    return {
        "wq": wq,
        "wkv": jnp.concatenate([wk, wv], axis=1),            # fused (D, 2D)
        "bkv": jnp.zeros((1, 2 * D), jnp.float32),
        "wo": wo,
        "pvec": pvec,
        "w1": w1, "b1": jnp.zeros((1, F), jnp.float32),
        "w2": w2,
    }


# ------------------------------- main -----------------------------------------

if __name__ == "__main__":
    n_layers, d_model, n_heads, dim_ff = 2, 32, 4, 64
    batch, seq = 2, 8

    key = jax.random.PRNGKey(0)
    kx, *kls = jax.random.split(key, 1 + n_layers)
    x = jax.random.normal(kx, (batch, seq, d_model), jnp.float32)

    layer_params = [init_layer_params(k, d_model, dim_ff) for k in kls]

    out = transformer_encoder(x, layer_params, n_heads=n_heads)
    out = jax.block_until_ready(out)

    assert out.shape == (batch, seq, d_model)
    assert bool(jnp.all(jnp.isfinite(out)))
    print("KERNEL_OK")
</pallas_src>

<mosaic_0001>
module attributes {stable_mosaic.version = 11 : i64} {
  func.func @encoder_block_kernel(%arg0: i32, %arg1: i32, %arg2: i32, %arg3: memref<1x8x32xf32, #tpu.memory_space<vmem>>, %arg4: memref<1x8x32xf32, #tpu.memory_space<vmem>>, %arg5: memref<32x32xbf16, #tpu.memory_space<vmem>>, %arg6: memref<32x64xbf16, #tpu.memory_space<vmem>>, %arg7: memref<1x64xf32, #tpu.memory_space<vmem>>, %arg8: memref<32x32xbf16, #tpu.memory_space<vmem>>, %arg9: memref<8x32xf32, #tpu.memory_space<vmem>>, %arg10: memref<32x64xbf16, #tpu.memory_space<vmem>>, %arg11: memref<1x64xf32, #tpu.memory_space<vmem>>, %arg12: memref<64x32xbf16, #tpu.memory_space<vmem>>, %arg13: memref<1x8x32xf32, #tpu.memory_space<vmem>>, %arg14: memref<8x64xbf16, #tpu.memory_space<vmem>>, %arg15: memref<8x32xf32, #tpu.memory_space<vmem>>, %arg16: memref<8x32xf32, #tpu.memory_space<vmem>>, %arg17: memref<8x32xbf16, #tpu.memory_space<vmem>>, %arg18: memref<8x32xf32, #tpu.memory_space<vmem>>) attributes {dimension_semantics = [#tpu.dimension_semantics<parallel>, #tpu.dimension_semantics<arbitrary>, #tpu.dimension_semantics<arbitrary>], iteration_bounds = array<i64: 2, 1, 1>, scalar_prefetch = 0 : i64, scratch_operands = 5 : i64, tpu.core_type = #tpu.core_type<tc>, window_params = [{transform_indices = @transform_0, window_bounds = array<i64: 1, 8, 32>}, {pipeline_mode = #tpu.pipeline_mode<synchronous>, transform_indices = @transform_1, window_bounds = array<i64: 1, 8, 32>}, {pipeline_mode = #tpu.pipeline_mode<synchronous>, transform_indices = @transform_2, window_bounds = array<i64: 32, 32>}, {pipeline_mode = #tpu.pipeline_mode<synchronous>, transform_indices = @transform_3, window_bounds = array<i64: 32, 64>}, {pipeline_mode = #tpu.pipeline_mode<synchronous>, transform_indices = @transform_4, window_bounds = array<i64: 1, 64>}, {pipeline_mode = #tpu.pipeline_mode<synchronous>, transform_indices = @transform_5, window_bounds = array<i64: 32, 32>}, {pipeline_mode = #tpu.pipeline_mode<synchronous>, transform_indices = @transform_6, window_bounds = array<i64: 8, 32>}, {transform_indices = @transform_7, window_bounds = array<i64: 32, 64>}, {transform_indices = @transform_8, window_bounds = array<i64: 1, 64>}, {transform_indices = @transform_9, window_bounds = array<i64: 64, 32>}, {transform_indices = @transform_10, window_bounds = array<i64: 1, 8, 32>}]} {
    %c0_i32 = arith.constant 0 : i32
    %0 = arith.cmpi eq, %arg2, %c0_i32 : i32
    %1 = arith.extui %0 : i1 to i32
    %c0_i32_0 = arith.constant 0 : i32
    %2 = arith.cmpi ne, %1, %c0_i32_0 : i32
    scf.if %2 {
      %c0_i32_16 = arith.constant 0 : i32
      %20 = arith.cmpi eq, %arg1, %c0_i32_16 : i32
      %21 = arith.extui %20 : i1 to i32
      %c0_i32_17 = arith.constant 0 : i32
      %22 = arith.cmpi ne, %21, %c0_i32_17 : i32
      scf.if %22 {
        %c0_83 = arith.constant 0 : index
        %c0_84 = arith.constant 0 : index
        %145 = vector.load %arg7[%c0_83, %c0_84] : memref<1x64xf32, #tpu.memory_space<vmem>>, vector<1x64xf32>
        %c0_85 = arith.constant 0 : index
        %c0_86 = arith.constant 0 : index
        %c0_87 = arith.constant 0 : index
        %146 = vector.load %arg4[%c0_85, %c0_86, %c0_87] : memref<1x8x32xf32, #tpu.memory_space<vmem>>, vector<1x8x32xf32>
        %147 = vector.shape_cast %146 : vector<1x8x32xf32> to vector<8x32xf32>
        %148 = arith.truncf %147 : vector<8x32xf32> to vector<8x32xbf16>
        %c0_88 = arith.constant 0 : index
        %c0_89 = arith.constant 0 : index
        %149 = vector.load %arg6[%c0_88, %c0_89] : memref<32x64xbf16, #tpu.memory_space<vmem>>, vector<32x64xbf16>
        %cst_90 = arith.constant dense<0.000000e+00> : vector<8x64xf32>
        %150 = tpu.matmul %148, %149, %cst_90 {dimension_numbers = #tpu.dot_dimension_numbers<[1], [0], [0], [1], [0, 0, 1, 1], [], []>} : vector<8x32xbf16>, vector<32x64xbf16>, vector<8x64xf32> -> vector<8x64xf32>
        %151 = vector.broadcast %145 : vector<1x64xf32> to vector<8x64xf32>
        %152 = arith.addf %150, %151 : vector<8x64xf32>
        %153 = arith.truncf %152 : vector<8x64xf32> to vector<8x64xbf16>
        %c0_91 = arith.constant 0 : index
        %c0_92 = arith.constant 0 : index
        %154 = vector.load %arg14[%c0_91, %c0_92] : memref<8x64xbf16, #tpu.memory_space<vmem>>, vector<8x64xbf16>
        tpu.vector_store %arg14[%c0_91, %c0_92], %153 {strides = array<i32>} : memref<8x64xbf16, #tpu.memory_space<vmem>>, vector<8x64xbf16>,
      } else {
      }
      %c0_18 = arith.constant 0 : index
      %c0_19 = arith.constant 0 : index
      %c0_20 = arith.constant 0 : index
      %23 = vector.load %arg3[%c0_18, %c0_19, %c0_20] : memref<1x8x32xf32, #tpu.memory_space<vmem>>, vector<1x8x32xf32>
      %24 = vector.shape_cast %23 : vector<1x8x32xf32> to vector<8x32xf32>
      %25 = arith.truncf %24 : vector<8x32xf32> to vector<8x32xbf16>
      %c0_21 = arith.constant 0 : index
      %c0_22 = arith.constant 0 : index
      %26 = vector.load %arg5[%c0_21, %c0_22] : memref<32x32xbf16, #tpu.memory_space<vmem>>, vector<32x32xbf16>
      %cst_23 = arith.constant dense<0.000000e+00> : vector<8x32xf32>
      %27 = tpu.matmul %25, %26, %cst_23 {dimension_numbers = #tpu.dot_dimension_numbers<[1], [0], [0], [1], [0, 0, 1, 1], [], []>} : vector<8x32xbf16>, vector<32x32xbf16>, vector<8x32xf32> -> vector<8x32xf32>
      %c0_24 = arith.constant 0 : index
      %c0_25 = arith.constant 0 : index
      %28 = vector.load %arg9[%c0_24, %c0_25] : memref<8x32xf32, #tpu.memory_space<vmem>>, vector<1x32xf32>
      %29 = vector.broadcast %28 : vector<1x32xf32> to vector<8x32xf32>
      %30 = arith.addf %27, %29 : vector<8x32xf32>
      %31 = arith.truncf %30 : vector<8x32xf32> to vector<8x32xbf16>
      %32 = vector.extract_strided_slice %31 {offsets = [0, 0], sizes = [8, 8], strides = [1, 1]} : vector<8x32xbf16> to vector<8x8xbf16>
      %c0_26 = arith.constant 0 : index
      %c0_27 = arith.constant 0 : index
      %33 = vector.load %arg14[%c0_26, %c0_27] : memref<8x64xbf16, #tpu.memory_space<vmem>>, vector<8x8xbf16>
      %c0_28 = arith.constant 0 : index
      %c32 = arith.constant 32 : index
      %34 = vector.load %arg14[%c0_28, %c32] : memref<8x64xbf16, #tpu.memory_space<vmem>>, vector<8x8xbf16>
      %35 = tpu.transpose %33, [1, 0] : vector<8x8xbf16> -> vector<8x8xbf16>
      %cst_29 = arith.constant dense<0.000000e+00> : vector<8x8xf32>
      %36 = tpu.matmul %32, %35, %cst_29 {dimension_numbers = #tpu.dot_dimension_numbers<[1], [0], [0], [1], [0, 0, 1, 1], [], []>} : vector<8x8xbf16>, vector<8x8xbf16>, vector<8x8xf32> -> vector<8x8xf32>
      %cst_30 = arith.constant 0.353553385 : f32
      %37 = vector.broadcast %cst_30 : f32 to vector<8x8xf32>
      %38 = arith.mulf %36, %37 : vector<8x8xf32>
      %cst_31 = arith.constant dense<0xFF800000> : vector<8xf32>
      %39 = vector.multi_reduction <maximumf>, %38, %cst_31 [1] : vector<8x8xf32> to vector<8xf32>
      %40 = vector.shape_cast %39 : vector<8xf32> to vector<8x1xf32>
      %41 = vector.broadcast %40 : vector<8x1xf32> to vector<8x8xf32>
      %42 = arith.subf %38, %41 : vector<8x8xf32>
      %43 = math.exp %42 : vector<8x8xf32>
      %cst_32 = arith.constant dense<0.000000e+00> : vector<8xf32>
      %44 = vector.multi_reduction <add>, %43, %cst_32 [1] : vector<8x8xf32> to vector<8xf32>
      %45 = vector.shape_cast %44 : vector<8xf32> to vector<8x1xf32>
      %46 = vector.broadcast %45 : vector<8x1xf32> to vector<8x8xf32>
      %47 = arith.divf %43, %46 : vector<8x8xf32>
      %48 = arith.truncf %47 : vector<8x8xf32> to vector<8x8xbf16>
      %cst_33 = arith.constant dense<0.000000e+00> : vector<8x8xf32>
      %49 = tpu.matmul %48, %34, %cst_33 {dimension_numbers = #tpu.dot_dimension_numbers<[1], [0], [0], [1], [0, 0, 1, 1], [], []>} : vector<8x8xbf16>, vector<8x8xbf16>, vector<8x8xf32> -> vector<8x8xf32>
      %c0_34 = arith.constant 0 : index
      %c0_35 = arith.constant 0 : index
      %50 = vector.load %arg15[%c0_34, %c0_35] : memref<8x32xf32, #tpu.memory_space<vmem>>, vector<8x8xf32>
      tpu.vector_store %arg15[%c0_34, %c0_35], %49 {strides = array<i32>} : memref<8x32xf32, #tpu.memory_space<vmem>>, vector<8x8xf32>,
      %51 = vector.extract_strided_slice %31 {offsets = [0, 8], sizes = [8, 8], strides = [1, 1]} : vector<8x32xbf16> to vector<8x8xbf16>
      %c0_36 = arith.constant 0 : index
      %c8 = arith.constant 8 : index
      %52 = vector.load %arg14[%c0_36, %c8] : memref<8x64xbf16, #tpu.memory_space<vmem>>, vector<8x8xbf16>
      %c0_37 = arith.constant 0 : index
      %c40 = arith.constant 40 : index
      %53 = vector.load %arg14[%c0_37, %c40] : memref<8x64xbf16, #tpu.memory_space<vmem>>, vector<8x8xbf16>
      %54 = tpu.transpose %52, [1, 0] : vector<8x8xbf16> -> vector<8x8xbf16>
      %cst_38 = arith.constant dense<0.000000e+00> : vector<8x8xf32>
      %55 = tpu.matmul %51, %54, %cst_38 {dimension_numbers = #tpu.dot_dimension_numbers<[1], [0], [0], [1], [0, 0, 1, 1], [], []>} : vector<8x8xbf16>, vector<8x8xbf16>, vector<8x8xf32> -> vector<8x8xf32>
      %cst_39 = arith.constant 0.353553385 : f32
      %56 = vector.broadcast %cst_39 : f32 to vector<8x8xf32>
      %57 = arith.mulf %55, %56 : vector<8x8xf32>
      %cst_40 = arith.constant dense<0xFF800000> : vector<8xf32>
      %58 = vector.multi_reduction <maximumf>, %57, %cst_40 [1] : vector<8x8xf32> to vector<8xf32>
      %59 = vector.shape_cast %58 : vector<8xf32> to vector<8x1xf32>
      %60 = vector.broadcast %59 : vector<8x1xf32> to vector<8x8xf32>
      %61 = arith.subf %57, %60 : vector<8x8xf32>
      %62 = math.exp %61 : vector<8x8xf32>
      %cst_41 = arith.constant dense<0.000000e+00> : vector<8xf32>
      %63 = vector.multi_reduction <add>, %62, %cst_41 [1] : vector<8x8xf32> to vector<8xf32>
      %64 = vector.shape_cast %63 : vector<8xf32> to vector<8x1xf32>
      %65 = vector.broadcast %64 : vector<8x1xf32> to vector<8x8xf32>
      %66 = arith.divf %62, %65 : vector<8x8xf32>
      %67 = arith.truncf %66 : vector<8x8xf32> to vector<8x8xbf16>
      %cst_42 = arith.constant dense<0.000000e+00> : vector<8x8xf32>
      %68 = tpu.matmul %67, %53, %cst_42 {dimension_numbers = #tpu.dot_dimension_numbers<[1], [0], [0], [1], [0, 0, 1, 1], [], []>} : vector<8x8xbf16>, vector<8x8xbf16>, vector<8x8xf32> -> vector<8x8xf32>
      %c0_43 = arith.constant 0 : index
      %c8_44 = arith.constant 8 : index
      %69 = vector.load %arg15[%c0_43, %c8_44] : memref<8x32xf32, #tpu.memory_space<vmem>>, vector<8x8xf32>
      tpu.vector_store %arg15[%c0_43, %c8_44], %68 {strides = array<i32>} : memref<8x32xf32, #tpu.memory_space<vmem>>, vector<8x8xf32>,
      %70 = vector.extract_strided_slice %31 {offsets = [0, 16], sizes = [8, 8], strides = [1, 1]} : vector<8x32xbf16> to vector<8x8xbf16>
      %c0_45 = arith.constant 0 : index
      %c16 = arith.constant 16 : index
      %71 = vector.load %arg14[%c0_45, %c16] : memref<8x64xbf16, #tpu.memory_space<vmem>>, vector<8x8xbf16>
      %c0_46 = arith.constant 0 : index
      %c48 = arith.constant 48 : index
      %72 = vector.load %arg14[%c0_46, %c48] : memref<8x64xbf16, #tpu.memory_space<vmem>>, vector<8x8xbf16>
      %73 = tpu.transpose %71, [1, 0] : vector<8x8xbf16> -> vector<8x8xbf16>
      %cst_47 = arith.constant dense<0.000000e+00> : vector<8x8xf32>
      %74 = tpu.matmul %70, %73, %cst_47 {dimension_numbers = #tpu.dot_dimension_numbers<[1], [0], [0], [1], [0, 0, 1, 1], [], []>} : vector<8x8xbf16>, vector<8x8xbf16>, vector<8x8xf32> -> vector<8x8xf32>
      %cst_48 = arith.constant 0.353553385 : f32
      %75 = vector.broadcast %cst_48 : f32 to vector<8x8xf32>
      %76 = arith.mulf %74, %75 : vector<8x8xf32>
      %cst_49 = arith.constant dense<0xFF800000> : vector<8xf32>
      %77 = vector.multi_reduction <maximumf>, %76, %cst_49 [1] : vector<8x8xf32> to vector<8xf32>
      %78 = vector.shape_cast %77 : vector<8xf32> to vector<8x1xf32>
      %79 = vector.broadcast %78 : vector<8x1xf32> to vector<8x8xf32>
      %80 = arith.subf %76, %79 : vector<8x8xf32>
      %81 = math.exp %80 : vector<8x8xf32>
      %cst_50 = arith.constant dense<0.000000e+00> : vector<8xf32>
      %82 = vector.multi_reduction <add>, %81, %cst_50 [1] : vector<8x8xf32> to vector<8xf32>
      %83 = vector.shape_cast %82 : vector<8xf32> to vector<8x1xf32>
      %84 = vector.broadcast %83 : vector<8x1xf32> to vector<8x8xf32>
      %85 = arith.divf %81, %84 : vector<8x8xf32>
      %86 = arith.truncf %85 : vector<8x8xf32> to vector<8x8xbf16>
      %cst_51 = arith.constant dense<0.000000e+00> : vector<8x8xf32>
      %87 = tpu.matmul %86, %72, %cst_51 {dimension_numbers = #tpu.dot_dimension_numbers<[1], [0], [0], [1], [0, 0, 1, 1], [], []>} : vector<8x8xbf16>, vector<8x8xbf16>, vector<8x8xf32> -> vector<8x8xf32>
      %c0_52 = arith.constant 0 : index
      %c16_53 = arith.constant 16 : index
      %88 = vector.load %arg15[%c0_52, %c16_53] : memref<8x32xf32, #tpu.memory_space<vmem>>, vector<8x8xf32>
      tpu.vector_store %arg15[%c0_52, %c16_53], %87 {strides = array<i32>} : memref<8x32xf32, #tpu.memory_space<vmem>>, vector<8x8xf32>,
      %89 = vector.extract_strided_slice %31 {offsets = [0, 24], sizes = [8, 8], strides = [1, 1]} : vector<8x32xbf16> to vector<8x8xbf16>
      %c0_54 = arith.constant 0 : index
      %c24 = arith.constant 24 : index
      %90 = vector.load %arg14[%c0_54, %c24] : memref<8x64xbf16, #tpu.memory_space<vmem>>, vector<8x8xbf16>
      %c0_55 = arith.constant 0 : index
      %c56 = arith.constant 56 : index
      %91 = vector.load %arg14[%c0_55, %c56] : memref<8x64xbf16, #tpu.memory_space<vmem>>, vector<8x8xbf16>
      %92 = tpu.transpose %90, [1, 0] : vector<8x8xbf16> -> vector<8x8xbf16>
      %cst_56 = arith.constant dense<0.000000e+00> : vector<8x8xf32>
      %93 = tpu.matmul %89, %92, %cst_56 {dimension_numbers = #tpu.dot_dimension_numbers<[1], [0], [0], [1], [0, 0, 1, 1], [], []>} : vector<8x8xbf16>, vector<8x8xbf16>, vector<8x8xf32> -> vector<8x8xf32>
      %cst_57 = arith.constant 0.353553385 : f32
      %94 = vector.broadcast %cst_57 : f32 to vector<8x8xf32>
      %95 = arith.mulf %93, %94 : vector<8x8xf32>
      %cst_58 = arith.constant dense<0xFF800000> : vector<8xf32>
      %96 = vector.multi_reduction <maximumf>, %95, %cst_58 [1] : vector<8x8xf32> to vector<8xf32>
      %97 = vector.shape_cast %96 : vector<8xf32> to vector<8x1xf32>
      %98 = vector.broadcast %97 : vector<8x1xf32> to vector<8x8xf32>
      %99 = arith.subf %95, %98 : vector<8x8xf32>
      %100 = math.exp %99 : vector<8x8xf32>
      %cst_59 = arith.constant dense<0.000000e+00> : vector<8xf32>
      %101 = vector.multi_reduction <add>, %100, %cst_59 [1] : vector<8x8xf32> to vector<8xf32>
      %102 = vector.shape_cast %101 : vector<8xf32> to vector<8x1xf32>
      %103 = vector.broadcast %102 : vector<8x1xf32> to vector<8x8xf32>
      %104 = arith.divf %100, %103 : vector<8x8xf32>
      %105 = arith.truncf %104 : vector<8x8xf32> to vector<8x8xbf16>
      %cst_60 = arith.constant dense<0.000000e+00> : vector<8x8xf32>
      %106 = tpu.matmul %105, %91, %cst_60 {dimension_numbers = #tpu.dot_dimension_numbers<[1], [0], [0], [1], [0, 0, 1, 1], [], []>} : vector<8x8xbf16>, vector<8x8xbf16>, vector<8x8xf32> -> vector<8x8xf32>
      %c0_61 = arith.constant 0 : index
      %c24_62 = arith.constant 24 : index
      %107 = vector.load %arg15[%c0_61, %c24_62] : memref<8x32xf32, #tpu.memory_space<vmem>>, vector<8x8xf32>
      tpu.vector_store %arg15[%c0_61, %c24_62], %106 {strides = array<i32>} : memref<8x32xf32, #tpu.memory_space<vmem>>, vector<8x8xf32>,
      %c0_63 = arith.constant 0 : index
      %c0_64 = arith.constant 0 : index
      %108 = vector.load %arg15[%c0_63, %c0_64] : memref<8x32xf32, #tpu.memory_space<vmem>>, vector<8x32xf32>
      %109 = arith.truncf %108 : vector<8x32xf32> to vector<8x32xbf16>
      %c0_65 = arith.constant 0 : index
      %c0_66 = arith.constant 0 : index
      %110 = vector.load %arg8[%c0_65, %c0_66] : memref<32x32xbf16, #tpu.memory_space<vmem>>, vector<32x32xbf16>
      %cst_67 = arith.constant dense<0.000000e+00> : vector<8x32xf32>
      %111 = tpu.matmul %109, %110, %cst_67 {dimension_numbers = #tpu.dot_dimension_numbers<[1], [0], [0], [1], [0, 0, 1, 1], [], []>} : vector<8x32xbf16>, vector<32x32xbf16>, vector<8x32xf32> -> vector<8x32xf32>
      %c1 = arith.constant 1 : index
      %c0_68 = arith.constant 0 : index
      %112 = vector.load %arg9[%c1, %c0_68] : memref<8x32xf32, #tpu.memory_space<vmem>>, vector<1x32xf32>
      %113 = vector.broadcast %112 : vector<1x32xf32> to vector<8x32xf32>
      %114 = arith.addf %111, %113 : vector<8x32xf32>
      %115 = arith.addf %24, %114 : vector<8x32xf32>
      %c2 = arith.constant 2 : index
      %c0_69 = arith.constant 0 : index
      %116 = vector.load %arg9[%c2, %c0_69] : memref<8x32xf32, #tpu.memory_space<vmem>>, vector<1x32xf32>
      %c3 = arith.constant 3 : index
      %c0_70 = arith.constant 0 : index
      %117 = vector.load %arg9[%c3, %c0_70] : memref<8x32xf32, #tpu.memory_space<vmem>>, vector<1x32xf32>
      %cst_71 = arith.constant dense<0.000000e+00> : vector<8xf32>
      %118 = vector.multi_reduction <add>, %115, %cst_71 [1] : vector<8x32xf32> to vector<8xf32>
      %119 = vector.shape_cast %118 : vector<8xf32> to vector<8x1xf32>
      %cst_72 = arith.constant 3.200000e+01 : f32
      %120 = vector.broadcast %cst_72 : f32 to vector<8x1xf32>
      %121 = arith.divf %119, %120 : vector<8x1xf32>
      %122 = vector.broadcast %121 : vector<8x1xf32> to vector<8x32xf32>
      %123 = arith.subf %115, %122 : vector<8x32xf32>
      %124 = arith.mulf %123, %123 : vector<8x32xf32>
      %cst_73 = arith.constant dense<0.000000e+00> : vector<8xf32>
      %125 = vector.multi_reduction <add>, %124, %cst_73 [1] : vector<8x32xf32> to vector<8xf32>
      %126 = vector.shape_cast %125 : vector<8xf32> to vector<8x1xf32>
      %cst_74 = arith.constant 3.200000e+01 : f32
      %127 = vector.broadcast %cst_74 : f32 to vector<8x1xf32>
      %128 = arith.divf %126, %127 : vector<8x1xf32>
      %cst_75 = arith.constant 9.99999974E-6 : f32
      %129 = vector.broadcast %cst_75 : f32 to vector<8x1xf32>
      %130 = arith.addf %128, %129 : vector<8x1xf32>
      %131 = math.rsqrt %130 : vector<8x1xf32>
      %132 = vector.broadcast %121 : vector<8x1xf32> to vector<8x32xf32>
      %133 = arith.subf %115, %132 : vector<8x32xf32>
      %134 = vector.broadcast %131 : vector<8x1xf32> to vector<8x32xf32>
      %135 = arith.mulf %133, %134 : vector<8x32xf32>
      %136 = vector.broadcast %116 : vector<1x32xf32> to vector<8x32xf32>
      %137 = arith.mulf %135, %136 : vector<8x32xf32>
      %138 = vector.broadcast %117 : vector<1x32xf32> to vector<8x32xf32>
      %139 = arith.addf %137, %138 : vector<8x32xf32>
      %c0_76 = arith.constant 0 : index
      %c0_77 = arith.constant 0 : index
      %140 = vector.load %arg16[%c0_76, %c0_77] : memref<8x32xf32, #tpu.memory_space<vmem>>, vector<8x32xf32>
      tpu.vector_store %arg16[%c0_76, %c0_77], %139 {strides = array<i32>} : memref<8x32xf32, #tpu.memory_space<vmem>>, vector<8x32xf32>,
      %141 = arith.truncf %139 : vector<8x32xf32> to vector<8x32xbf16>
      %c0_78 = arith.constant 0 : index
      %c0_79 = arith.constant 0 : index
      %142 = vector.load %arg17[%c0_78, %c0_79] : memref<8x32xbf16, #tpu.memory_space<vmem>>, vector<8x32xbf16>
      tpu.vector_store %arg17[%c0_78, %c0_79], %141 {strides = array<i32>} : memref<8x32xbf16, #tpu.memory_space<vmem>>, vector<8x32xbf16>,
      %cst_80 = arith.constant 0.000000e+00 : f32
      %143 = vector.broadcast %cst_80 : f32 to vector<8x32xf32>
      %c0_81 = arith.constant 0 : index
      %c0_82 = arith.constant 0 : index
      %144 = vector.load %arg18[%c0_81, %c0_82] : memref<8x32xf32, #tpu.memory_space<vmem>>, vector<8x32xf32>
      tpu.vector_store %arg18[%c0_81, %c0_82], %143 {strides = array<i32>} : memref<8x32xf32, #tpu.memory_space<vmem>>, vector<8x32xf32>,
    } else {
    }
    %c0 = arith.constant 0 : index
    %c0_1 = arith.constant 0 : index
    %3 = vector.load %arg17[%c0, %c0_1] : memref<8x32xbf16, #tpu.memory_space<vmem>>, vector<8x32xbf16>
    %c0_2 = arith.constant 0 : index
    %c0_3 = arith.constant 0 : index
    %4 = vector.load %arg10[%c0_2, %c0_3] : memref<32x64xbf16, #tpu.memory_space<vmem>>, vector<32x64xbf16>
    %cst = arith.constant dense<0.000000e+00> : vector<8x64xf32>
    %5 = tpu.matmul %3, %4, %cst {dimension_numbers = #tpu.dot_dimension_numbers<[1], [0], [0], [1], [0, 0, 1, 1], [], []>} : vector<8x32xbf16>, vector<32x64xbf16>, vector<8x64xf32> -> vector<8x64xf32>
    %c0_4 = arith.constant 0 : index
    %c0_5 = arith.constant 0 : index
    %6 = vector.load %arg11[%c0_4, %c0_5] : memref<1x64xf32, #tpu.memory_space<vmem>>, vector<1x64xf32>
    %7 = vector.broadcast %6 : vector<1x64xf32> to vector<8x64xf32>
    %8 = arith.addf %5, %7 : vector<8x64xf32>
    %cst_6 = arith.constant 0.000000e+00 : f32
    %9 = vector.broadcast %cst_6 : f32 to vector<8x64xf32>
    %10 = arith.maximumf %8, %9 : vector<8x64xf32>
    %c0_7 = arith.constant 0 : index
    %c0_8 = arith.constant 0 : index
    %11 = vector.load %arg18[%c0_7, %c0_8] : memref<8x32xf32, #tpu.memory_space<vmem>>, vector<8x32xf32>
    %12 = arith.truncf %10 : vector<8x64xf32> to vector<8x64xbf16>
    %c0_9 = arith.constant 0 : index
    %c0_10 = arith.constant 0 : index
    %13 = vector.load %arg12[%c0_9, %c0_10] : memref<64x32xbf16, #tpu.memory_space<vmem>>, vector<64x32xbf16>
    %cst_11 = arith.constant dense<0.000000e+00> : vector<8x32xf32>
    %14 = tpu.matmul %12, %13, %cst_11 {dimension_numbers = #tpu.dot_dimension_numbers<[1], [0], [0], [1], [0, 0, 1, 1], [], []>} : vector<8x64xbf16>, vector<64x32xbf16>, vector<8x32xf32> -> vector<8x32xf32>
    %15 = arith.addf %11, %14 : vector<8x32xf32>
    %c0_12 = arith.constant 0 : index
    %c0_13 = arith.constant 0 : index
    %16 = vector.load %arg18[%c0_12, %c0_13] : memref<8x32xf32, #tpu.memory_space<vmem>>, vector<8x32xf32>
    tpu.vector_store %arg18[%c0_12, %c0_13], %15 {strides = array<i32>} : memref<8x32xf32, #tpu.memory_space<vmem>>, vector<8x32xf32>,
    %c0_i32_14 = arith.constant 0 : i32
    %17 = arith.cmpi eq, %arg2, %c0_i32_14 : i32
    %18 = arith.extui %17 : i1 to i32
    %c0_i32_15 = arith.constant 0 : i32
    %19 = arith.cmpi ne, %18, %c0_i32_15 : i32
    scf.if %19 {
      %c0_16 = arith.constant 0 : index
      %c0_17 = arith.constant 0 : index
      %20 = vector.load %arg16[%c0_16, %c0_17] : memref<8x32xf32, #tpu.memory_space<vmem>>, vector<8x32xf32>
      %c0_18 = arith.constant 0 : index
      %c0_19 = arith.constant 0 : index
      %21 = vector.load %arg18[%c0_18, %c0_19] : memref<8x32xf32, #tpu.memory_space<vmem>>, vector<8x32xf32>
      %22 = arith.addf %20, %21 : vector<8x32xf32>
      %c4 = arith.constant 4 : index
      %c0_20 = arith.constant 0 : index
      %23 = vector.load %arg9[%c4, %c0_20] : memref<8x32xf32, #tpu.memory_space<vmem>>, vector<1x32xf32>
      %24 = vector.broadcast %23 : vector<1x32xf32> to vector<8x32xf32>
      %25 = arith.addf %22, %24 : vector<8x32xf32>
      %c5 = arith.constant 5 : index
      %c0_21 = arith.constant 0 : index
      %26 = vector.load %arg9[%c5, %c0_21] : memref<8x32xf32, #tpu.memory_space<vmem>>, vector<1x32xf32>
      %c6 = arith.constant 6 : index
      %c0_22 = arith.constant 0 : index
      %27 = vector.load %arg9[%c6, %c0_22] : memref<8x32xf32, #tpu.memory_space<vmem>>, vector<1x32xf32>
      %cst_23 = arith.constant dense<0.000000e+00> : vector<8xf32>
      %28 = vector.multi_reduction <add>, %25, %cst_23 [1] : vector<8x32xf32> to vector<8xf32>
      %29 = vector.shape_cast %28 : vector<8xf32> to vector<8x1xf32>
      %cst_24 = arith.constant 3.200000e+01 : f32
      %30 = vector.broadcast %cst_24 : f32 to vector<8x1xf32>
      %31 = arith.divf %29, %30 : vector<8x1xf32>
      %32 = vector.broadcast %31 : vector<8x1xf32> to vector<8x32xf32>
      %33 = arith.subf %25, %32 : vector<8x32xf32>
      %34 = arith.mulf %33, %33 : vector<8x32xf32>
      %cst_25 = arith.constant dense<0.000000e+00> : vector<8xf32>
      %35 = vector.multi_reduction <add>, %34, %cst_25 [1] : vector<8x32xf32> to vector<8xf32>
      %36 = vector.shape_cast %35 : vector<8xf32> to vector<8x1xf32>
      %cst_26 = arith.constant 3.200000e+01 : f32
      %37 = vector.broadcast %cst_26 : f32 to vector<8x1xf32>
      %38 = arith.divf %36, %37 : vector<8x1xf32>
      %cst_27 = arith.constant 9.99999974E-6 : f32
      %39 = vector.broadcast %cst_27 : f32 to vector<8x1xf32>
      %40 = arith.addf %38, %39 : vector<8x1xf32>
      %41 = math.rsqrt %40 : vector<8x1xf32>
      %42 = vector.broadcast %31 : vector<8x1xf32> to vector<8x32xf32>
      %43 = arith.subf %25, %42 : vector<8x32xf32>
      %44 = vector.broadcast %41 : vector<8x1xf32> to vector<8x32xf32>
      %45 = arith.mulf %43, %44 : vector<8x32xf32>
      %46 = vector.broadcast %26 : vector<1x32xf32> to vector<8x32xf32>
      %47 = arith.mulf %45, %46 : vector<8x32xf32>
      %48 = vector.broadcast %27 : vector<1x32xf32> to vector<8x32xf32>
      %49 = arith.addf %47, %48 : vector<8x32xf32>
      %c0_28 = arith.constant 0 : index
      %c0_29 = arith.constant 0 : index
      %c0_30 = arith.constant 0 : index
      %50 = vector.load %arg13[%c0_28, %c0_29, %c0_30] : memref<1x8x32xf32, #tpu.memory_space<vmem>>, vector<1x8x32xf32>
      %51 = vector.shape_cast %50 : vector<1x8x32xf32> to vector<8x32xf32>
      %52 = vector.shape_cast %49 : vector<8x32xf32> to vector<1x8x32xf32>
      tpu.vector_store %arg13[%c0_28, %c0_29, %c0_30], %52 {strides = array<i32>} : memref<1x8x32xf32, #tpu.memory_space<vmem>>, vector<1x8x32xf32>,
    } else {
    }
    return
  }
  func.func @transform_0(%arg0: i32, %arg1: i32, %arg2: i32) -> (i32, i32, i32) {
    %c0_i32 = arith.constant 0 : i32
    %c0_i32_0 = arith.constant 0 : i32
    return %arg0, %arg1, %c0_i32 : i32, i32, i32
  }
  func.func @transform_1(%arg0: i32, %arg1: i32, %arg2: i32) -> (i32, i32, i32) {
    %c0_i32 = arith.constant 0 : i32
    %c0_i32_0 = arith.constant 0 : i32
    %c0_i32_1 = arith.constant 0 : i32
    return %arg0, %c0_i32, %c0_i32_0 : i32, i32, i32
  }
  func.func @transform_2(%arg0: i32, %arg1: i32, %arg2: i32) -> (i32, i32) {
    %c0_i32 = arith.constant 0 : i32
    %c0_i32_0 = arith.constant 0 : i32
    %c0_i32_1 = arith.constant 0 : i32
    return %c0_i32, %c0_i32_0 : i32, i32
  }
  func.func @transform_3(%arg0: i32, %arg1: i32, %arg2: i32) -> (i32, i32) {
    %c0_i32 = arith.constant 0 : i32
    %c0_i32_0 = arith.constant 0 : i32
    %c0_i32_1 = arith.constant 0 : i32
    return %c0_i32, %c0_i32_0 : i32, i32
  }
  func.func @transform_4(%arg0: i32, %arg1: i32, %arg2: i32) -> (i32, i32) {
    %c0_i32 = arith.constant 0 : i32
    %c0_i32_0 = arith.constant 0 : i32
    %c0_i32_1 = arith.constant 0 : i32
    return %c0_i32, %c0_i32_0 : i32, i32
  }
  func.func @transform_5(%arg0: i32, %arg1: i32, %arg2: i32) -> (i32, i32) {
    %c0_i32 = arith.constant 0 : i32
    %c0_i32_0 = arith.constant 0 : i32
    %c0_i32_1 = arith.constant 0 : i32
    return %c0_i32, %c0_i32_0 : i32, i32
  }
  func.func @transform_6(%arg0: i32, %arg1: i32, %arg2: i32) -> (i32, i32) {
    %c0_i32 = arith.constant 0 : i32
    %c0_i32_0 = arith.constant 0 : i32
    %c0_i32_1 = arith.constant 0 : i32
    return %c0_i32, %c0_i32_0 : i32, i32
  }
  func.func @transform_7(%arg0: i32, %arg1: i32, %arg2: i32) -> (i32, i32) {
    %c0_i32 = arith.constant 0 : i32
    %c0_i32_0 = arith.constant 0 : i32
    return %c0_i32, %arg2 : i32, i32
  }
  func.func @transform_8(%arg0: i32, %arg1: i32, %arg2: i32) -> (i32, i32) {
    %c0_i32 = arith.constant 0 : i32
    %c0_i32_0 = arith.constant 0 : i32
    return %c0_i32, %arg2 : i32, i32
  }
  func.func @transform_9(%arg0: i32, %arg1: i32, %arg2: i32) -> (i32, i32) {
    %c0_i32 = arith.constant 0 : i32
    %c0_i32_0 = arith.constant 0 : i32
    return %arg2, %c0_i32 : i32, i32
  }
  func.func @transform_10(%arg0: i32, %arg1: i32, %arg2: i32) -> (i32, i32, i32) {
    %c0_i32 = arith.constant 0 : i32
    %c0_i32_0 = arith.constant 0 : i32
    return %arg0, %arg1, %c0_i32 : i32, i32, i32
  }
}

module attributes {stable_mosaic.version = 11 : i64} {
  func.func @encoder_block_kernel(%arg0: i32, %arg1: i32, %arg2: i32, %arg3: memref<1x8x32xf32, #tpu.memory_space<vmem>>, %arg4: memref<1x8x32xf32, #tpu.memory_space<vmem>>, %arg5: memref<32x32xbf16, #tpu.memory_space<vmem>>, %arg6: memref<32x64xbf16, #tpu.memory_space<vmem>>, %arg7: memref<1x64xf32, #tpu.memory_space<vmem>>, %arg8: memref<32x32xbf16, #tpu.memory_space<vmem>>, %arg9: memref<8x32xf32, #tpu.memory_space<vmem>>, %arg10: memref<32x64xbf16, #tpu.memory_space<vmem>>, %arg11: memref<1x64xf32, #tpu.memory_space<vmem>>, %arg12: memref<64x32xbf16, #tpu.memory_space<vmem>>, %arg13: memref<1x8x32xf32, #tpu.memory_space<vmem>>, %arg14: memref<8x64xbf16, #tpu.memory_space<vmem>>, %arg15: memref<8x32xf32, #tpu.memory_space<vmem>>, %arg16: memref<8x32xf32, #tpu.memory_space<vmem>>, %arg17: memref<8x32xbf16, #tpu.memory_space<vmem>>, %arg18: memref<8x32xf32, #tpu.memory_space<vmem>>) attributes {dimension_semantics = [#tpu.dimension_semantics<parallel>, #tpu.dimension_semantics<arbitrary>, #tpu.dimension_semantics<arbitrary>], iteration_bounds = array<i64: 2, 1, 1>, scalar_prefetch = 0 : i64, scratch_operands = 5 : i64, tpu.core_type = #tpu.core_type<tc>, window_params = [{transform_indices = @transform_0, window_bounds = array<i64: 1, 8, 32>}, {transform_indices = @transform_1, window_bounds = array<i64: 1, 8, 32>}, {pipeline_mode = #tpu.pipeline_mode<synchronous>, transform_indices = @transform_2, window_bounds = array<i64: 32, 32>}, {pipeline_mode = #tpu.pipeline_mode<synchronous>, transform_indices = @transform_3, window_bounds = array<i64: 32, 64>}, {pipeline_mode = #tpu.pipeline_mode<synchronous>, transform_indices = @transform_4, window_bounds = array<i64: 1, 64>}, {pipeline_mode = #tpu.pipeline_mode<synchronous>, transform_indices = @transform_5, window_bounds = array<i64: 32, 32>}, {pipeline_mode = #tpu.pipeline_mode<synchronous>, transform_indices = @transform_6, window_bounds = array<i64: 8, 32>}, {transform_indices = @transform_7, window_bounds = array<i64: 32, 64>}, {transform_indices = @transform_8, window_bounds = array<i64: 1, 64>}, {transform_indices = @transform_9, window_bounds = array<i64: 64, 32>}, {transform_indices = @transform_10, window_bounds = array<i64: 1, 8, 32>}]} {
    %c0_i32 = arith.constant 0 : i32
    %0 = arith.cmpi eq, %arg2, %c0_i32 : i32
    %1 = arith.extui %0 : i1 to i32
    %c0_i32_0 = arith.constant 0 : i32
    %2 = arith.cmpi ne, %1, %c0_i32_0 : i32
    scf.if %2 {
      %c0_i32_16 = arith.constant 0 : i32
      %20 = arith.cmpi eq, %arg1, %c0_i32_16 : i32
      %21 = arith.extui %20 : i1 to i32
      %c0_i32_17 = arith.constant 0 : i32
      %22 = arith.cmpi ne, %21, %c0_i32_17 : i32
      scf.if %22 {
        %c0_83 = arith.constant 0 : index
        %c0_84 = arith.constant 0 : index
        %145 = vector.load %arg7[%c0_83, %c0_84] : memref<1x64xf32, #tpu.memory_space<vmem>>, vector<1x64xf32>
        %c0_85 = arith.constant 0 : index
        %c0_86 = arith.constant 0 : index
        %c0_87 = arith.constant 0 : index
        %146 = vector.load %arg4[%c0_85, %c0_86, %c0_87] : memref<1x8x32xf32, #tpu.memory_space<vmem>>, vector<1x8x32xf32>
        %147 = vector.shape_cast %146 : vector<1x8x32xf32> to vector<8x32xf32>
        %148 = arith.truncf %147 : vector<8x32xf32> to vector<8x32xbf16>
        %c0_88 = arith.constant 0 : index
        %c0_89 = arith.constant 0 : index
        %149 = vector.load %arg6[%c0_88, %c0_89] : memref<32x64xbf16, #tpu.memory_space<vmem>>, vector<32x64xbf16>
        %cst_90 = arith.constant dense<0.000000e+00> : vector<8x64xf32>
        %150 = tpu.matmul %148, %149, %cst_90 {dimension_numbers = #tpu.dot_dimension_numbers<[1], [0], [0], [1], [0, 0, 1, 1], [], []>} : vector<8x32xbf16>, vector<32x64xbf16>, vector<8x64xf32> -> vector<8x64xf32>
        %151 = vector.broadcast %145 : vector<1x64xf32> to vector<8x64xf32>
        %152 = arith.addf %150, %151 : vector<8x64xf32>
        %153 = arith.truncf %152 : vector<8x64xf32> to vector<8x64xbf16>
        %c0_91 = arith.constant 0 : index
        %c0_92 = arith.constant 0 : index
        %154 = vector.load %arg14[%c0_91, %c0_92] : memref<8x64xbf16, #tpu.memory_space<vmem>>, vector<8x64xbf16>
        tpu.vector_store %arg14[%c0_91, %c0_92], %153 {strides = array<i32>} : memref<8x64xbf16, #tpu.memory_space<vmem>>, vector<8x64xbf16>,
      } else {
      }
      %c0_18 = arith.constant 0 : index
      %c0_19 = arith.constant 0 : index
      %c0_20 = arith.constant 0 : index
      %23 = vector.load %arg3[%c0_18, %c0_19, %c0_20] : memref<1x8x32xf32, #tpu.memory_space<vmem>>, vector<1x8x32xf32>
      %24 = vector.shape_cast %23 : vector<1x8x32xf32> to vector<8x32xf32>
      %25 = arith.truncf %24 : vector<8x32xf32> to vector<8x32xbf16>
      %c0_21 = arith.constant 0 : index
      %c0_22 = arith.constant 0 : index
      %26 = vector.load %arg5[%c0_21, %c0_22] : memref<32x32xbf16, #tpu.memory_space<vmem>>, vector<32x32xbf16>
      %cst_23 = arith.constant dense<0.000000e+00> : vector<8x32xf32>
      %27 = tpu.matmul %25, %26, %cst_23 {dimension_numbers = #tpu.dot_dimension_numbers<[1], [0], [0], [1], [0, 0, 1, 1], [], []>} : vector<8x32xbf16>, vector<32x32xbf16>, vector<8x32xf32> -> vector<8x32xf32>
      %c0_24 = arith.constant 0 : index
      %c0_25 = arith.constant 0 : index
      %28 = vector.load %arg9[%c0_24, %c0_25] : memref<8x32xf32, #tpu.memory_space<vmem>>, vector<1x32xf32>
      %29 = vector.broadcast %28 : vector<1x32xf32> to vector<8x32xf32>
      %30 = arith.addf %27, %29 : vector<8x32xf32>
      %31 = arith.truncf %30 : vector<8x32xf32> to vector<8x32xbf16>
      %32 = vector.extract_strided_slice %31 {offsets = [0, 0], sizes = [8, 8], strides = [1, 1]} : vector<8x32xbf16> to vector<8x8xbf16>
      %c0_26 = arith.constant 0 : index
      %c0_27 = arith.constant 0 : index
      %33 = vector.load %arg14[%c0_26, %c0_27] : memref<8x64xbf16, #tpu.memory_space<vmem>>, vector<8x8xbf16>
      %c0_28 = arith.constant 0 : index
      %c32 = arith.constant 32 : index
      %34 = vector.load %arg14[%c0_28, %c32] : memref<8x64xbf16, #tpu.memory_space<vmem>>, vector<8x8xbf16>
      %35 = tpu.transpose %33, [1, 0] : vector<8x8xbf16> -> vector<8x8xbf16>
      %cst_29 = arith.constant dense<0.000000e+00> : vector<8x8xf32>
      %36 = tpu.matmul %32, %35, %cst_29 {dimension_numbers = #tpu.dot_dimension_numbers<[1], [0], [0], [1], [0, 0, 1, 1], [], []>} : vector<8x8xbf16>, vector<8x8xbf16>, vector<8x8xf32> -> vector<8x8xf32>
      %cst_30 = arith.constant 0.353553385 : f32
      %37 = vector.broadcast %cst_30 : f32 to vector<8x8xf32>
      %38 = arith.mulf %36, %37 : vector<8x8xf32>
      %cst_31 = arith.constant dense<0xFF800000> : vector<8xf32>
      %39 = vector.multi_reduction <maximumf>, %38, %cst_31 [1] : vector<8x8xf32> to vector<8xf32>
      %40 = vector.shape_cast %39 : vector<8xf32> to vector<8x1xf32>
      %41 = vector.broadcast %40 : vector<8x1xf32> to vector<8x8xf32>
      %42 = arith.subf %38, %41 : vector<8x8xf32>
      %43 = math.exp %42 : vector<8x8xf32>
      %cst_32 = arith.constant dense<0.000000e+00> : vector<8xf32>
      %44 = vector.multi_reduction <add>, %43, %cst_32 [1] : vector<8x8xf32> to vector<8xf32>
      %45 = vector.shape_cast %44 : vector<8xf32> to vector<8x1xf32>
      %46 = vector.broadcast %45 : vector<8x1xf32> to vector<8x8xf32>
      %47 = arith.divf %43, %46 : vector<8x8xf32>
      %48 = arith.truncf %47 : vector<8x8xf32> to vector<8x8xbf16>
      %cst_33 = arith.constant dense<0.000000e+00> : vector<8x8xf32>
      %49 = tpu.matmul %48, %34, %cst_33 {dimension_numbers = #tpu.dot_dimension_numbers<[1], [0], [0], [1], [0, 0, 1, 1], [], []>} : vector<8x8xbf16>, vector<8x8xbf16>, vector<8x8xf32> -> vector<8x8xf32>
      %c0_34 = arith.constant 0 : index
      %c0_35 = arith.constant 0 : index
      %50 = vector.load %arg15[%c0_34, %c0_35] : memref<8x32xf32, #tpu.memory_space<vmem>>, vector<8x8xf32>
      tpu.vector_store %arg15[%c0_34, %c0_35], %49 {strides = array<i32>} : memref<8x32xf32, #tpu.memory_space<vmem>>, vector<8x8xf32>,
      %51 = vector.extract_strided_slice %31 {offsets = [0, 8], sizes = [8, 8], strides = [1, 1]} : vector<8x32xbf16> to vector<8x8xbf16>
      %c0_36 = arith.constant 0 : index
      %c8 = arith.constant 8 : index
      %52 = vector.load %arg14[%c0_36, %c8] : memref<8x64xbf16, #tpu.memory_space<vmem>>, vector<8x8xbf16>
      %c0_37 = arith.constant 0 : index
      %c40 = arith.constant 40 : index
      %53 = vector.load %arg14[%c0_37, %c40] : memref<8x64xbf16, #tpu.memory_space<vmem>>, vector<8x8xbf16>
      %54 = tpu.transpose %52, [1, 0] : vector<8x8xbf16> -> vector<8x8xbf16>
      %cst_38 = arith.constant dense<0.000000e+00> : vector<8x8xf32>
      %55 = tpu.matmul %51, %54, %cst_38 {dimension_numbers = #tpu.dot_dimension_numbers<[1], [0], [0], [1], [0, 0, 1, 1], [], []>} : vector<8x8xbf16>, vector<8x8xbf16>, vector<8x8xf32> -> vector<8x8xf32>
      %cst_39 = arith.constant 0.353553385 : f32
      %56 = vector.broadcast %cst_39 : f32 to vector<8x8xf32>
      %57 = arith.mulf %55, %56 : vector<8x8xf32>
      %cst_40 = arith.constant dense<0xFF800000> : vector<8xf32>
      %58 = vector.multi_reduction <maximumf>, %57, %cst_40 [1] : vector<8x8xf32> to vector<8xf32>
      %59 = vector.shape_cast %58 : vector<8xf32> to vector<8x1xf32>
      %60 = vector.broadcast %59 : vector<8x1xf32> to vector<8x8xf32>
      %61 = arith.subf %57, %60 : vector<8x8xf32>
      %62 = math.exp %61 : vector<8x8xf32>
      %cst_41 = arith.constant dense<0.000000e+00> : vector<8xf32>
      %63 = vector.multi_reduction <add>, %62, %cst_41 [1] : vector<8x8xf32> to vector<8xf32>
      %64 = vector.shape_cast %63 : vector<8xf32> to vector<8x1xf32>
      %65 = vector.broadcast %64 : vector<8x1xf32> to vector<8x8xf32>
      %66 = arith.divf %62, %65 : vector<8x8xf32>
      %67 = arith.truncf %66 : vector<8x8xf32> to vector<8x8xbf16>
      %cst_42 = arith.constant dense<0.000000e+00> : vector<8x8xf32>
      %68 = tpu.matmul %67, %53, %cst_42 {dimension_numbers = #tpu.dot_dimension_numbers<[1], [0], [0], [1], [0, 0, 1, 1], [], []>} : vector<8x8xbf16>, vector<8x8xbf16>, vector<8x8xf32> -> vector<8x8xf32>
      %c0_43 = arith.constant 0 : index
      %c8_44 = arith.constant 8 : index
      %69 = vector.load %arg15[%c0_43, %c8_44] : memref<8x32xf32, #tpu.memory_space<vmem>>, vector<8x8xf32>
      tpu.vector_store %arg15[%c0_43, %c8_44], %68 {strides = array<i32>} : memref<8x32xf32, #tpu.memory_space<vmem>>, vector<8x8xf32>,
      %70 = vector.extract_strided_slice %31 {offsets = [0, 16], sizes = [8, 8], strides = [1, 1]} : vector<8x32xbf16> to vector<8x8xbf16>
      %c0_45 = arith.constant 0 : index
      %c16 = arith.constant 16 : index
      %71 = vector.load %arg14[%c0_45, %c16] : memref<8x64xbf16, #tpu.memory_space<vmem>>, vector<8x8xbf16>
      %c0_46 = arith.constant 0 : index
      %c48 = arith.constant 48 : index
      %72 = vector.load %arg14[%c0_46, %c48] : memref<8x64xbf16, #tpu.memory_space<vmem>>, vector<8x8xbf16>
      %73 = tpu.transpose %71, [1, 0] : vector<8x8xbf16> -> vector<8x8xbf16>
      %cst_47 = arith.constant dense<0.000000e+00> : vector<8x8xf32>
      %74 = tpu.matmul %70, %73, %cst_47 {dimension_numbers = #tpu.dot_dimension_numbers<[1], [0], [0], [1], [0, 0, 1, 1], [], []>} : vector<8x8xbf16>, vector<8x8xbf16>, vector<8x8xf32> -> vector<8x8xf32>
      %cst_48 = arith.constant 0.353553385 : f32
      %75 = vector.broadcast %cst_48 : f32 to vector<8x8xf32>
      %76 = arith.mulf %74, %75 : vector<8x8xf32>
      %cst_49 = arith.constant dense<0xFF800000> : vector<8xf32>
      %77 = vector.multi_reduction <maximumf>, %76, %cst_49 [1] : vector<8x8xf32> to vector<8xf32>
      %78 = vector.shape_cast %77 : vector<8xf32> to vector<8x1xf32>
      %79 = vector.broadcast %78 : vector<8x1xf32> to vector<8x8xf32>
      %80 = arith.subf %76, %79 : vector<8x8xf32>
      %81 = math.exp %80 : vector<8x8xf32>
      %cst_50 = arith.constant dense<0.000000e+00> : vector<8xf32>
      %82 = vector.multi_reduction <add>, %81, %cst_50 [1] : vector<8x8xf32> to vector<8xf32>
      %83 = vector.shape_cast %82 : vector<8xf32> to vector<8x1xf32>
      %84 = vector.broadcast %83 : vector<8x1xf32> to vector<8x8xf32>
      %85 = arith.divf %81, %84 : vector<8x8xf32>
      %86 = arith.truncf %85 : vector<8x8xf32> to vector<8x8xbf16>
      %cst_51 = arith.constant dense<0.000000e+00> : vector<8x8xf32>
      %87 = tpu.matmul %86, %72, %cst_51 {dimension_numbers = #tpu.dot_dimension_numbers<[1], [0], [0], [1], [0, 0, 1, 1], [], []>} : vector<8x8xbf16>, vector<8x8xbf16>, vector<8x8xf32> -> vector<8x8xf32>
      %c0_52 = arith.constant 0 : index
      %c16_53 = arith.constant 16 : index
      %88 = vector.load %arg15[%c0_52, %c16_53] : memref<8x32xf32, #tpu.memory_space<vmem>>, vector<8x8xf32>
      tpu.vector_store %arg15[%c0_52, %c16_53], %87 {strides = array<i32>} : memref<8x32xf32, #tpu.memory_space<vmem>>, vector<8x8xf32>,
      %89 = vector.extract_strided_slice %31 {offsets = [0, 24], sizes = [8, 8], strides = [1, 1]} : vector<8x32xbf16> to vector<8x8xbf16>
      %c0_54 = arith.constant 0 : index
      %c24 = arith.constant 24 : index
      %90 = vector.load %arg14[%c0_54, %c24] : memref<8x64xbf16, #tpu.memory_space<vmem>>, vector<8x8xbf16>
      %c0_55 = arith.constant 0 : index
      %c56 = arith.constant 56 : index
      %91 = vector.load %arg14[%c0_55, %c56] : memref<8x64xbf16, #tpu.memory_space<vmem>>, vector<8x8xbf16>
      %92 = tpu.transpose %90, [1, 0] : vector<8x8xbf16> -> vector<8x8xbf16>
      %cst_56 = arith.constant dense<0.000000e+00> : vector<8x8xf32>
      %93 = tpu.matmul %89, %92, %cst_56 {dimension_numbers = #tpu.dot_dimension_numbers<[1], [0], [0], [1], [0, 0, 1, 1], [], []>} : vector<8x8xbf16>, vector<8x8xbf16>, vector<8x8xf32> -> vector<8x8xf32>
      %cst_57 = arith.constant 0.353553385 : f32
      %94 = vector.broadcast %cst_57 : f32 to vector<8x8xf32>
      %95 = arith.mulf %93, %94 : vector<8x8xf32>
      %cst_58 = arith.constant dense<0xFF800000> : vector<8xf32>
      %96 = vector.multi_reduction <maximumf>, %95, %cst_58 [1] : vector<8x8xf32> to vector<8xf32>
      %97 = vector.shape_cast %96 : vector<8xf32> to vector<8x1xf32>
      %98 = vector.broadcast %97 : vector<8x1xf32> to vector<8x8xf32>
      %99 = arith.subf %95, %98 : vector<8x8xf32>
      %100 = math.exp %99 : vector<8x8xf32>
      %cst_59 = arith.constant dense<0.000000e+00> : vector<8xf32>
      %101 = vector.multi_reduction <add>, %100, %cst_59 [1] : vector<8x8xf32> to vector<8xf32>
      %102 = vector.shape_cast %101 : vector<8xf32> to vector<8x1xf32>
      %103 = vector.broadcast %102 : vector<8x1xf32> to vector<8x8xf32>
      %104 = arith.divf %100, %103 : vector<8x8xf32>
      %105 = arith.truncf %104 : vector<8x8xf32> to vector<8x8xbf16>
      %cst_60 = arith.constant dense<0.000000e+00> : vector<8x8xf32>
      %106 = tpu.matmul %105, %91, %cst_60 {dimension_numbers = #tpu.dot_dimension_numbers<[1], [0], [0], [1], [0, 0, 1, 1], [], []>} : vector<8x8xbf16>, vector<8x8xbf16>, vector<8x8xf32> -> vector<8x8xf32>
      %c0_61 = arith.constant 0 : index
      %c24_62 = arith.constant 24 : index
      %107 = vector.load %arg15[%c0_61, %c24_62] : memref<8x32xf32, #tpu.memory_space<vmem>>, vector<8x8xf32>
      tpu.vector_store %arg15[%c0_61, %c24_62], %106 {strides = array<i32>} : memref<8x32xf32, #tpu.memory_space<vmem>>, vector<8x8xf32>,
      %c0_63 = arith.constant 0 : index
      %c0_64 = arith.constant 0 : index
      %108 = vector.load %arg15[%c0_63, %c0_64] : memref<8x32xf32, #tpu.memory_space<vmem>>, vector<8x32xf32>
      %109 = arith.truncf %108 : vector<8x32xf32> to vector<8x32xbf16>
      %c0_65 = arith.constant 0 : index
      %c0_66 = arith.constant 0 : index
      %110 = vector.load %arg8[%c0_65, %c0_66] : memref<32x32xbf16, #tpu.memory_space<vmem>>, vector<32x32xbf16>
      %cst_67 = arith.constant dense<0.000000e+00> : vector<8x32xf32>
      %111 = tpu.matmul %109, %110, %cst_67 {dimension_numbers = #tpu.dot_dimension_numbers<[1], [0], [0], [1], [0, 0, 1, 1], [], []>} : vector<8x32xbf16>, vector<32x32xbf16>, vector<8x32xf32> -> vector<8x32xf32>
      %c1 = arith.constant 1 : index
      %c0_68 = arith.constant 0 : index
      %112 = vector.load %arg9[%c1, %c0_68] : memref<8x32xf32, #tpu.memory_space<vmem>>, vector<1x32xf32>
      %113 = vector.broadcast %112 : vector<1x32xf32> to vector<8x32xf32>
      %114 = arith.addf %111, %113 : vector<8x32xf32>
      %115 = arith.addf %24, %114 : vector<8x32xf32>
      %c2 = arith.constant 2 : index
      %c0_69 = arith.constant 0 : index
      %116 = vector.load %arg9[%c2, %c0_69] : memref<8x32xf32, #tpu.memory_space<vmem>>, vector<1x32xf32>
      %c3 = arith.constant 3 : index
      %c0_70 = arith.constant 0 : index
      %117 = vector.load %arg9[%c3, %c0_70] : memref<8x32xf32, #tpu.memory_space<vmem>>, vector<1x32xf32>
      %cst_71 = arith.constant dense<0.000000e+00> : vector<8xf32>
      %118 = vector.multi_reduction <add>, %115, %cst_71 [1] : vector<8x32xf32> to vector<8xf32>
      %119 = vector.shape_cast %118 : vector<8xf32> to vector<8x1xf32>
      %cst_72 = arith.constant 3.200000e+01 : f32
      %120 = vector.broadcast %cst_72 : f32 to vector<8x1xf32>
      %121 = arith.divf %119, %120 : vector<8x1xf32>
      %122 = vector.broadcast %121 : vector<8x1xf32> to vector<8x32xf32>
      %123 = arith.subf %115, %122 : vector<8x32xf32>
      %124 = arith.mulf %123, %123 : vector<8x32xf32>
      %cst_73 = arith.constant dense<0.000000e+00> : vector<8xf32>
      %125 = vector.multi_reduction <add>, %124, %cst_73 [1] : vector<8x32xf32> to vector<8xf32>
      %126 = vector.shape_cast %125 : vector<8xf32> to vector<8x1xf32>
      %cst_74 = arith.constant 3.200000e+01 : f32
      %127 = vector.broadcast %cst_74 : f32 to vector<8x1xf32>
      %128 = arith.divf %126, %127 : vector<8x1xf32>
      %cst_75 = arith.constant 9.99999974E-6 : f32
      %129 = vector.broadcast %cst_75 : f32 to vector<8x1xf32>
      %130 = arith.addf %128, %129 : vector<8x1xf32>
      %131 = math.rsqrt %130 : vector<8x1xf32>
      %132 = vector.broadcast %121 : vector<8x1xf32> to vector<8x32xf32>
      %133 = arith.subf %115, %132 : vector<8x32xf32>
      %134 = vector.broadcast %131 : vector<8x1xf32> to vector<8x32xf32>
      %135 = arith.mulf %133, %134 : vector<8x32xf32>
      %136 = vector.broadcast %116 : vector<1x32xf32> to vector<8x32xf32>
      %137 = arith.mulf %135, %136 : vector<8x32xf32>
      %138 = vector.broadcast %117 : vector<1x32xf32> to vector<8x32xf32>
      %139 = arith.addf %137, %138 : vector<8x32xf32>
      %c0_76 = arith.constant 0 : index
      %c0_77 = arith.constant 0 : index
      %140 = vector.load %arg16[%c0_76, %c0_77] : memref<8x32xf32, #tpu.memory_space<vmem>>, vector<8x32xf32>
      tpu.vector_store %arg16[%c0_76, %c0_77], %139 {strides = array<i32>} : memref<8x32xf32, #tpu.memory_space<vmem>>, vector<8x32xf32>,
      %141 = arith.truncf %139 : vector<8x32xf32> to vector<8x32xbf16>
      %c0_78 = arith.constant 0 : index
      %c0_79 = arith.constant 0 : index
      %142 = vector.load %arg17[%c0_78, %c0_79] : memref<8x32xbf16, #tpu.memory_space<vmem>>, vector<8x32xbf16>
      tpu.vector_store %arg17[%c0_78, %c0_79], %141 {strides = array<i32>} : memref<8x32xbf16, #tpu.memory_space<vmem>>, vector<8x32xbf16>,
      %cst_80 = arith.constant 0.000000e+00 : f32
      %143 = vector.broadcast %cst_80 : f32 to vector<8x32xf32>
      %c0_81 = arith.constant 0 : index
      %c0_82 = arith.constant 0 : index
      %144 = vector.load %arg18[%c0_81, %c0_82] : memref<8x32xf32, #tpu.memory_space<vmem>>, vector<8x32xf32>
      tpu.vector_store %arg18[%c0_81, %c0_82], %143 {strides = array<i32>} : memref<8x32xf32, #tpu.memory_space<vmem>>, vector<8x32xf32>,
    } else {
    }
    %c0 = arith.constant 0 : index
    %c0_1 = arith.constant 0 : index
    %3 = vector.load %arg17[%c0, %c0_1] : memref<8x32xbf16, #tpu.memory_space<vmem>>, vector<8x32xbf16>
    %c0_2 = arith.constant 0 : index
    %c0_3 = arith.constant 0 : index
    %4 = vector.load %arg10[%c0_2, %c0_3] : memref<32x64xbf16, #tpu.memory_space<vmem>>, vector<32x64xbf16>
    %cst = arith.constant dense<0.000000e+00> : vector<8x64xf32>
    %5 = tpu.matmul %3, %4, %cst {dimension_numbers = #tpu.dot_dimension_numbers<[1], [0], [0], [1], [0, 0, 1, 1], [], []>} : vector<8x32xbf16>, vector<32x64xbf16>, vector<8x64xf32> -> vector<8x64xf32>
    %c0_4 = arith.constant 0 : index
    %c0_5 = arith.constant 0 : index
    %6 = vector.load %arg11[%c0_4, %c0_5] : memref<1x64xf32, #tpu.memory_space<vmem>>, vector<1x64xf32>
    %7 = vector.broadcast %6 : vector<1x64xf32> to vector<8x64xf32>
    %8 = arith.addf %5, %7 : vector<8x64xf32>
    %cst_6 = arith.constant 0.000000e+00 : f32
    %9 = vector.broadcast %cst_6 : f32 to vector<8x64xf32>
    %10 = arith.maximumf %8, %9 : vector<8x64xf32>
    %c0_7 = arith.constant 0 : index
    %c0_8 = arith.constant 0 : index
    %11 = vector.load %arg18[%c0_7, %c0_8] : memref<8x32xf32, #tpu.memory_space<vmem>>, vector<8x32xf32>
    %12 = arith.truncf %10 : vector<8x64xf32> to vector<8x64xbf16>
    %c0_9 = arith.constant 0 : index
    %c0_10 = arith.constant 0 : index
    %13 = vector.load %arg12[%c0_9, %c0_10] : memref<64x32xbf16, #tpu.memory_space<vmem>>, vector<64x32xbf16>
    %cst_11 = arith.constant dense<0.000000e+00> : vector<8x32xf32>
    %14 = tpu.matmul %12, %13, %cst_11 {dimension_numbers = #tpu.dot_dimension_numbers<[1], [0], [0], [1], [0, 0, 1, 1], [], []>} : vector<8x64xbf16>, vector<64x32xbf16>, vector<8x32xf32> -> vector<8x32xf32>
    %15 = arith.addf %11, %14 : vector<8x32xf32>
    %c0_12 = arith.constant 0 : index
    %c0_13 = arith.constant 0 : index
    %16 = vector.load %arg18[%c0_12, %c0_13] : memref<8x32xf32, #tpu.memory_space<vmem>>, vector<8x32xf32>
    tpu.vector_store %arg18[%c0_12, %c0_13], %15 {strides = array<i32>} : memref<8x32xf32, #tpu.memory_space<vmem>>, vector<8x32xf32>,
    %c0_i32_14 = arith.constant 0 : i32
    %17 = arith.cmpi eq, %arg2, %c0_i32_14 : i32
    %18 = arith.extui %17 : i1 to i32
    %c0_i32_15 = arith.constant 0 : i32
    %19 = arith.cmpi ne, %18, %c0_i32_15 : i32
    scf.if %19 {
      %c0_16 = arith.constant 0 : index
      %c0_17 = arith.constant 0 : index
      %20 = vector.load %arg16[%c0_16, %c0_17] : memref<8x32xf32, #tpu.memory_space<vmem>>, vector<8x32xf32>
      %c0_18 = arith.constant 0 : index
      %c0_19 = arith.constant 0 : index
      %21 = vector.load %arg18[%c0_18, %c0_19] : memref<8x32xf32, #tpu.memory_space<vmem>>, vector<8x32xf32>
      %22 = arith.addf %20, %21 : vector<8x32xf32>
      %c4 = arith.constant 4 : index
      %c0_20 = arith.constant 0 : index
      %23 = vector.load %arg9[%c4, %c0_20] : memref<8x32xf32, #tpu.memory_space<vmem>>, vector<1x32xf32>
      %24 = vector.broadcast %23 : vector<1x32xf32> to vector<8x32xf32>
      %25 = arith.addf %22, %24 : vector<8x32xf32>
      %c5 = arith.constant 5 : index
      %c0_21 = arith.constant 0 : index
      %26 = vector.load %arg9[%c5, %c0_21] : memref<8x32xf32, #tpu.memory_space<vmem>>, vector<1x32xf32>
      %c6 = arith.constant 6 : index
      %c0_22 = arith.constant 0 : index
      %27 = vector.load %arg9[%c6, %c0_22] : memref<8x32xf32, #tpu.memory_space<vmem>>, vector<1x32xf32>
      %cst_23 = arith.constant dense<0.000000e+00> : vector<8xf32>
      %28 = vector.multi_reduction <add>, %25, %cst_23 [1] : vector<8x32xf32> to vector<8xf32>
      %29 = vector.shape_cast %28 : vector<8xf32> to vector<8x1xf32>
      %cst_24 = arith.constant 3.200000e+01 : f32
      %30 = vector.broadcast %cst_24 : f32 to vector<8x1xf32>
      %31 = arith.divf %29, %30 : vector<8x1xf32>
      %32 = vector.broadcast %31 : vector<8x1xf32> to vector<8x32xf32>
      %33 = arith.subf %25, %32 : vector<8x32xf32>
      %34 = arith.mulf %33, %33 : vector<8x32xf32>
      %cst_25 = arith.constant dense<0.000000e+00> : vector<8xf32>
      %35 = vector.multi_reduction <add>, %34, %cst_25 [1] : vector<8x32xf32> to vector<8xf32>
      %36 = vector.shape_cast %35 : vector<8xf32> to vector<8x1xf32>
      %cst_26 = arith.constant 3.200000e+01 : f32
      %37 = vector.broadcast %cst_26 : f32 to vector<8x1xf32>
      %38 = arith.divf %36, %37 : vector<8x1xf32>
      %cst_27 = arith.constant 9.99999974E-6 : f32
      %39 = vector.broadcast %cst_27 : f32 to vector<8x1xf32>
      %40 = arith.addf %38, %39 : vector<8x1xf32>
      %41 = math.rsqrt %40 : vector<8x1xf32>
      %42 = vector.broadcast %31 : vector<8x1xf32> to vector<8x32xf32>
      %43 = arith.subf %25, %42 : vector<8x32xf32>
      %44 = vector.broadcast %41 : vector<8x1xf32> to vector<8x32xf32>
      %45 = arith.mulf %43, %44 : vector<8x32xf32>
      %46 = vector.broadcast %26 : vector<1x32xf32> to vector<8x32xf32>
      %47 = arith.mulf %45, %46 : vector<8x32xf32>
      %48 = vector.broadcast %27 : vector<1x32xf32> to vector<8x32xf32>
      %49 = arith.addf %47, %48 : vector<8x32xf32>
      %c0_28 = arith.constant 0 : index
      %c0_29 = arith.constant 0 : index
      %c0_30 = arith.constant 0 : index
      %50 = vector.load %arg13[%c0_28, %c0_29, %c0_30] : memref<1x8x32xf32, #tpu.memory_space<vmem>>, vector<1x8x32xf32>
      %51 = vector.shape_cast %50 : vector<1x8x32xf32> to vector<8x32xf32>
      %52 = vector.shape_cast %49 : vector<8x32xf32> to vector<1x8x32xf32>
      tpu.vector_store %arg13[%c0_28, %c0_29, %c0_30], %52 {strides = array<i32>} : memref<1x8x32xf32, #tpu.memory_space<vmem>>, vector<1x8x32xf32>,
    } else {
    }
    return
  }
  func.func @transform_0(%arg0: i32, %arg1: i32, %arg2: i32) -> (i32, i32, i32) {
    %c0_i32 = arith.constant 0 : i32
    %c0_i32_0 = arith.constant 0 : i32
    return %arg0, %arg1, %c0_i32 : i32, i32, i32
  }
  func.func @transform_1(%arg0: i32, %arg1: i32, %arg2: i32) -> (i32, i32, i32) {
    %c0_i32 = arith.constant 0 : i32
    %c0_i32_0 = arith.constant 0 : i32
    %c0_i32_1 = arith.constant 0 : i32
    return %arg0, %c0_i32, %c0_i32_0 : i32, i32, i32
  }
  func.func @transform_2(%arg0: i32, %arg1: i32, %arg2: i32) -> (i32, i32) {
    %c0_i32 = arith.constant 0 : i32
    %c0_i32_0 = arith.constant 0 : i32
    %c0_i32_1 = arith.constant 0 : i32
    return %c0_i32, %c0_i32_0 : i32, i32
  }
  func.func @transform_3(%arg0: i32, %arg1: i32, %arg2: i32) -> (i32, i32) {
    %c0_i32 = arith.constant 0 : i32
    %c0_i32_0 = arith.constant 0 : i32
    %c0_i32_1 = arith.constant 0 : i32
    return %c0_i32, %c0_i32_0 : i32, i32
  }
  func.func @transform_4(%arg0: i32, %arg1: i32, %arg2: i32) -> (i32, i32) {
    %c0_i32 = arith.constant 0 : i32
    %c0_i32_0 = arith.constant 0 : i32
    %c0_i32_1 = arith.constant 0 : i32
    return %c0_i32, %c0_i32_0 : i32, i32
  }
  func.func @transform_5(%arg0: i32, %arg1: i32, %arg2: i32) -> (i32, i32) {
    %c0_i32 = arith.constant 0 : i32
    %c0_i32_0 = arith.constant 0 : i32
    %c0_i32_1 = arith.constant 0 : i32
    return %c0_i32, %c0_i32_0 : i32, i32
  }
  func.func @transform_6(%arg0: i32, %arg1: i32, %arg2: i32) -> (i32, i32) {
    %c0_i32 = arith.constant 0 : i32
    %c0_i32_0 = arith.constant 0 : i32
    %c0_i32_1 = arith.constant 0 : i32
    return %c0_i32, %c0_i32_0 : i32, i32
  }
  func.func @transform_7(%arg0: i32, %arg1: i32, %arg2: i32) -> (i32, i32) {
    %c0_i32 = arith.constant 0 : i32
    %c0_i32_0 = arith.constant 0 : i32
    return %c0_i32, %arg2 : i32, i32
  }
  func.func @transform_8(%arg0: i32, %arg1: i32, %arg2: i32) -> (i32, i32) {
    %c0_i32 = arith.constant 0 : i32
    %c0_i32_0 = arith.constant 0 : i32
    return %c0_i32, %arg2 : i32, i32
  }
  func.func @transform_9(%arg0: i32, %arg1: i32, %arg2: i32) -> (i32, i32) {
    %c0_i32 = arith.constant 0 : i32
    %c0_i32_0 = arith.constant 0 : i32
    return %arg2, %c0_i32 : i32, i32
  }
  func.func @transform_10(%arg0: i32, %arg1: i32, %arg2: i32) -> (i32, i32, i32) {
    %c0_i32 = arith.constant 0 : i32
    %c0_i32_0 = arith.constant 0 : i32
    return %arg0, %arg1, %c0_i32 : i32, i32, i32
  }
}

</mosaic_0001>

<llo_original>
// kernel: tpu_custom_call.1
$region0: #{tpu_custom_call.1}
  #allocation0 [shape = 'u32[]', space=smem, size = 0x4, offset = 0x4, fixed_abs, tag = 'smem constant byte address 0x4 - core index']
  #allocation1 [shape = 'u32[72,128]{1,0:T(1,128)}', space=vmem, size = 0x9000, scoped, tag = 'internal scratch']
  #allocation2 [shape = 'bf16[8,64]{1,0:T(8,128)(2,1)}', space=vmem, size = 0x800, scoped, tag = 'scratch operand']
  #allocation3 [shape = 'f32[8,32]{1,0:T(8,128)}', space=vmem, size = 0x1000, scoped, tag = 'scratch operand']
  #allocation4 [shape = 'f32[8,32]{1,0:T(8,128)}', space=vmem, size = 0x1000, scoped, tag = 'scratch operand']
  #allocation5 [shape = 'bf16[8,32]{1,0:T(8,128)(2,1)}', space=vmem, size = 0x800, scoped, tag = 'scratch operand']
  #allocation6 [shape = 'f32[8,32]{1,0:T(8,128)}', space=vmem, size = 0x1000, scoped, tag = 'scratch operand']
  %s0 = inlined_call_operand.vmem [shape: f32[2,8,32], index: 0, kind: input, shape index: {}]
  %s1 = inlined_call_operand.vmem [shape: f32[2,8,32], index: 1, kind: input, shape index: {}]
  %s2 = inlined_call_operand.vmem [shape: bf16[32,32], index: 2, kind: input, shape index: {}]
  %s3 = inlined_call_operand.hbm [shape: bf16[32,64], index: 3, kind: input, shape index: {}]
  %s4 = inlined_call_operand.vmem [shape: f32[1,64], index: 4, kind: input, shape index: {}]
  %s5 = inlined_call_operand.hbm [shape: bf16[32,32], index: 5, kind: input, shape index: {}]
  %s6 = inlined_call_operand.hbm [shape: f32[8,32], index: 6, kind: input, shape index: {}]
  %s7 = inlined_call_operand.hbm [shape: bf16[32,64], index: 7, kind: input, shape index: {}]
  %s8 = inlined_call_operand.vmem [shape: f32[1,64], index: 8, kind: input, shape index: {}]
  %s9 = inlined_call_operand.vmem [shape: bf16[64,32], index: 9, kind: input, shape index: {}]
  %s10 = inlined_call_operand.hbm [shape: f32[2,8,32], index: 10, kind: output, shape index: {}]
  %s11 = sld [smem:[#allocation0]]
  $region101: #{tpu_custom_call.1} parent=0
    _
  %s13 = ssub.s32 1, %s11
  %s14 = scalar_select 0, %s13, %s11
  $region1: #{tpu_custom_call.1} parent=0
    #allocation7 [shape = 'u8[8192]{0}', space=vmem, size = 0x2000, scoped, tag = 'input window, operand 3, single buffered']
    #allocation8 [shape = 's32[2]{0}', space=sflag, size = 0x8, scoped, tag = 'scoped memory for tpu_custom_call.1']
    #allocation9 [shape = 's32[2]{0}', space=sflag, size = 0x8, scoped, tag = 'scoped memory for tpu_custom_call.1']
    #allocation10 [shape = 'u8[8192]{0}', space=vmem, size = 0x2000, scoped, tag = 'input window, operand 5, single buffered']
    #allocation11 [shape = 's32[1]{0}', space=sflag, size = 0x4, scoped, tag = 'scoped memory for tpu_custom_call.1']
    #allocation12 [shape = 'u8[4096]{0}', space=vmem, size = 0x1000, scoped, tag = 'input window, operand 6, single buffered']
    #allocation13 [shape = 'u8[8192]{0}', space=vmem, size = 0x2000, scoped, tag = 'input window, operand 7, single buffered']
    #allocation14 [shape = 's32[1]{0}', space=sflag, size = 0x4, scoped, tag = 'scoped memory for tpu_custom_call.1']
    #allocation15 [shape = 'u8[8192]{0}', space=vmem, size = 0x2000, scoped, tag = 'output window, operand 0']
    %15 = vsyncpa [#allocation8], 0
    %16 = vsyncpa [#allocation11], 0
    %17 = vsyncpa [#allocation14], 0
    %18 = vsyncpa [#allocation9], 0
    %s19 = scalar_lea.sflag [#allocation9], 1
    %20 = vsyncpa %s19, 0
    loop: start=0, step=1, limit=4
    $region2: #{tpu_custom_call.1} parent=1 // loop_pre_header
      _
    $region3: #{tpu_custom_call.1} parent=1 // loop_header
      %s22 = sphi 0, %s26
      %p23 = scmp.ge.s32.totalorder %s22, 4
      %s29 = sphi 0, %s48
      %s30 = sphi 0, %s44
      %s31 = sphi 0, %s40
      %s32 = sphi 0, %s29
      %s33 = sphi 0, %s30
      %s34 = sphi 0, %s31
      %s35 = sphi 0, %s32
      %s36 = sphi 0, %s33
      %s37 = sphi 0, %s34
      %s53 = sphi 0, %s55
      %s56 = sphi 0, %s53
      %s57 = sphi 0, %s56
      %s73 = sphi 0, %s57
      %s79 = sphi 0, %s81
      %s82 = sphi 0, %s79
      %s83 = sphi 0, %s82
      %s99 = sphi 0, %s83
      %s103 = sphi 0, %s103
      %s105 = sphi 0, %s103
      %s106 = sphi 0, %s105
      %s120 = sphi 0, %s106
      %s124 = sphi 0, %s124
      %s126 = sphi 0, %s124
      %s127 = sphi 0, %s126
      %s141 = sphi 0, %s127
      %s145 = sphi 0, %s145
      %s147 = sphi 0, %s145
      %s148 = sphi 0, %s147
      %s162 = sphi 0, %s148
      %s166 = sphi 0, %s166
      %s168 = sphi 0, %s166
      %s169 = sphi 0, %s168
      %s183 = sphi 0, %s169
      %s187 = sphi 0, %s187
      %s189 = sphi 0, %s187
      %s190 = sphi 0, %s189
      %s204 = sphi 0, %s190
      %s210 = sphi 0, %s212
      %s213 = sphi 0, %s210
      %s214 = sphi 0, %s213
      %s230 = sphi 0, %s214
      %s236 = sphi 0, %s238
      %s239 = sphi 0, %s236
      %s240 = sphi 0, %s239
      %s256 = sphi 0, %s240
      %s262 = sphi 0, %s264
      %s265 = sphi 0, %s262
      %s266 = sphi 0, %s265
      %s282 = sphi 0, %s266
      %s290 = sphi 0, %s292
      %s293 = sphi 0, %s290
      %s294 = sphi 0, %s293
      %s310 = sphi 0, %s294
    $region4: #{tpu_custom_call.1} parent=1 // loop_header_branch
      %25 = sbr.rel (%p23) target = $region8
    $region5: #{tpu_custom_call.1} parent=1 // loop_body
      %s27 = ssub.s32 %s22, 1
      %s28 = ssub.s32 %s22, 2
      %s38 = sadd.s32 1, %s31
      %p39 = scmp.ge.s32.totalorder %s38, 1
      %s40 = scalar_select %p39, 0, %s38
      %s41 = sadd.s32 1, %s30
      %s42 = scalar_select %p39, %s41, %s30
      %p43 = scmp.ge.s32.totalorder %s42, 1
      %s44 = scalar_select %p43, 0, %s42
      %s45 = sadd.s32 1, %s29
      %s46 = scalar_select %p43, %s45, %s29
      %p47 = scmp.ge.s32.totalorder %s46, 2
      %s48 = scalar_select %p47, 0, %s46
      %s49 = ssub.s32 %s29, %s48
      %s50 = ssub.s32 %s30, %s44
      %s51 = sor.u32 %s49, %s50
      %p52 = scmp.eq.s32.totalorder %s51, 0
      %s54 = sadd.s32 %s53, 1
      %s55 = scalar_select %p52, %s53, %s54
      %p58 = pneg %p52
      %p59 = scmp.eq.s32.totalorder %s22, 1
      %p60 = por %p58, %p59
      %p61 = scmp.ne.s32.totalorder %s53, %s56
      %p62 = scmp.eq.s32.totalorder %s22, 0
      %p63 = por %p61, %p62
      %p64 = scmp.ne.s32.totalorder %s53, %s56
      %p65 = scmp.eq.s32.totalorder %s27, 1
      %p66 = por %p64, %p65
      %p67 = scmp.ne.s32.totalorder %s56, %s57
      %p68 = scmp.eq.s32.totalorder %s27, 0
      %p69 = por %p67, %p68
      %p70 = scmp.ne.s32.totalorder %s56, %s57
      %p71 = scmp.eq.s32.totalorder %s28, 1
      %p72 = por %p70, %p71
      %p74 = scmp.ne.s32.totalorder %s57, %s73
      %p75 = scmp.eq.s32.totalorder %s28, 0
      %p76 = por %p74, %p75
      %s77 = ssub.s32 %s29, %s48
      %p78 = scmp.eq.s32.totalorder %s77, 0
      %s80 = sadd.s32 %s79, 1
      %s81 = scalar_select %p78, %s79, %s80
      %p84 = pneg %p78
      %p85 = scmp.eq.s32.totalorder %s22, 1
      %p86 = por %p84, %p85
      %p87 = scmp.ne.s32.totalorder %s79, %s82
      %p88 = scmp.eq.s32.totalorder %s22, 0
      %p89 = por %p87, %p88
      %p90 = scmp.ne.s32.totalorder %s79, %s82
      %p91 = scmp.eq.s32.totalorder %s27, 1
      %p92 = por %p90, %p91
      %p93 = scmp.ne.s32.totalorder %s82, %s83
      %p94 = scmp.eq.s32.totalorder %s27, 0
      %p95 = por %p93, %p94
      %p96 = scmp.ne.s32.totalorder %s82, %s83
      %p97 = scmp.eq.s32.totalorder %s28, 1
      %p98 = por %p96, %p97
      %p100 = scmp.ne.s32.totalorder %s83, %s99
      %p101 = scmp.eq.s32.totalorder %s28, 0
      %p102 = por %p100, %p101
      %s104 = sadd.s32 %s103, 1
      %p107 = scmp.eq.s32.totalorder %s22, 1
      %p108 = scmp.ne.s32.totalorder %s103, %s105
      %p109 = scmp.eq.s32.totalorder %s22, 0
      %p110 = por %p108, %p109
      %p111 = scmp.ne.s32.totalorder %s103, %s105
      %p112 = scmp.eq.s32.totalorder %s27, 1
      %p113 = por %p111, %p112
      %p114 = scmp.ne.s32.totalorder %s105, %s106
      %p115 = scmp.eq.s32.totalorder %s27, 0
      %p116 = por %p114, %p115
      %p117 = scmp.ne.s32.totalorder %s105, %s106
      %p118 = scmp.eq.s32.totalorder %s28, 1
      %p119 = por %p117, %p118
      %p121 = scmp.ne.s32.totalorder %s106, %s120
      %p122 = scmp.eq.s32.totalorder %s28, 0
      %p123 = por %p121, %p122
      %s125 = sadd.s32 %s124, 1
      %p128 = scmp.eq.s32.totalorder %s22, 1
      %p129 = scmp.ne.s32.totalorder %s124, %s126
      %p130 = scmp.eq.s32.totalorder %s22, 0
      %p131 = por %p129, %p130
      %p132 = scmp.ne.s32.totalorder %s124, %s126
      %p133 = scmp.eq.s32.totalorder %s27, 1
      %p134 = por %p132, %p133
      %p135 = scmp.ne.s32.totalorder %s126, %s127
      %p136 = scmp.eq.s32.totalorder %s27, 0
      %p137 = por %p135, %p136
      %p138 = scmp.ne.s32.totalorder %s126, %s127
      %p139 = scmp.eq.s32.totalorder %s28, 1
      %p140 = por %p138, %p139
      %p142 = scmp.ne.s32.totalorder %s127, %s141
      %p143 = scmp.eq.s32.totalorder %s28, 0
      %p144 = por %p142, %p143
      %s146 = sadd.s32 %s145, 1
      %p149 = scmp.eq.s32.totalorder %s22, 1
      %p150 = scmp.ne.s32.totalorder %s145, %s147
      %p151 = scmp.eq.s32.totalorder %s22, 0
      %p152 = por %p150, %p151
      %p153 = scmp.ne.s32.totalorder %s145, %s147
      %p154 = scmp.eq.s32.totalorder %s27, 1
      %p155 = por %p153, %p154
      %p156 = scmp.ne.s32.totalorder %s147, %s148
      %p157 = scmp.eq.s32.totalorder %s27, 0
      %p158 = por %p156, %p157
      %p159 = scmp.ne.s32.totalorder %s147, %s148
      %p160 = scmp.eq.s32.totalorder %s28, 1
      %p161 = por %p159, %p160
      %p163 = scmp.ne.s32.totalorder %s148, %s162
      %p164 = scmp.eq.s32.totalorder %s28, 0
      %p165 = por %p163, %p164
      %s167 = sadd.s32 %s166, 1
      %p170 = scmp.eq.s32.totalorder %s22, 1
      %p171 = scmp.ne.s32.totalorder %s166, %s168
      %p172 = scmp.eq.s32.totalorder %s22, 0
      %p173 = por %p171, %p172
      %p174 = scmp.ne.s32.totalorder %s166, %s168
      %p175 = scmp.eq.s32.totalorder %s27, 1
      %p176 = por %p174, %p175
      %p177 = scmp.ne.s32.totalorder %s168, %s169
      %p178 = scmp.eq.s32.totalorder %s27, 0
      %p179 = por %p177, %p178
      %p180 = scmp.ne.s32.totalorder %s168, %s169
      %p181 = scmp.eq.s32.totalorder %s28, 1
      %p182 = por %p180, %p181
      %p184 = scmp.ne.s32.totalorder %s169, %s183
      %p185 = scmp.eq.s32.totalorder %s28, 0
      %p186 = por %p184, %p185
      %s188 = sadd.s32 %s187, 1
      %p191 = scmp.eq.s32.totalorder %s22, 1
      %p192 = scmp.ne.s32.totalorder %s187, %s189
      %p193 = scmp.eq.s32.totalorder %s22, 0
      %p194 = por %p192, %p193
      %p195 = scmp.ne.s32.totalorder %s187, %s189
      %p196 = scmp.eq.s32.totalorder %s27, 1
      %p197 = por %p195, %p196
      %p198 = scmp.ne.s32.totalorder %s189, %s190
      %p199 = scmp.eq.s32.totalorder %s27, 0
      %p200 = por %p198, %p199
      %p201 = scmp.ne.s32.totalorder %s189, %s190
      %p202 = scmp.eq.s32.totalorder %s28, 1
      %p203 = por %p201, %p202
      %p205 = scmp.ne.s32.totalorder %s190, %s204
      %p206 = scmp.eq.s32.totalorder %s28, 0
      %p207 = por %p205, %p206
      %s208 = ssub.s32 %s31, %s40
      %p209 = scmp.eq.s32.totalorder %s208, 0
      %s211 = sadd.s32 %s210, 1
      %s212 = scalar_select %p209, %s210, %s211
      %p215 = pneg %p209
      %p216 = scmp.eq.s32.totalorder %s22, 1
      %p217 = por %p215, %p216
      %p218 = scmp.ne.s32.totalorder %s210, %s213
      %p219 = scmp.eq.s32.totalorder %s22, 0
      %p220 = por %p218, %p219
      %p221 = scmp.ne.s32.totalorder %s210, %s213
      %p222 = scmp.eq.s32.totalorder %s27, 1
      %p223 = por %p221, %p222
      %p224 = scmp.ne.s32.totalorder %s213, %s214
      %p225 = scmp.eq.s32.totalorder %s27, 0
      %p226 = por %p224, %p225
      %p227 = scmp.ne.s32.totalorder %s213, %s214
      %p228 = scmp.eq.s32.totalorder %s28, 1
      %p229 = por %p227, %p228
      %p231 = scmp.ne.s32.totalorder %s214, %s230
      %p232 = scmp.eq.s32.totalorder %s28, 0
      %p233 = por %p231, %p232
      %s234 = ssub.s32 %s31, %s40
      %p235 = scmp.eq.s32.totalorder %s234, 0
      %s237 = sadd.s32 %s236, 1
      %s238 = scalar_select %p235, %s236, %s237
      %p241 = pneg %p235
      %p242 = scmp.eq.s32.totalorder %s22, 1
      %p243 = por %p241, %p242
      %p244 = scmp.ne.s32.totalorder %s236, %s239
      %p245 = scmp.eq.s32.totalorder %s22, 0
      %p246 = por %p244, %p245
      %p247 = scmp.ne.s32.totalorder %s236, %s239
      %p248 = scmp.eq.s32.totalorder %s27, 1
      %p249 = por %p247, %p248
      %p250 = scmp.ne.s32.totalorder %s239, %s240
      %p251 = scmp.eq.s32.totalorder %s27, 0
      %p252 = por %p250, %p251
      %p253 = scmp.ne.s32.totalorder %s239, %s240
      %p254 = scmp.eq.s32.totalorder %s28, 1
      %p255 = por %p253, %p254
      %p257 = scmp.ne.s32.totalorder %s240, %s256
      %p258 = scmp.eq.s32.totalorder %s28, 0
      %p259 = por %p257, %p258
      %s260 = ssub.s32 %s31, %s40
      %p261 = scmp.eq.s32.totalorder %s260, 0
      %s263 = sadd.s32 %s262, 1
      %s264 = scalar_select %p261, %s262, %s263
      %p267 = pneg %p261
      %p268 = scmp.eq.s32.totalorder %s22, 1
      %p269 = por %p267, %p268
      %p270 = scmp.ne.s32.totalorder %s262, %s265
      %p271 = scmp.eq.s32.totalorder %s22, 0
      %p272 = por %p270, %p271
      %p273 = scmp.ne.s32.totalorder %s262, %s265
      %p274 = scmp.eq.s32.totalorder %s27, 1
      %p275 = por %p273, %p274
      %p276 = scmp.ne.s32.totalorder %s265, %s266
      %p277 = scmp.eq.s32.totalorder %s27, 0
      %p278 = por %p276, %p277
      %p279 = scmp.ne.s32.totalorder %s265, %s266
      %p280 = scmp.eq.s32.totalorder %s28, 1
      %p281 = por %p279, %p280
      %p283 = scmp.ne.s32.totalorder %s266, %s282
      %p284 = scmp.eq.s32.totalorder %s28, 0
      %p285 = por %p283, %p284
      %s286 = ssub.s32 %s29, %s48
      %s287 = ssub.s32 %s30, %s44
      %s288 = sor.u32 %s286, %s287
      %p289 = scmp.eq.s32.totalorder %s288, 0
      %s291 = sadd.s32 %s290, 1
      %s292 = scalar_select %p289, %s290, %s291
      %p295 = pneg %p289
      %p296 = scmp.eq.s32.totalorder %s22, 1
      %p297 = por %p295, %p296
      %p298 = scmp.ne.s32.totalorder %s290, %s293
      %p299 = scmp.eq.s32.totalorder %s22, 0
      %p300 = por %p298, %p299
      %p301 = scmp.ne.s32.totalorder %s290, %s293
      %p302 = scmp.eq.s32.totalorder %s27, 1
      %p303 = por %p301, %p302
      %p304 = scmp.ne.s32.totalorder %s293, %s294
      %p305 = scmp.eq.s32.totalorder %s27, 0
      %p306 = por %p304, %p305
      %p307 = scmp.ne.s32.totalorder %s293, %s294
      %p308 = scmp.eq.s32.totalorder %s28, 1
      %p309 = por %p307, %p308
      %p311 = scmp.ne.s32.totalorder %s294, %s310
      %p312 = scmp.eq.s32.totalorder %s28, 0
      %p313 = por %p311, %p312
      %p314 = scmp.le.s32.totalorder 1, %s22
      %p315 = scmp.lt.s32.totalorder %s22, 3
      %p316 = pnand %p314, %p315
      %p317 = pneg %p316
      // Predicated region
      $region9: #{tpu_custom_call.1} parent=5 // pred_check
        _
      $region10: #{tpu_custom_call.1} parent=5 // pred_check_branch
        %319 = sbr.rel (%p316) target = $region12
      $region11: #{tpu_custom_call.1} parent=5 // pred_region
        %s320 = ssub.s32 %s22, 1
        // Predicated region
        $region13: #{tpu_custom_call.1} parent=11 // pred_check
          %p321 = pneg %p95
        $region14: #{tpu_custom_call.1} parent=11 // pred_check_branch
          %323 = sbr.rel (%p321) target = $region16
        $region15: #{tpu_custom_call.1} parent=11 // pred_region
          %p324 = scmp.lt.s32.totalorder %s32, 1
          %s325 = scalar_select %p324, %s32, 1
          %s326 = smul.addr %s325, 8
          %s327 = scalar_lea.vmem %s1, %s326
        $region16: #{tpu_custom_call.1} parent=11 // pred_fallthru
          _
        // Predicated region
        $region17: #{tpu_custom_call.1} parent=11 // pred_check
          %p328 = pneg %p116
        $region18: #{tpu_custom_call.1} parent=11 // pred_check_branch
          %330 = sbr.rel (%p328) target = $region20
        $region19: #{tpu_custom_call.1} parent=11 // pred_region
          _
        $region20: #{tpu_custom_call.1} parent=11 // pred_fallthru
          _
        // Predicated region
        $region21: #{tpu_custom_call.1} parent=11 // pred_check
          %p331 = pneg %p137
        $region22: #{tpu_custom_call.1} parent=11 // pred_check_branch
          %333 = sbr.rel (%p331) target = $region24
        $region23: #{tpu_custom_call.1} parent=11 // pred_region
          %335 = vsyncadd [#allocation8], 0
          %s336 = sshll.u32 %s3, 4
          %s337 = int_to_ptr.hbm [resolvable:$true] %s336
          %s338 = sshll.u32 [#allocation7], 4
          %s339 = int_to_ptr.vmem [resolvable:$true] %s338
          %344 = dma.hbm_to_vmem [thread:$0]  %s337, 256, %s339, [#allocation8], 64, 64, 4
        $region24: #{tpu_custom_call.1} parent=11 // pred_fallthru
          _
        // Predicated region
        $region25: #{tpu_custom_call.1} parent=11 // pred_check
          %p345 = pneg %p158
        $region26: #{tpu_custom_call.1} parent=11 // pred_check_branch
          %347 = sbr.rel (%p345) target = $region28
        $region27: #{tpu_custom_call.1} parent=11 // pred_region
          _
        $region28: #{tpu_custom_call.1} parent=11 // pred_fallthru
          _
        // Predicated region
        $region29: #{tpu_custom_call.1} parent=11 // pred_check
          %p348 = pneg %p179
        $region30: #{tpu_custom_call.1} parent=11 // pred_check_branch
          %350 = sbr.rel (%p348) target = $region32
        $region31: #{tpu_custom_call.1} parent=11 // pred_region
          %352 = vsyncadd [#allocation11], 0
          %s353 = sshll.u32 %s5, 4
          %s354 = int_to_ptr.hbm [resolvable:$true] %s353
          %s355 = sshll.u32 [#allocation10], 4
          %s356 = int_to_ptr.vmem [resolvable:$true] %s355
          %361 = dma.hbm_to_vmem [thread:$0]  %s354, 256, %s356, [#allocation11], 64, 64, 4
        $region32: #{tpu_custom_call.1} parent=11 // pred_fallthru
          _
        // Predicated region
        $region33: #{tpu_custom_call.1} parent=11 // pred_check
          %p362 = pneg %p200
        $region34: #{tpu_custom_call.1} parent=11 // pred_check_branch
          %364 = sbr.rel (%p362) target = $region36
        $region35: #{tpu_custom_call.1} parent=11 // pred_region
          %366 = vsyncadd [#allocation11], 0
          %s368 = sshll.u32 %s6, 4
          %s369 = int_to_ptr.hbm [resolvable:$true] %s368
          %s370 = sshll.u32 [#allocation12], 4
          %s371 = int_to_ptr.vmem [resolvable:$true] %s370
          %373 = dma.hbm_to_vmem [thread:$0]  %s369, 128, %s371, [#allocation11]
        $region36: #{tpu_custom_call.1} parent=11 // pred_fallthru
          _
        // Predicated region
        $region37: #{tpu_custom_call.1} parent=11 // pred_check
          %p374 = pneg %p226
        $region38: #{tpu_custom_call.1} parent=11 // pred_check_branch
          %376 = sbr.rel (%p374) target = $region40
        $region39: #{tpu_custom_call.1} parent=11 // pred_region
          %378 = vsyncadd [#allocation14], 0
          %s379 = smul.addr %s34, 4
          %s380 = scalar_lea.hbm %s7, %s379
          %s381 = sshll.u32 %s380, 4
          %s382 = int_to_ptr.hbm [resolvable:$true] %s381
          %s383 = sshll.u32 [#allocation13], 4
          %s384 = int_to_ptr.vmem [resolvable:$true] %s383
          %389 = dma.hbm_to_vmem [thread:$0]  %s382, 256, %s384, [#allocation14], 64, 64, 4
        $region40: #{tpu_custom_call.1} parent=11 // pred_fallthru
          _
        // Predicated region
        $region41: #{tpu_custom_call.1} parent=11 // pred_check
          %p390 = pneg %p252
        $region42: #{tpu_custom_call.1} parent=11 // pred_check_branch
          %392 = sbr.rel (%p390) target = $region44
        $region43: #{tpu_custom_call.1} parent=11 // pred_region
          %p393 = scmp.lt.s32.totalorder %s34, 0
          %s394 = scalar_select %p393, %s34, 0
          %s395 = scalar_lea.vmem %s8, %s394
        $region44: #{tpu_custom_call.1} parent=11 // pred_fallthru
          _
        // Predicated region
        $region45: #{tpu_custom_call.1} parent=11 // pred_check
          %p396 = pneg %p278
        $region46: #{tpu_custom_call.1} parent=11 // pred_check_branch
          %398 = sbr.rel (%p396) target = $region48
        $region47: #{tpu_custom_call.1} parent=11 // pred_region
          %s399 = smul.u32 8, %s34
          %p400 = scmp.lt.s32.totalorder %s399, 7
          %s401 = scalar_select %p400, %s399, 7
          %s402 = smul.addr %s401, 4
          %s403 = scalar_lea.vmem %s9, %s402
          %s404 = smul.u32 8, %s34
        $region48: #{tpu_custom_call.1} parent=11 // pred_fallthru
          _
      $region12: #{tpu_custom_call.1} parent=5 // pred_fallthru
        _
      %p405 = scmp.lt.s32.totalorder %s22, 2
      // Predicated region
      $region49: #{tpu_custom_call.1} parent=5 // pred_check
        %p406 = pneg %p405
      $region50: #{tpu_custom_call.1} parent=5 // pred_check_branch
        %408 = sbr.rel (%p406) target = $region52
      $region51: #{tpu_custom_call.1} parent=5 // pred_region
        // Predicated region
        $region53: #{tpu_custom_call.1} parent=51 // pred_check
          %p409 = pneg %p63
        $region54: #{tpu_custom_call.1} parent=51 // pred_check_branch
          %411 = sbr.rel (%p409) target = $region56
        $region55: #{tpu_custom_call.1} parent=51 // pred_region
          %p412 = scmp.lt.s32.totalorder %s29, 1
          %s413 = scalar_select %p412, %s29, 1
          %p414 = scmp.lt.s32.totalorder %s30, 0
          %s415 = scalar_select %p414, %s30, 0
          %s416 = sadd.s32 %s415, %s413
          %s417 = smul.addr %s416, 8
          %s418 = scalar_lea.vmem %s0, %s417
        $region56: #{tpu_custom_call.1} parent=51 // pred_fallthru
          _
      $region52: #{tpu_custom_call.1} parent=5 // pred_fallthru
        _
      %p419 = scmp.le.s32.totalorder 1, %s22
      %p420 = scmp.lt.s32.totalorder %s22, 3
      %p421 = pnand %p419, %p420
      %p422 = pneg %p421
      // Predicated region
      $region57: #{tpu_custom_call.1} parent=5 // pred_check
        _
      $region58: #{tpu_custom_call.1} parent=5 // pred_check_branch
        %424 = sbr.rel (%p421) target = $region60
      $region59: #{tpu_custom_call.1} parent=5 // pred_region
        %s425 = ssub.s32 %s22, 1
        // Predicated region
        $region61: #{tpu_custom_call.1} parent=59 // pred_check
          %p426 = pneg %p137
        $region62: #{tpu_custom_call.1} parent=59 // pred_check_branch
          %428 = sbr.rel (%p426) target = $region64
        $region63: #{tpu_custom_call.1} parent=59 // pred_region
          %430 = dma.done [#allocation8], 256
        $region64: #{tpu_custom_call.1} parent=59 // pred_fallthru
          _
        // Predicated region
        $region65: #{tpu_custom_call.1} parent=59 // pred_check
          %p431 = pneg %p179
        $region66: #{tpu_custom_call.1} parent=59 // pred_check_branch
          %433 = sbr.rel (%p431) target = $region68
        $region67: #{tpu_custom_call.1} parent=59 // pred_region
          %435 = dma.done [#allocation11], 256
        $region68: #{tpu_custom_call.1} parent=59 // pred_fallthru
          _
        // Predicated region
        $region69: #{tpu_custom_call.1} parent=59 // pred_check
          %p436 = pneg %p200
        $region70: #{tpu_custom_call.1} parent=59 // pred_check_branch
          %438 = sbr.rel (%p436) target = $region72
        $region71: #{tpu_custom_call.1} parent=59 // pred_region
          %440 = dma.done [#allocation11], 128
        $region72: #{tpu_custom_call.1} parent=59 // pred_fallthru
          _
        // Predicated region
        $region73: #{tpu_custom_call.1} parent=59 // pred_check
          %p441 = pneg %p226
        $region74: #{tpu_custom_call.1} parent=59 // pred_check_branch
          %443 = sbr.rel (%p441) target = $region76
        $region75: #{tpu_custom_call.1} parent=59 // pred_region
          %445 = dma.done [#allocation14], 256
        $region76: #{tpu_custom_call.1} parent=59 // pred_fallthru
          _
        %p446 = scmp.lt.s32.totalorder %s32, 1
        %s447 = scalar_select %p446, %s32, 1
        %p448 = scmp.lt.s32.totalorder %s33, 0
        %s449 = scalar_select %p448, %s33, 0
        %s450 = sadd.s32 %s449, %s447
        %s451 = smul.addr %s450, 8
        %s452 = scalar_lea.vmem %s0, %s451
        %p453 = pneg %p69
        %p454 = pneg %p66
        %p455 = scmp.lt.s32.totalorder %s32, 1
        %s456 = scalar_select %p455, %s32, 1
        %s457 = smul.addr %s456, 8
        %s458 = scalar_lea.vmem %s1, %s457
        %p459 = pneg %p95
        %p460 = pneg %p92
        %p461 = pneg %p116
        %p462 = pneg %p113
        %p463 = pneg %p137
        %p464 = pneg %p134
        %p465 = pneg %p158
        %p466 = pneg %p155
        %p467 = pneg %p179
        %p468 = pneg %p176
        %p469 = pneg %p200
        %p470 = pneg %p197
        %p471 = pneg %p226
        %p472 = pneg %p223
        %p473 = scmp.lt.s32.totalorder %s34, 0
        %s474 = scalar_select %p473, %s34, 0
        %s475 = scalar_lea.vmem %s8, %s474
        %p476 = pneg %p252
        %p477 = pneg %p249
        %s478 = smul.u32 8, %s34
        %p479 = scmp.lt.s32.totalorder %s478, 7
        %s480 = scalar_select %p479, %s478, 7
        %s481 = smul.addr %s480, 4
        %s482 = scalar_lea.vmem %s9, %s481
        %p483 = pneg %p278
        %p484 = pneg %p275
        %p485 = pneg %p306
        %p486 = pneg %p303
        %s487 = sand.u32 %s293, 1
        %s488 = scalar_lea.sflag [#allocation9], %s487
        %s489 = sand.u32 %s293, 1
        %s490 = smul.addr %s489, 8
        %s491 = scalar_lea.vmem [#allocation15], %s490
        %p492 = scmp.lt.s32.totalorder %s32, 1
        %s493 = scalar_select %p492, %s32, 1
        %p494 = scmp.lt.s32.totalorder %s33, 0
        %s495 = scalar_select %p494, %s33, 0
        %s496 = sadd.s32 %s495, %s493
        %s497 = smul.addr %s496, 8
        %s498 = scalar_lea.vmem %s0, %s497
        %p499 = scmp.lt.s32.totalorder %s32, 1
        %s500 = scalar_select %p499, %s32, 1
        %s501 = smul.addr %s500, 8
        %s502 = scalar_lea.vmem %s1, %s501
        %p503 = scmp.lt.s32.totalorder %s34, 0
        %s504 = scalar_select %p503, %s34, 0
        %s505 = scalar_lea.vmem %s8, %s504
        %s506 = smul.u32 8, %s34
        %p507 = scmp.lt.s32.totalorder %s506, 7
        %s508 = scalar_select %p507, %s506, 7
        %s509 = smul.addr %s508, 4
        %s510 = scalar_lea.vmem %s9, %s509
        %s511 = smul.u32 8, %s34
        %p513 = scmp.eq.s32.totalorder %s34, 0
        // Predicated region
        $region77: #{tpu_custom_call.1} parent=59 // pred_check
          %p514 = pneg %p513
        $region78: #{tpu_custom_call.1} parent=59 // pred_check_branch
          %516 = sbr.rel (%p514) target = $region80
        $region79: #{tpu_custom_call.1} parent=59 // pred_region
          %p517 = scmp.eq.s32.totalorder %s33, 0
          // Predicated region
          $region81: #{tpu_custom_call.1} parent=79 // pred_check
            %p518 = pneg %p517
          $region82: #{tpu_custom_call.1} parent=79 // pred_check_branch
            %520 = sbr.rel (%p518) target = $region84
          $region83: #{tpu_custom_call.1} parent=79 // pred_region
            %v521 = vld [vmem:[%s4] sm:$0x1]
            %v522 = vld [vmem:[%s502] sm:$0xff]
            %v523 = vpack.c.bf16 %v522, %v522
            %v524 = vld [vmem:[#allocation7] sm:$0xf]
            %v525 = vld [vmem:[#allocation7 + $0x4] sm:$0xf]
            %v526 = vld [vmem:[#allocation7 + $0x8] sm:$0xf]
            %v527 = vld [vmem:[#allocation7 + $0xc] sm:$0xf]
            %v529 = vperm.slane %v521, 0
            %v535 = vunpack.c.l.b16 %v524
            %v536 = vunpack.c.l.b16 %v525
            %v537 = vunpack.c.l.b16 %v526
            %v538 = vunpack.c.l.b16 %v527
            %v539 = vpack.c.b16 %v536, %v535
            %v540 = vpack.c.b16 %v538, %v537
            %vm543 = vcmask 261120
            %v545 = vsel %vm543, %v523, 0
            %547 = vmatpush.bf16.msra.mxu0 0
            %548 = vmatpush.bf16.msra.mxu0 0
            %549 = vmatpush.bf16.msra.mxu0 0
            %550 = vmatpush.bf16.msra.mxu0 0
            %551 = vmatpush.bf16.msra.mxu0 0
            %552 = vmatpush.bf16.msra.mxu0 0
            %553 = vmatpush.bf16.msra.mxu0 %v540
            %554 = vmatpush.bf16.msra.mxu0 %v539
            %555 = vmatmul.bf16.gmra.mxu0 %v545
            %v556 = vpop.f32.mrf.mxu0
            %v557 = vadd.f32 %v529, %v556
            %v558 = vpop.f32.mrf.mxu0
            %559 = vdwg.mxu0
            %v560 = vpack.c.bf16 %v557, %v557
            %vm561 = vcmask 519168
            %562 = vst.msk [vmem:[#allocation2] sm:$0xf] %vm561, %v560
          $region84: #{tpu_custom_call.1} parent=79 // pred_fallthru
            _
          %v563 = vld [vmem:[%s498] sm:$0xff]
          %v564 = vpack.c.bf16 %v563, %v563
          %v565 = vld [vmem:[%s2] sm:$0xf]
          %v566 = vld [vmem:[%s2 + $0x4] sm:$0xf]
          %v567 = vld [vmem:[%s2 + $0x8] sm:$0xf]
          %v568 = vld [vmem:[%s2 + $0xc] sm:$0xf]
          %v569 = vld [vmem:[#allocation12] sm:$0x1]
          %v570 = vperm.slane %v569, 0
          %v575 = vunpack.c.l.b16 %v565
          %v576 = vunpack.c.l.b16 %v566
          %v577 = vunpack.c.l.b16 %v567
          %v578 = vunpack.c.l.b16 %v568
          %v579 = vpack.c.b16 %v576, %v575
          %v580 = vpack.c.b16 %v578, %v577
          %vm583 = vcmask 261120
          %v585 = vsel %vm583, %v564, 0
          %587 = vmatpush.bf16.msra.mxu0 0
          %588 = vmatpush.bf16.msra.mxu0 0
          %589 = vmatpush.bf16.msra.mxu0 0
          %590 = vmatpush.bf16.msra.mxu0 0
          %591 = vmatpush.bf16.msra.mxu0 0
          %592 = vmatpush.bf16.msra.mxu0 0
          %593 = vmatpush.bf16.msra.mxu0 %v580
          %594 = vmatpush.bf16.msra.mxu0 %v579
          %595 = vmatmul.bf16.gmra.mxu0 %v585
          %v596 = vpop.f32.mrf.mxu0
          %v597 = vadd.f32 %v570, %v596
          %v598 = vpop.f32.mrf.mxu0
          %599 = vdwg.mxu0
          %v600 = vpack.c.bf16 %v597, %v597
          %v601 = vld [vmem:[#allocation2] sm:$0xf]
          %vm602 = vcmask 64512
          %v604 = vsel %vm602, %v600, 0
          %v607 = vsel %vm602, %v601, 0
          %609 = vmatpush.bf16.xpose.msra.mxu0 0
          %610 = vmatpush.bf16.xpose.msra.mxu0 0
          %611 = vmatpush.bf16.xpose.msra.mxu0 0
          %612 = vmatpush.bf16.xpose.msra.mxu0 0
          %613 = vmatpush.bf16.xpose.msra.mxu0 0
          %614 = vmatpush.bf16.xpose.msra.mxu0 0
          %615 = vmatpush.bf16.xpose.msra.mxu0 0
          %616 = vmatpush.bf16.xpose.msra.mxu0 %v607
          %617 = vmatmul.bf16.gmra.mxu0 %v604
          %v618 = vpop.f32.mrf.mxu0
          %v619 = vadd.f32 0.0, %v618
          %v620 = vpop.f32.mrf.mxu0
          %621 = vdwg.mxu0
          %v622 = vmul.f32 %v619, 0.35355338
          %v623 = vsel %vm602, %v622, -inf
          %624 = vmax.xlane.f32.xlu0 %v623
          %v625 = vpop.xlane.xlu0 %624
          %v626 = vsub.f32 %v622, %v625
          %v627 = vmul.f32 %v626, 1.442695
          %v628 = vpow.pop %v627
          %v629 = vsel %vm602, %v628, 0.0
          %630 = vadd.xlane.f32.xlu0 %v629
          %v631 = vpop.xlane.xlu0 %630
          %v632 = vrcp.pop %v631
          %v633 = vmul.f32 %v631, %v632
          %v634 = vsub.f32 1.0, %v633
          %v635 = vmul.f32 %v632, %v634
          %v636 = vadd.f32 %v632, %v635
          %vm637 = vweird.f32 %v631
          %vm638 = vweird.f32 %v632
          %vm639 = vmor %vm637, %vm638
          %v640 = vsel %vm639, %v632, %v636
          %v641 = vand.u32 2147483647, %v631
          %vm642 = vcmp.eq.f32.partialorder %v641, 8.507059e+37
          %v643 = vand.u32 %v631, 2147483648
          %v644 = vor.u32 1.1754944e-38, %v643
          %v645 = vsel %vm642, %v644, %v640
          %v646 = vmul.f32 %v628, %v645
          %v647 = vpack.c.bf16 %v646, %v646
          %v649 = vunpack.c.l.b16 %v601
          %v650 = vpack.c.b16 %v649, %v649
          %651 = vrot.lane.b32.xlu0 %v650, 96
          %v652 = vpop.permute.xlu0 %651
          %v654 = vsel %vm602, %v647, 0
          %vm656 = vcmask 1043456
          %v658 = vsel %vm656, %v652, 0
          %660 = vmatpush.bf16.msra.mxu0 0
          %661 = vmatpush.bf16.msra.mxu0 0
          %662 = vmatpush.bf16.msra.mxu0 0
          %663 = vmatpush.bf16.msra.mxu0 0
          %664 = vmatpush.bf16.msra.mxu0 0
          %665 = vmatpush.bf16.msra.mxu0 0
          %666 = vmatpush.bf16.msra.mxu0 0
          %667 = vmatpush.bf16.msra.mxu0 %v658
          %668 = vmatmul.bf16.gmra.mxu0 %v654
          %v669 = vpop.f32.mrf.mxu0
          %v670 = vadd.f32 0.0, %v669
          %v671 = vpop.f32.mrf.mxu0
          %672 = vdwg.mxu0
          %673 = vst.msk [vmem:[#allocation3] sm:$0xff] %vm602, %v670
          %v674 = vld [vmem:[#allocation2] sm:$0xf]
          %v676 = vunpack.c.l.b16 %v600
          %v677 = vpack.c.b16 %v676, %v676
          %678 = vrot.lane.b32.xlu0 %v677, 120
          %v679 = vpop.permute.xlu0 %678
          %v681 = vunpack.c.l.b16 %v674
          %v682 = vpack.c.b16 %v681, %v681
          %683 = vrot.lane.b32.xlu0 %v682, 120
          %v684 = vpop.permute.xlu0 %683
          %v686 = vsel %vm602, %v679, 0
          %v689 = vsel %vm602, %v684, 0
          %691 = vmatpush.bf16.xpose.msra.mxu0 0
          %692 = vmatpush.bf16.xpose.msra.mxu0 0
          %693 = vmatpush.bf16.xpose.msra.mxu0 0
          %694 = vmatpush.bf16.xpose.msra.mxu0 0
          %695 = vmatpush.bf16.xpose.msra.mxu0 0
          %696 = vmatpush.bf16.xpose.msra.mxu0 0
          %697 = vmatpush.bf16.xpose.msra.mxu0 0
          %698 = vmatpush.bf16.xpose.msra.mxu0 %v689
          %699 = vmatmul.bf16.gmra.mxu0 %v686
          %v700 = vpop.f32.mrf.mxu0
          %v701 = vadd.f32 0.0, %v700
          %v702 = vpop.f32.mrf.mxu0
          %703 = vdwg.mxu0
          %v704 = vmul.f32 %v701, 0.35355338
          %v705 = vsel %vm602, %v704, -inf
          %706 = vmax.xlane.f32.xlu0 %v705
          %v707 = vpop.xlane.xlu0 %706
          %v708 = vsub.f32 %v704, %v707
          %v709 = vmul.f32 %v708, 1.442695
          %v710 = vpow.pop %v709
          %v711 = vsel %vm602, %v710, 0.0
          %712 = vadd.xlane.f32.xlu0 %v711
          %v713 = vpop.xlane.xlu0 %712
          %v714 = vrcp.pop %v713
          %v715 = vmul.f32 %v713, %v714
          %v716 = vsub.f32 1.0, %v715
          %v717 = vmul.f32 %v714, %v716
          %v718 = vadd.f32 %v714, %v717
          %vm719 = vweird.f32 %v713
          %vm720 = vweird.f32 %v714
          %vm721 = vmor %vm719, %vm720
          %v722 = vsel %vm721, %v714, %v718
          %v723 = vand.u32 2147483647, %v713
          %vm724 = vcmp.eq.f32.partialorder %v723, 8.507059e+37
          %v725 = vand.u32 %v713, 2147483648
          %v726 = vor.u32 1.1754944e-38, %v725
          %v727 = vsel %vm724, %v726, %v722
          %v728 = vmul.f32 %v710, %v727
          %v729 = vpack.c.bf16 %v728, %v728
          %730 = vrot.lane.b32.xlu0 %v682, 88
          %v731 = vpop.permute.xlu0 %730
          %v733 = vsel %vm602, %v729, 0
          %v736 = vsel %vm656, %v731, 0
          %738 = vmatpush.bf16.msra.mxu0 0
          %739 = vmatpush.bf16.msra.mxu0 0
          %740 = vmatpush.bf16.msra.mxu0 0
          %741 = vmatpush.bf16.msra.mxu0 0
          %742 = vmatpush.bf16.msra.mxu0 0
          %743 = vmatpush.bf16.msra.mxu0 0
          %744 = vmatpush.bf16.msra.mxu0 0
          %745 = vmatpush.bf16.msra.mxu0 %v736
          %746 = vmatmul.bf16.gmra.mxu0 %v733
          %v747 = vpop.f32.mrf.mxu0
          %v748 = vadd.f32 0.0, %v747
          %v749 = vpop.f32.mrf.mxu0
          %750 = vdwg.mxu0
          %752 = vrot.lane.b32.xlu0 %v748, 8
          %v753 = vpop.permute.xlu0 %752
          %vm755 = vcmask 130112
          %756 = vst.msk [vmem:[#allocation3] sm:$0xff] %vm755, %v753
          %v757 = vld [vmem:[#allocation2] sm:$0xf]
          %758 = vrot.lane.b32.xlu0 %v677, 112
          %v759 = vpop.permute.xlu0 %758
          %v761 = vunpack.c.l.b16 %v757
          %v762 = vpack.c.b16 %v761, %v761
          %763 = vrot.lane.b32.xlu0 %v762, 112
          %v764 = vpop.permute.xlu0 %763
          %v766 = vsel %vm602, %v759, 0
          %v769 = vsel %vm602, %v764, 0
          %771 = vmatpush.bf16.xpose.msra.mxu0 0
          %772 = vmatpush.bf16.xpose.msra.mxu0 0
          %773 = vmatpush.bf16.xpose.msra.mxu0 0
          %774 = vmatpush.bf16.xpose.msra.mxu0 0
          %775 = vmatpush.bf16.xpose.msra.mxu0 0
          %776 = vmatpush.bf16.xpose.msra.mxu0 0
          %777 = vmatpush.bf16.xpose.msra.mxu0 0
          %778 = vmatpush.bf16.xpose.msra.mxu0 %v769
          %779 = vmatmul.bf16.gmra.mxu0 %v766
          %v780 = vpop.f32.mrf.mxu0
          %v781 = vadd.f32 0.0, %v780
          %v782 = vpop.f32.mrf.mxu0
          %783 = vdwg.mxu0
          %v784 = vmul.f32 %v781, 0.35355338
          %v785 = vsel %vm602, %v784, -inf
          %786 = vmax.xlane.f32.xlu0 %v785
          %v787 = vpop.xlane.xlu0 %786
          %v788 = vsub.f32 %v784, %v787
          %v789 = vmul.f32 %v788, 1.442695
          %v790 = vpow.pop %v789
          %v791 = vsel %vm602, %v790, 0.0
          %792 = vadd.xlane.f32.xlu0 %v791
          %v793 = vpop.xlane.xlu0 %792
          %v794 = vrcp.pop %v793
          %v795 = vmul.f32 %v793, %v794
          %v796 = vsub.f32 1.0, %v795
          %v797 = vmul.f32 %v794, %v796
          %v798 = vadd.f32 %v794, %v797
          %vm799 = vweird.f32 %v793
          %vm800 = vweird.f32 %v794
          %vm801 = vmor %vm799, %vm800
          %v802 = vsel %vm801, %v794, %v798
          %v803 = vand.u32 2147483647, %v793
          %vm804 = vcmp.eq.f32.partialorder %v803, 8.507059e+37
          %v805 = vand.u32 %v793, 2147483648
          %v806 = vor.u32 1.1754944e-38, %v805
          %v807 = vsel %vm804, %v806, %v802
          %v808 = vmul.f32 %v790, %v807
          %v809 = vpack.c.bf16 %v808, %v808
          %810 = vrot.lane.b32.xlu0 %v762, 80
          %v811 = vpop.permute.xlu0 %810
          %v813 = vsel %vm602, %v809, 0
          %v816 = vsel %vm656, %v811, 0
          %818 = vmatpush.bf16.msra.mxu0 0
          %819 = vmatpush.bf16.msra.mxu0 0
          %820 = vmatpush.bf16.msra.mxu0 0
          %821 = vmatpush.bf16.msra.mxu0 0
          %822 = vmatpush.bf16.msra.mxu0 0
          %823 = vmatpush.bf16.msra.mxu0 0
          %824 = vmatpush.bf16.msra.mxu0 0
          %825 = vmatpush.bf16.msra.mxu0 %v816
          %826 = vmatmul.bf16.gmra.mxu0 %v813
          %v827 = vpop.f32.mrf.mxu0
          %v828 = vadd.f32 0.0, %v827
          %v829 = vpop.f32.mrf.mxu0
          %830 = vdwg.mxu0
          %832 = vrot.lane.b32.xlu0 %v828, 16
          %v833 = vpop.permute.xlu0 %832
          %vm835 = vcmask 195712
          %836 = vst.msk [vmem:[#allocation3] sm:$0xff] %vm835, %v833
          %v837 = vld [vmem:[#allocation2] sm:$0xf]
          %838 = vrot.lane.b32.xlu0 %v677, 104
          %v839 = vpop.permute.xlu0 %838
          %v841 = vunpack.c.l.b16 %v837
          %v842 = vpack.c.b16 %v841, %v841
          %843 = vrot.lane.b32.xlu0 %v842, 104
          %v844 = vpop.permute.xlu0 %843
          %v846 = vsel %vm602, %v839, 0
          %v849 = vsel %vm602, %v844, 0
          %851 = vmatpush.bf16.xpose.msra.mxu0 0
          %852 = vmatpush.bf16.xpose.msra.mxu0 0
          %853 = vmatpush.bf16.xpose.msra.mxu0 0
          %854 = vmatpush.bf16.xpose.msra.mxu0 0
          %855 = vmatpush.bf16.xpose.msra.mxu0 0
          %856 = vmatpush.bf16.xpose.msra.mxu0 0
          %857 = vmatpush.bf16.xpose.msra.mxu0 0
          %858 = vmatpush.bf16.xpose.msra.mxu0 %v849
          %859 = vmatmul.bf16.gmra.mxu0 %v846
          %v860 = vpop.f32.mrf.mxu0
          %v861 = vadd.f32 0.0, %v860
          %v862 = vpop.f32.mrf.mxu0
          %863 = vdwg.mxu0
          %v864 = vmul.f32 %v861, 0.35355338
          %v865 = vsel %vm602, %v864, -inf
          %866 = vmax.xlane.f32.xlu0 %v865
          %v867 = vpop.xlane.xlu0 %866
          %v868 = vsub.f32 %v864, %v867
          %v869 = vmul.f32 %v868, 1.442695
          %v870 = vpow.pop %v869
          %v871 = vsel %vm602, %v870, 0.0
          %872 = vadd.xlane.f32.xlu0 %v871
          %v873 = vpop.xlane.xlu0 %872
          %v874 = vrcp.pop %v873
          %v875 = vmul.f32 %v873, %v874
          %v876 = vsub.f32 1.0, %v875
          %v877 = vmul.f32 %v874, %v876
          %v878 = vadd.f32 %v874, %v877
          %vm879 = vweird.f32 %v873
          %vm880 = vweird.f32 %v874
          %vm881 = vmor %vm879, %vm880
          %v882 = vsel %vm881, %v874, %v878
          %v883 = vand.u32 2147483647, %v873
          %vm884 = vcmp.eq.f32.partialorder %v883, 8.507059e+37
          %v885 = vand.u32 %v873, 2147483648
          %v886 = vor.u32 1.1754944e-38, %v885
          %v887 = vsel %vm884, %v886, %v882
          %v888 = vmul.f32 %v870, %v887
          %v889 = vpack.c.bf16 %v888, %v888
          %890 = vrot.lane.b32.xlu0 %v842, 72
          %v891 = vpop.permute.xlu0 %890
          %v893 = vsel %vm602, %v889, 0
          %v896 = vsel %vm656, %v891, 0
          %898 = vmatpush.bf16.msra.mxu0 0
          %899 = vmatpush.bf16.msra.mxu0 0
          %900 = vmatpush.bf16.msra.mxu0 0
          %901 = vmatpush.bf16.msra.mxu0 0
          %902 = vmatpush.bf16.msra.mxu0 0
          %903 = vmatpush.bf16.msra.mxu0 0
          %904 = vmatpush.bf16.msra.mxu0 0
          %905 = vmatpush.bf16.msra.mxu0 %v896
          %906 = vmatmul.bf16.gmra.mxu0 %v893
          %v907 = vpop.f32.mrf.mxu0
          %v908 = vadd.f32 0.0, %v907
          %v909 = vpop.f32.mrf.mxu0
          %910 = vdwg.mxu0
          %912 = vrot.lane.b32.xlu0 %v908, 24
          %v913 = vpop.permute.xlu0 %912
          %vm915 = vcmask 261312
          %916 = vst.msk [vmem:[#allocation3] sm:$0xff] %vm915, %v913
          %v917 = vld [vmem:[#allocation3] sm:$0xff]
          %v918 = vpack.c.bf16 %v917, %v917
          %v919 = vld [vmem:[#allocation10] sm:$0xf]
          %v920 = vld [vmem:[#allocation10 + $0x4] sm:$0xf]
          %v921 = vld [vmem:[#allocation10 + $0x8] sm:$0xf]
          %v922 = vld [vmem:[#allocation10 + $0xc] sm:$0xf]
          %v923 = vld [vmem:[#allocation12 + $0x1] sm:$0x1]
          %v924 = vperm.slane %v923, 0
          %v929 = vunpack.c.l.b16 %v919
          %v930 = vunpack.c.l.b16 %v920
          %v931 = vunpack.c.l.b16 %v921
          %v932 = vunpack.c.l.b16 %v922
          %v933 = vpack.c.b16 %v930, %v929
          %v934 = vpack.c.b16 %v932, %v931
          %v938 = vsel %vm583, %v918, 0
          %940 = vmatpush.bf16.msra.mxu0 0
          %941 = vmatpush.bf16.msra.mxu0 0
          %942 = vmatpush.bf16.msra.mxu0 0
          %943 = vmatpush.bf16.msra.mxu0 0
          %944 = vmatpush.bf16.msra.mxu0 0
          %945 = vmatpush.bf16.msra.mxu0 0
          %946 = vmatpush.bf16.msra.mxu0 %v934
          %947 = vmatpush.bf16.msra.mxu0 %v933
          %948 = vmatmul.bf16.gmra.mxu0 %v938
          %v949 = vpop.f32.mrf.mxu0
          %v950 = vadd.f32 %v924, %v949
          %v951 = vpop.f32.mrf.mxu0
          %952 = vdwg.mxu0
          %v953 = vadd.f32 %v563, %v950
          %v954 = vld [vmem:[#allocation12 + $0x2] sm:$0x1]
          %v955 = vld [vmem:[#allocation12 + $0x3] sm:$0x1]
          %v956 = vsel %vm583, %v953, 0.0
          %957 = vadd.xlane.f32.xlu0 %v956
          %v958 = vpop.xlane.xlu0 %957
          %v959 = vrcp.pop 32.0
          %v960 = vmul.f32 32.0, %v959
          %v961 = vsub.f32 1.0, %v960
          %v962 = vmul.f32 %v959, %v961
          %v963 = vadd.f32 %v959, %v962
          %vm964 = vweird.f32 %v959
          %v965 = vsel %vm964, %v959, %v963
          %v966 = vmul.f32 %v958, %v965
          %v967 = vsub.f32 %v953, %v966
          %v968 = vmul.f32 %v967, %v967
          %v969 = vsel %vm583, %v968, 0.0
          %970 = vadd.xlane.f32.xlu0 %v969
          %v971 = vpop.xlane.xlu0 %970
          %v972 = vmul.f32 %v971, %v965
          %v973 = vadd.f32 %v972, 1e-05
          %v974 = vrsqrt.pop %v973
          %v975 = vmul.f32 %v974, %v973
          %v976 = vmul.f32 %v975, %v974
          %v977 = vmul.f32 0.5, %v976
          %v978 = vsub.f32 1.5, %v977
          %v979 = vmul.f32 %v974, %v978
          %vm980 = vweird.f32 %v973
          %vm981 = vweird.f32 %v974
          %vm982 = vmor %vm980, %vm981
          %v983 = vsel %vm982, %v974, %v979
          %v984 = vmul.f32 %v967, %v983
          %v985 = vperm.slane %v954, 0
          %v986 = vmul.f32 %v984, %v985
          %v987 = vperm.slane %v955, 0
          %v988 = vadd.f32 %v986, %v987
          %989 = vst.msk [vmem:[#allocation4] sm:$0xff] %vm583, %v988
          %v990 = vpack.c.bf16 %v988, %v988
          %vm991 = vcmask 257024
          %992 = vst.msk [vmem:[#allocation5] sm:$0xf] %vm991, %v990
          %993 = vst.msk [vmem:[#allocation6] sm:$0xff] %vm583, 0.0
        $region80: #{tpu_custom_call.1} parent=59 // pred_fallthru
          _
        %v994 = vld [vmem:[#allocation5] sm:$0xf]
        %v995 = vld [vmem:[#allocation13] sm:$0xf]
        %v996 = vld [vmem:[#allocation13 + $0x4] sm:$0xf]
        %v997 = vld [vmem:[#allocation13 + $0x8] sm:$0xf]
        %v998 = vld [vmem:[#allocation13 + $0xc] sm:$0xf]
        %v999 = vld [vmem:[%s505] sm:$0x1]
        %v1001 = vperm.slane %v999, 0
        %v1007 = vunpack.c.l.b16 %v995
        %v1008 = vunpack.c.l.b16 %v996
        %v1009 = vunpack.c.l.b16 %v997
        %v1010 = vunpack.c.l.b16 %v998
        %v1011 = vpack.c.b16 %v1008, %v1007
        %v1012 = vpack.c.b16 %v1010, %v1009
        %vm1015 = vcmask 261120
        %v1017 = vsel %vm1015, %v994, 0
        %1019 = vmatpush.bf16.msra.mxu0 0
        %1020 = vmatpush.bf16.msra.mxu0 0
        %1021 = vmatpush.bf16.msra.mxu0 0
        %1022 = vmatpush.bf16.msra.mxu0 0
        %1023 = vmatpush.bf16.msra.mxu0 0
        %1024 = vmatpush.bf16.msra.mxu0 0
        %1025 = vmatpush.bf16.msra.mxu0 %v1012
        %1026 = vmatpush.bf16.msra.mxu0 %v1011
        %1027 = vmatmul.bf16.gmra.mxu0 %v1017
        %v1028 = vpop.f32.mrf.mxu0
        %v1029 = vadd.f32 %v1001, %v1028
        %v1030 = vpop.f32.mrf.mxu0
        %1031 = vdwg.mxu0
        %v1032 = vmax.f32 %v1029, 0.0
        %v1033 = vld [vmem:[#allocation6] sm:$0xff]
        %v1034 = vpack.c.bf16 %v1032, %v1032
        %v1035 = vld [vmem:[%s510] sm:$0xf]
        %v1036 = vld [vmem:[%s510 + $0x4] sm:$0xf]
        %v1037 = vld [vmem:[%s510 + $0x8] sm:$0xf]
        %v1038 = vld [vmem:[%s510 + $0xc] sm:$0xf]
        %v1039 = vld [vmem:[%s510 + $0x10] sm:$0xf]
        %v1040 = vld [vmem:[%s510 + $0x14] sm:$0xf]
        %v1041 = vld [vmem:[%s510 + $0x18] sm:$0xf]
        %v1042 = vld [vmem:[%s510 + $0x1c] sm:$0xf]
        %v1051 = vunpack.c.l.b16 %v1035
        %v1052 = vunpack.c.l.b16 %v1036
        %v1053 = vunpack.c.l.b16 %v1037
        %v1054 = vunpack.c.l.b16 %v1038
        %v1055 = vunpack.c.l.b16 %v1039
        %v1056 = vunpack.c.l.b16 %v1040
        %v1057 = vunpack.c.l.b16 %v1041
        %v1058 = vunpack.c.l.b16 %v1042
        %v1059 = vpack.c.b16 %v1052, %v1051
        %v1060 = vpack.c.b16 %v1054, %v1053
        %v1061 = vpack.c.b16 %v1056, %v1055
        %v1062 = vpack.c.b16 %v1058, %v1057
        %vm1067 = vcmask 523264
        %v1069 = vsel %vm1067, %v1034, 0
        %1071 = vmatpush.bf16.msra.mxu0 0
        %1072 = vmatpush.bf16.msra.mxu0 0
        %1073 = vmatpush.bf16.msra.mxu0 0
        %1074 = vmatpush.bf16.msra.mxu0 0
        %1075 = vmatpush.bf16.msra.mxu0 %v1062
        %1076 = vmatpush.bf16.msra.mxu0 %v1061
        %1077 = vmatpush.bf16.msra.mxu0 %v1060
        %1078 = vmatpush.bf16.msra.mxu0 %v1059
        %1079 = vmatmul.bf16.gmra.mxu0 %v1069
        %v1080 = vpop.f32.mrf.mxu0
        %v1081 = vadd.f32 0.0, %v1080
        %v1082 = vpop.f32.mrf.mxu0
        %1083 = vdwg.mxu0
        %v1084 = vadd.f32 %v1033, %v1081
        %1085 = vst.msk [vmem:[#allocation6] sm:$0xff] %vm1015, %v1084
        // Predicated region
        $region85: #{tpu_custom_call.1} parent=59 // pred_check
          %p1086 = pneg %p513
        $region86: #{tpu_custom_call.1} parent=59 // pred_check_branch
          %1088 = sbr.rel (%p1086) target = $region88
        $region87: #{tpu_custom_call.1} parent=59 // pred_region
          %v1089 = vld [vmem:[#allocation4] sm:$0xff]
          %v1090 = vld [vmem:[#allocation6] sm:$0xff]
          %v1091 = vadd.f32 %v1089, %v1090
          %v1092 = vld [vmem:[#allocation12 + $0x4] sm:$0x1]
          %v1093 = vperm.slane %v1092, 0
          %v1094 = vadd.f32 %v1091, %v1093
          %v1095 = vld [vmem:[#allocation12 + $0x5] sm:$0x1]
          %v1096 = vld [vmem:[#allocation12 + $0x6] sm:$0x1]
          %v1097 = vsel %vm1015, %v1094, 0.0
          %1098 = vadd.xlane.f32.xlu0 %v1097
          %v1099 = vpop.xlane.xlu0 %1098
          %v1100 = vrcp.pop 32.0
          %v1101 = vmul.f32 32.0, %v1100
          %v1102 = vsub.f32 1.0, %v1101
          %v1103 = vmul.f32 %v1100, %v1102
          %v1104 = vadd.f32 %v1100, %v1103
          %vm1105 = vweird.f32 %v1100
          %v1106 = vsel %vm1105, %v1100, %v1104
          %v1107 = vmul.f32 %v1099, %v1106
          %v1108 = vsub.f32 %v1094, %v1107
          %v1109 = vmul.f32 %v1108, %v1108
          %v1110 = vsel %vm1015, %v1109, 0.0
          %1111 = vadd.xlane.f32.xlu0 %v1110
          %v1112 = vpop.xlane.xlu0 %1111
          %v1113 = vmul.f32 %v1112, %v1106
          %v1114 = vadd.f32 %v1113, 1e-05
          %v1115 = vrsqrt.pop %v1114
          %v1116 = vmul.f32 %v1115, %v1114
          %v1117 = vmul.f32 %v1116, %v1115
          %v1118 = vmul.f32 0.5, %v1117
          %v1119 = vsub.f32 1.5, %v1118
          %v1120 = vmul.f32 %v1115, %v1119
          %vm1121 = vweird.f32 %v1114
          %vm1122 = vweird.f32 %v1115
          %vm1123 = vmor %vm1121, %vm1122
          %v1124 = vsel %vm1123, %v1115, %v1120
          %v1125 = vmul.f32 %v1108, %v1124
          %v1126 = vperm.slane %v1095, 0
          %v1127 = vmul.f32 %v1125, %v1126
          %v1128 = vperm.slane %v1096, 0
          %v1129 = vadd.f32 %v1127, %v1128
          %1130 = vst.msk [vmem:[%s491] sm:$0xff] %vm1015, %v1129
        $region88: #{tpu_custom_call.1} parent=59 // pred_fallthru
          _
        %s1131 = sand.u32 %s293, 1
        %s1132 = scalar_lea.sflag [#allocation9], %s1131
        %s1133 = sand.u32 %s293, 1
        %s1134 = smul.addr %s1133, 8
        %s1135 = scalar_lea.vmem [#allocation15], %s1134
        // Predicated region
        $region89: #{tpu_custom_call.1} parent=59 // pred_check
          %p1136 = pneg %p303
        $region90: #{tpu_custom_call.1} parent=59 // pred_check_branch
          %1138 = sbr.rel (%p1136) target = $region92
        $region91: #{tpu_custom_call.1} parent=59 // pred_region
          %1140 = vsyncadd %s1132, 0
          %s1141 = sadd.s32 %s33, %s32
          %s1142 = smul.addr %s1141, 8
          %s1143 = scalar_lea.hbm %s10, %s1142
          %s1145 = sshll.u32 %s1135, 4
          %s1146 = int_to_ptr.vmem [resolvable:$true] %s1145
          %s1147 = sshll.u32 %s1143, 4
          %s1148 = int_to_ptr.hbm [resolvable:$true] %s1147
          %1150 = dma.vmem_to_hbm [thread:$0]  %s1146, 128, %s1148, %s1132
        $region92: #{tpu_custom_call.1} parent=59 // pred_fallthru
          _
      $region60: #{tpu_custom_call.1} parent=5 // pred_fallthru
        _
      %p1151 = scmp.le.s32.totalorder 2, %s22
      // Predicated region
      $region93: #{tpu_custom_call.1} parent=5 // pred_check
        %p1152 = pneg %p1151
      $region94: #{tpu_custom_call.1} parent=5 // pred_check_branch
        %1154 = sbr.rel (%p1152) target = $region96
      $region95: #{tpu_custom_call.1} parent=5 // pred_region
        %s1155 = ssub.s32 %s22, 2
        // Predicated region
        $region97: #{tpu_custom_call.1} parent=95 // pred_check
          %p1156 = pneg %p309
        $region98: #{tpu_custom_call.1} parent=95 // pred_check_branch
          %1158 = sbr.rel (%p1156) target = $region100
        $region99: #{tpu_custom_call.1} parent=95 // pred_region
          %s1159 = sand.u32 %s294, 1
          %s1160 = scalar_lea.sflag [#allocation9], %s1159
          %s1161 = sand.u32 %s294, 1
          %s1162 = smul.addr %s1161, 8
          %s1163 = scalar_lea.vmem [#allocation15], %s1162
          %1165 = dma.done %s1160, 128
        $region100: #{tpu_custom_call.1} parent=95 // pred_fallthru
          _
      $region96: #{tpu_custom_call.1} parent=5 // pred_fallthru
        _
    $region6: #{tpu_custom_call.1} parent=1 // loop_footer
      %s26 = sadd.s32 1, %s22
    $region7: #{tpu_custom_call.1} parent=1 // loop_footer_branch
      %21 = sbr.rel target = $region3
    $region8: #{tpu_custom_call.1} parent=1 // loop_exit
      _
    %1166 = vsyncpa [#allocation8], 1
    %s1167 = scalar_lea.sflag [#allocation8], 1
    %1168 = vsyncpa %s1167, 1
    %1169 = vsyncpa [#allocation11], 1
    %1170 = vsyncpa [#allocation14], 1
    %1171 = vsyncpa [#allocation9], 1
    %s1172 = scalar_lea.sflag [#allocation9], 1
    %1173 = vsyncpa %s1172, 1

// kernel: tpu_custom_call.1
$region0: #{tpu_custom_call.1}
  #allocation0 [shape = 'u32[]', space=smem, size = 0x4, offset = 0x4, fixed_abs, tag = 'smem constant byte address 0x4 - core index']
  #allocation1 [shape = 'u32[72,128]{1,0:T(1,128)}', space=vmem, size = 0x9000, scoped, tag = 'internal scratch']
  #allocation2 [shape = 'bf16[8,64]{1,0:T(8,128)(2,1)}', space=vmem, size = 0x800, scoped, tag = 'scratch operand']
  #allocation3 [shape = 'f32[8,32]{1,0:T(8,128)}', space=vmem, size = 0x1000, scoped, tag = 'scratch operand']
  #allocation4 [shape = 'f32[8,32]{1,0:T(8,128)}', space=vmem, size = 0x1000, scoped, tag = 'scratch operand']
  #allocation5 [shape = 'bf16[8,32]{1,0:T(8,128)(2,1)}', space=vmem, size = 0x800, scoped, tag = 'scratch operand']
  #allocation6 [shape = 'f32[8,32]{1,0:T(8,128)}', space=vmem, size = 0x1000, scoped, tag = 'scratch operand']
  %s0 = inlined_call_operand.vmem [shape: f32[2,8,32], index: 0, kind: input, shape index: {}]
  %s1 = inlined_call_operand.vmem [shape: f32[2,8,32], index: 1, kind: input, shape index: {}]
  %s2 = inlined_call_operand.vmem [shape: bf16[32,32], index: 2, kind: input, shape index: {}]
  %s3 = inlined_call_operand.hbm [shape: bf16[32,64], index: 3, kind: input, shape index: {}]
  %s4 = inlined_call_operand.vmem [shape: f32[1,64], index: 4, kind: input, shape index: {}]
  %s5 = inlined_call_operand.hbm [shape: bf16[32,32], index: 5, kind: input, shape index: {}]
  %s6 = inlined_call_operand.hbm [shape: f32[8,32], index: 6, kind: input, shape index: {}]
  %s7 = inlined_call_operand.hbm [shape: bf16[32,64], index: 7, kind: input, shape index: {}]
  %s8 = inlined_call_operand.vmem [shape: f32[1,64], index: 8, kind: input, shape index: {}]
  %s9 = inlined_call_operand.vmem [shape: bf16[64,32], index: 9, kind: input, shape index: {}]
  %s10 = inlined_call_operand.hbm [shape: f32[2,8,32], index: 10, kind: output, shape index: {}]
  %s11 = sld [smem:[#allocation0]]
  $region101: #{tpu_custom_call.1} parent=0
    _
  %s13 = ssub.s32 1, %s11
  %s14 = scalar_select 0, %s13, %s11
  $region1: #{tpu_custom_call.1} parent=0
    #allocation7 [shape = 'u8[8192]{0}', space=vmem, size = 0x2000, scoped, tag = 'input window, operand 3, single buffered']
    #allocation8 [shape = 's32[2]{0}', space=sflag, size = 0x8, scoped, tag = 'scoped memory for tpu_custom_call.1']
    #allocation9 [shape = 's32[2]{0}', space=sflag, size = 0x8, scoped, tag = 'scoped memory for tpu_custom_call.1']
    #allocation10 [shape = 'u8[8192]{0}', space=vmem, size = 0x2000, scoped, tag = 'input window, operand 5, single buffered']
    #allocation11 [shape = 's32[1]{0}', space=sflag, size = 0x4, scoped, tag = 'scoped memory for tpu_custom_call.1']
    #allocation12 [shape = 'u8[4096]{0}', space=vmem, size = 0x1000, scoped, tag = 'input window, operand 6, single buffered']
    #allocation13 [shape = 'u8[8192]{0}', space=vmem, size = 0x2000, scoped, tag = 'input window, operand 7, single buffered']
    #allocation14 [shape = 's32[1]{0}', space=sflag, size = 0x4, scoped, tag = 'scoped memory for tpu_custom_call.1']
    #allocation15 [shape = 'u8[8192]{0}', space=vmem, size = 0x2000, scoped, tag = 'output window, operand 0']
    %15 = vsyncpa [#allocation8], 0
    %16 = vsyncpa [#allocation11], 0
    %17 = vsyncpa [#allocation14], 0
    %18 = vsyncpa [#allocation9], 0
    %s19 = scalar_lea.sflag [#allocation9], 1
    %20 = vsyncpa %s19, 0
    loop: start=0, step=1, limit=4
    $region2: #{tpu_custom_call.1} parent=1 // loop_pre_header
      _
    $region3: #{tpu_custom_call.1} parent=1 // loop_header
      %s22 = sphi 0, %s26
      %p23 = scmp.ge.s32.totalorder %s22, 4
      %s29 = sphi 0, %s48
      %s30 = sphi 0, %s44
      %s31 = sphi 0, %s40
      %s32 = sphi 0, %s29
      %s33 = sphi 0, %s30
      %s34 = sphi 0, %s31
      %s35 = sphi 0, %s32
      %s36 = sphi 0, %s33
      %s37 = sphi 0, %s34
      %s53 = sphi 0, %s55
      %s56 = sphi 0, %s53
      %s57 = sphi 0, %s56
      %s73 = sphi 0, %s57
      %s79 = sphi 0, %s81
      %s82 = sphi 0, %s79
      %s83 = sphi 0, %s82
      %s99 = sphi 0, %s83
      %s103 = sphi 0, %s103
      %s105 = sphi 0, %s103
      %s106 = sphi 0, %s105
      %s120 = sphi 0, %s106
      %s124 = sphi 0, %s124
      %s126 = sphi 0, %s124
      %s127 = sphi 0, %s126
      %s141 = sphi 0, %s127
      %s145 = sphi 0, %s145
      %s147 = sphi 0, %s145
      %s148 = sphi 0, %s147
      %s162 = sphi 0, %s148
      %s166 = sphi 0, %s166
      %s168 = sphi 0, %s166
      %s169 = sphi 0, %s168
      %s183 = sphi 0, %s169
      %s187 = sphi 0, %s187
      %s189 = sphi 0, %s187
      %s190 = sphi 0, %s189
      %s204 = sphi 0, %s190
      %s210 = sphi 0, %s212
      %s213 = sphi 0, %s210
      %s214 = sphi 0, %s213
      %s230 = sphi 0, %s214
      %s236 = sphi 0, %s238
      %s239 = sphi 0, %s236
      %s240 = sphi 0, %s239
      %s256 = sphi 0, %s240
      %s262 = sphi 0, %s264
      %s265 = sphi 0, %s262
      %s266 = sphi 0, %s265
      %s282 = sphi 0, %s266
      %s290 = sphi 0, %s292
      %s293 = sphi 0, %s290
      %s294 = sphi 0, %s293
      %s310 = sphi 0, %s294
    $region4: #{tpu_custom_call.1} parent=1 // loop_header_branch
      %25 = sbr.rel (%p23) target = $region8
    $region5: #{tpu_custom_call.1} parent=1 // loop_body
      %s27 = ssub.s32 %s22, 1
      %s28 = ssub.s32 %s22, 2
      %s38 = sadd.s32 1, %s31
      %p39 = scmp.ge.s32.totalorder %s38, 1
      %s40 = scalar_select %p39, 0, %s38
      %s41 = sadd.s32 1, %s30
      %s42 = scalar_select %p39, %s41, %s30
      %p43 = scmp.ge.s32.totalorder %s42, 1
      %s44 = scalar_select %p43, 0, %s42
      %s45 = sadd.s32 1, %s29
      %s46 = scalar_select %p43, %s45, %s29
      %p47 = scmp.ge.s32.totalorder %s46, 2
      %s48 = scalar_select %p47, 0, %s46
      %s49 = ssub.s32 %s29, %s48
      %s50 = ssub.s32 %s30, %s44
      %s51 = sor.u32 %s49, %s50
      %p52 = scmp.eq.s32.totalorder %s51, 0
      %s54 = sadd.s32 %s53, 1
      %s55 = scalar_select %p52, %s53, %s54
      %p58 = pneg %p52
      %p59 = scmp.eq.s32.totalorder %s22, 1
      %p60 = por %p58, %p59
      %p61 = scmp.ne.s32.totalorder %s53, %s56
      %p62 = scmp.eq.s32.totalorder %s22, 0
      %p63 = por %p61, %p62
      %p64 = scmp.ne.s32.totalorder %s53, %s56
      %p65 = scmp.eq.s32.totalorder %s27, 1
      %p66 = por %p64, %p65
      %p67 = scmp.ne.s32.totalorder %s56, %s57
      %p68 = scmp.eq.s32.totalorder %s27, 0
      %p69 = por %p67, %p68
      %p70 = scmp.ne.s32.totalorder %s56, %s57
      %p71 = scmp.eq.s32.totalorder %s28, 1
      %p72 = por %p70, %p71
      %p74 = scmp.ne.s32.totalorder %s57, %s73
      %p75 = scmp.eq.s32.totalorder %s28, 0
      %p76 = por %p74, %p75
      %s77 = ssub.s32 %s29, %s48
      %p78 = scmp.eq.s32.totalorder %s77, 0
      %s80 = sadd.s32 %s79, 1
      %s81 = scalar_select %p78, %s79, %s80
      %p84 = pneg %p78
      %p85 = scmp.eq.s32.totalorder %s22, 1
      %p86 = por %p84, %p85
      %p87 = scmp.ne.s32.totalorder %s79, %s82
      %p88 = scmp.eq.s32.totalorder %s22, 0
      %p89 = por %p87, %p88
      %p90 = scmp.ne.s32.totalorder %s79, %s82
      %p91 = scmp.eq.s32.totalorder %s27, 1
      %p92 = por %p90, %p91
      %p93 = scmp.ne.s32.totalorder %s82, %s83
      %p94 = scmp.eq.s32.totalorder %s27, 0
      %p95 = por %p93, %p94
      %p96 = scmp.ne.s32.totalorder %s82, %s83
      %p97 = scmp.eq.s32.totalorder %s28, 1
      %p98 = por %p96, %p97
      %p100 = scmp.ne.s32.totalorder %s83, %s99
      %p101 = scmp.eq.s32.totalorder %s28, 0
      %p102 = por %p100, %p101
      %s104 = sadd.s32 %s103, 1
      %p107 = scmp.eq.s32.totalorder %s22, 1
      %p108 = scmp.ne.s32.totalorder %s103, %s105
      %p109 = scmp.eq.s32.totalorder %s22, 0
      %p110 = por %p108, %p109
      %p111 = scmp.ne.s32.totalorder %s103, %s105
      %p112 = scmp.eq.s32.totalorder %s27, 1
      %p113 = por %p111, %p112
      %p114 = scmp.ne.s32.totalorder %s105, %s106
      %p115 = scmp.eq.s32.totalorder %s27, 0
      %p116 = por %p114, %p115
      %p117 = scmp.ne.s32.totalorder %s105, %s106
      %p118 = scmp.eq.s32.totalorder %s28, 1
      %p119 = por %p117, %p118
      %p121 = scmp.ne.s32.totalorder %s106, %s120
      %p122 = scmp.eq.s32.totalorder %s28, 0
      %p123 = por %p121, %p122
      %s125 = sadd.s32 %s124, 1
      %p128 = scmp.eq.s32.totalorder %s22, 1
      %p129 = scmp.ne.s32.totalorder %s124, %s126
      %p130 = scmp.eq.s32.totalorder %s22, 0
      %p131 = por %p129, %p130
      %p132 = scmp.ne.s32.totalorder %s124, %s126
      %p133 = scmp.eq.s32.totalorder %s27, 1
      %p134 = por %p132, %p133
      %p135 = scmp.ne.s32.totalorder %s126, %s127
      %p136 = scmp.eq.s32.totalorder %s27, 0
      %p137 = por %p135, %p136
      %p138 = scmp.ne.s32.totalorder %s126, %s127
      %p139 = scmp.eq.s32.totalorder %s28, 1
      %p140 = por %p138, %p139
      %p142 = scmp.ne.s32.totalorder %s127, %s141
      %p143 = scmp.eq.s32.totalorder %s28, 0
      %p144 = por %p142, %p143
      %s146 = sadd.s32 %s145, 1
      %p149 = scmp.eq.s32.totalorder %s22, 1
      %p150 = scmp.ne.s32.totalorder %s145, %s147
      %p151 = scmp.eq.s32.totalorder %s22, 0
      %p152 = por %p150, %p151
      %p153 = scmp.ne.s32.totalorder %s145, %s147
      %p154 = scmp.eq.s32.totalorder %s27, 1
      %p155 = por %p153, %p154
      %p156 = scmp.ne.s32.totalorder %s147, %s148
      %p157 = scmp.eq.s32.totalorder %s27, 0
      %p158 = por %p156, %p157
      %p159 = scmp.ne.s32.totalorder %s147, %s148
      %p160 = scmp.eq.s32.totalorder %s28, 1
      %p161 = por %p159, %p160
      %p163 = scmp.ne.s32.totalorder %s148, %s162
      %p164 = scmp.eq.s32.totalorder %s28, 0
      %p165 = por %p163, %p164
      %s167 = sadd.s32 %s166, 1
      %p170 = scmp.eq.s32.totalorder %s22, 1
      %p171 = scmp.ne.s32.totalorder %s166, %s168
      %p172 = scmp.eq.s32.totalorder %s22, 0
      %p173 = por %p171, %p172
      %p174 = scmp.ne.s32.totalorder %s166, %s168
      %p175 = scmp.eq.s32.totalorder %s27, 1
      %p176 = por %p174, %p175
      %p177 = scmp.ne.s32.totalorder %s168, %s169
      %p178 = scmp.eq.s32.totalorder %s27, 0
      %p179 = por %p177, %p178
      %p180 = scmp.ne.s32.totalorder %s168, %s169
      %p181 = scmp.eq.s32.totalorder %s28, 1
      %p182 = por %p180, %p181
      %p184 = scmp.ne.s32.totalorder %s169, %s183
      %p185 = scmp.eq.s32.totalorder %s28, 0
      %p186 = por %p184, %p185
      %s188 = sadd.s32 %s187, 1
      %p191 = scmp.eq.s32.totalorder %s22, 1
      %p192 = scmp.ne.s32.totalorder %s187, %s189
      %p193 = scmp.eq.s32.totalorder %s22, 0
      %p194 = por %p192, %p193
      %p195 = scmp.ne.s32.totalorder %s187, %s189
      %p196 = scmp.eq.s32.totalorder %s27, 1
      %p197 = por %p195, %p196
      %p198 = scmp.ne.s32.totalorder %s189, %s190
      %p199 = scmp.eq.s32.totalorder %s27, 0
      %p200 = por %p198, %p199
      %p201 = scmp.ne.s32.totalorder %s189, %s190
      %p202 = scmp.eq.s32.totalorder %s28, 1
      %p203 = por %p201, %p202
      %p205 = scmp.ne.s32.totalorder %s190, %s204
      %p206 = scmp.eq.s32.totalorder %s28, 0
      %p207 = por %p205, %p206
      %s208 = ssub.s32 %s31, %s40
      %p209 = scmp.eq.s32.totalorder %s208, 0
      %s211 = sadd.s32 %s210, 1
      %s212 = scalar_select %p209, %s210, %s211
      %p215 = pneg %p209
      %p216 = scmp.eq.s32.totalorder %s22, 1
      %p217 = por %p215, %p216
      %p218 = scmp.ne.s32.totalorder %s210, %s213
      %p219 = scmp.eq.s32.totalorder %s22, 0
      %p220 = por %p218, %p219
      %p221 = scmp.ne.s32.totalorder %s210, %s213
      %p222 = scmp.eq.s32.totalorder %s27, 1
      %p223 = por %p221, %p222
      %p224 = scmp.ne.s32.totalorder %s213, %s214
      %p225 = scmp.eq.s32.totalorder %s27, 0
      %p226 = por %p224, %p225
      %p227 = scmp.ne.s32.totalorder %s213, %s214
      %p228 = scmp.eq.s32.totalorder %s28, 1
      %p229 = por %p227, %p228
      %p231 = scmp.ne.s32.totalorder %s214, %s230
      %p232 = scmp.eq.s32.totalorder %s28, 0
      %p233 = por %p231, %p232
      %s234 = ssub.s32 %s31, %s40
      %p235 = scmp.eq.s32.totalorder %s234, 0
      %s237 = sadd.s32 %s236, 1
      %s238 = scalar_select %p235, %s236, %s237
      %p241 = pneg %p235
      %p242 = scmp.eq.s32.totalorder %s22, 1
      %p243 = por %p241, %p242
      %p244 = scmp.ne.s32.totalorder %s236, %s239
      %p245 = scmp.eq.s32.totalorder %s22, 0
      %p246 = por %p244, %p245
      %p247 = scmp.ne.s32.totalorder %s236, %s239
      %p248 = scmp.eq.s32.totalorder %s27, 1
      %p249 = por %p247, %p248
      %p250 = scmp.ne.s32.totalorder %s239, %s240
      %p251 = scmp.eq.s32.totalorder %s27, 0
      %p252 = por %p250, %p251
      %p253 = scmp.ne.s32.totalorder %s239, %s240
      %p254 = scmp.eq.s32.totalorder %s28, 1
      %p255 = por %p253, %p254
      %p257 = scmp.ne.s32.totalorder %s240, %s256
      %p258 = scmp.eq.s32.totalorder %s28, 0
      %p259 = por %p257, %p258
      %s260 = ssub.s32 %s31, %s40
      %p261 = scmp.eq.s32.totalorder %s260, 0
      %s263 = sadd.s32 %s262, 1
      %s264 = scalar_select %p261, %s262, %s263
      %p267 = pneg %p261
      %p268 = scmp.eq.s32.totalorder %s22, 1
      %p269 = por %p267, %p268
      %p270 = scmp.ne.s32.totalorder %s262, %s265
      %p271 = scmp.eq.s32.totalorder %s22, 0
      %p272 = por %p270, %p271
      %p273 = scmp.ne.s32.totalorder %s262, %s265
      %p274 = scmp.eq.s32.totalorder %s27, 1
      %p275 = por %p273, %p274
      %p276 = scmp.ne.s32.totalorder %s265, %s266
      %p277 = scmp.eq.s32.totalorder %s27, 0
      %p278 = por %p276, %p277
      %p279 = scmp.ne.s32.totalorder %s265, %s266
      %p280 = scmp.eq.s32.totalorder %s28, 1
      %p281 = por %p279, %p280
      %p283 = scmp.ne.s32.totalorder %s266, %s282
      %p284 = scmp.eq.s32.totalorder %s28, 0
      %p285 = por %p283, %p284
      %s286 = ssub.s32 %s29, %s48
      %s287 = ssub.s32 %s30, %s44
      %s288 = sor.u32 %s286, %s287
      %p289 = scmp.eq.s32.totalorder %s288, 0
      %s291 = sadd.s32 %s290, 1
      %s292 = scalar_select %p289, %s290, %s291
      %p295 = pneg %p289
      %p296 = scmp.eq.s32.totalorder %s22, 1
      %p297 = por %p295, %p296
      %p298 = scmp.ne.s32.totalorder %s290, %s293
      %p299 = scmp.eq.s32.totalorder %s22, 0
      %p300 = por %p298, %p299
      %p301 = scmp.ne.s32.totalorder %s290, %s293
      %p302 = scmp.eq.s32.totalorder %s27, 1
      %p303 = por %p301, %p302
      %p304 = scmp.ne.s32.totalorder %s293, %s294
      %p305 = scmp.eq.s32.totalorder %s27, 0
      %p306 = por %p304, %p305
      %p307 = scmp.ne.s32.totalorder %s293, %s294
      %p308 = scmp.eq.s32.totalorder %s28, 1
      %p309 = por %p307, %p308
      %p311 = scmp.ne.s32.totalorder %s294, %s310
      %p312 = scmp.eq.s32.totalorder %s28, 0
      %p313 = por %p311, %p312
      %p314 = scmp.le.s32.totalorder 1, %s22
      %p315 = scmp.lt.s32.totalorder %s22, 3
      %p316 = pnand %p314, %p315
      %p317 = pneg %p316
      // Predicated region
      $region9: #{tpu_custom_call.1} parent=5 // pred_check
        _
      $region10: #{tpu_custom_call.1} parent=5 // pred_check_branch
        %319 = sbr.rel (%p316) target = $region12
      $region11: #{tpu_custom_call.1} parent=5 // pred_region
        %s320 = ssub.s32 %s22, 1
        // Predicated region
        $region13: #{tpu_custom_call.1} parent=11 // pred_check
          %p321 = pneg %p116
        $region14: #{tpu_custom_call.1} parent=11 // pred_check_branch
          %323 = sbr.rel (%p321) target = $region16
        $region15: #{tpu_custom_call.1} parent=11 // pred_region
          _
        $region16: #{tpu_custom_call.1} parent=11 // pred_fallthru
          _
        // Predicated region
        $region17: #{tpu_custom_call.1} parent=11 // pred_check
          %p324 = pneg %p137
        $region18: #{tpu_custom_call.1} parent=11 // pred_check_branch
          %326 = sbr.rel (%p324) target = $region20
        $region19: #{tpu_custom_call.1} parent=11 // pred_region
          %328 = vsyncadd [#allocation8], 0
          %s329 = sshll.u32 %s3, 4
          %s330 = int_to_ptr.hbm [resolvable:$true] %s329
          %s331 = sshll.u32 [#allocation7], 4
          %s332 = int_to_ptr.vmem [resolvable:$true] %s331
          %337 = dma.hbm_to_vmem [thread:$0]  %s330, 256, %s332, [#allocation8], 64, 64, 4
        $region20: #{tpu_custom_call.1} parent=11 // pred_fallthru
          _
        // Predicated region
        $region21: #{tpu_custom_call.1} parent=11 // pred_check
          %p338 = pneg %p158
        $region22: #{tpu_custom_call.1} parent=11 // pred_check_branch
          %340 = sbr.rel (%p338) target = $region24
        $region23: #{tpu_custom_call.1} parent=11 // pred_region
          _
        $region24: #{tpu_custom_call.1} parent=11 // pred_fallthru
          _
        // Predicated region
        $region25: #{tpu_custom_call.1} parent=11 // pred_check
          %p341 = pneg %p179
        $region26: #{tpu_custom_call.1} parent=11 // pred_check_branch
          %343 = sbr.rel (%p341) target = $region28
        $region27: #{tpu_custom_call.1} parent=11 // pred_region
          %345 = vsyncadd [#allocation11], 0
          %s346 = sshll.u32 %s5, 4
          %s347 = int_to_ptr.hbm [resolvable:$true] %s346
          %s348 = sshll.u32 [#allocation10], 4
          %s349 = int_to_ptr.vmem [resolvable:$true] %s348
          %354 = dma.hbm_to_vmem [thread:$0]  %s347, 256, %s349, [#allocation11], 64, 64, 4
        $region28: #{tpu_custom_call.1} parent=11 // pred_fallthru
          _
        // Predicated region
        $region29: #{tpu_custom_call.1} parent=11 // pred_check
          %p355 = pneg %p200
        $region30: #{tpu_custom_call.1} parent=11 // pred_check_branch
          %357 = sbr.rel (%p355) target = $region32
        $region31: #{tpu_custom_call.1} parent=11 // pred_region
          %359 = vsyncadd [#allocation11], 0
          %s361 = sshll.u32 %s6, 4
          %s362 = int_to_ptr.hbm [resolvable:$true] %s361
          %s363 = sshll.u32 [#allocation12], 4
          %s364 = int_to_ptr.vmem [resolvable:$true] %s363
          %366 = dma.hbm_to_vmem [thread:$0]  %s362, 128, %s364, [#allocation11]
        $region32: #{tpu_custom_call.1} parent=11 // pred_fallthru
          _
        // Predicated region
        $region33: #{tpu_custom_call.1} parent=11 // pred_check
          %p367 = pneg %p226
        $region34: #{tpu_custom_call.1} parent=11 // pred_check_branch
          %369 = sbr.rel (%p367) target = $region36
        $region35: #{tpu_custom_call.1} parent=11 // pred_region
          %371 = vsyncadd [#allocation14], 0
          %s372 = smul.addr %s34, 4
          %s373 = scalar_lea.hbm %s7, %s372
          %s374 = sshll.u32 %s373, 4
          %s375 = int_to_ptr.hbm [resolvable:$true] %s374
          %s376 = sshll.u32 [#allocation13], 4
          %s377 = int_to_ptr.vmem [resolvable:$true] %s376
          %382 = dma.hbm_to_vmem [thread:$0]  %s375, 256, %s377, [#allocation14], 64, 64, 4
        $region36: #{tpu_custom_call.1} parent=11 // pred_fallthru
          _
        // Predicated region
        $region37: #{tpu_custom_call.1} parent=11 // pred_check
          %p383 = pneg %p252
        $region38: #{tpu_custom_call.1} parent=11 // pred_check_branch
          %385 = sbr.rel (%p383) target = $region40
        $region39: #{tpu_custom_call.1} parent=11 // pred_region
          %p386 = scmp.lt.s32.totalorder %s34, 0
          %s387 = scalar_select %p386, %s34, 0
          %s388 = scalar_lea.vmem %s8, %s387
        $region40: #{tpu_custom_call.1} parent=11 // pred_fallthru
          _
        // Predicated region
        $region41: #{tpu_custom_call.1} parent=11 // pred_check
          %p389 = pneg %p278
        $region42: #{tpu_custom_call.1} parent=11 // pred_check_branch
          %391 = sbr.rel (%p389) target = $region44
        $region43: #{tpu_custom_call.1} parent=11 // pred_region
          %s392 = smul.u32 8, %s34
          %p393 = scmp.lt.s32.totalorder %s392, 7
          %s394 = scalar_select %p393, %s392, 7
          %s395 = smul.addr %s394, 4
          %s396 = scalar_lea.vmem %s9, %s395
          %s397 = smul.u32 8, %s34
        $region44: #{tpu_custom_call.1} parent=11 // pred_fallthru
          _
      $region12: #{tpu_custom_call.1} parent=5 // pred_fallthru
        _
      %p398 = scmp.lt.s32.totalorder %s22, 2
      // Predicated region
      $region45: #{tpu_custom_call.1} parent=5 // pred_check
        %p399 = pneg %p398
      $region46: #{tpu_custom_call.1} parent=5 // pred_check_branch
        %401 = sbr.rel (%p399) target = $region48
      $region47: #{tpu_custom_call.1} parent=5 // pred_region
        // Predicated region
        $region49: #{tpu_custom_call.1} parent=47 // pred_check
          %p402 = pneg %p63
        $region50: #{tpu_custom_call.1} parent=47 // pred_check_branch
          %404 = sbr.rel (%p402) target = $region52
        $region51: #{tpu_custom_call.1} parent=47 // pred_region
          %p405 = scmp.lt.s32.totalorder %s29, 1
          %s406 = scalar_select %p405, %s29, 1
          %p407 = scmp.lt.s32.totalorder %s30, 0
          %s408 = scalar_select %p407, %s30, 0
          %s409 = sadd.s32 %s408, %s406
          %s410 = smul.addr %s409, 8
          %s411 = scalar_lea.vmem %s0, %s410
        $region52: #{tpu_custom_call.1} parent=47 // pred_fallthru
          _
        // Predicated region
        $region53: #{tpu_custom_call.1} parent=47 // pred_check
          %p412 = pneg %p89
        $region54: #{tpu_custom_call.1} parent=47 // pred_check_branch
          %414 = sbr.rel (%p412) target = $region56
        $region55: #{tpu_custom_call.1} parent=47 // pred_region
          %p415 = scmp.lt.s32.totalorder %s29, 1
          %s416 = scalar_select %p415, %s29, 1
          %s417 = smul.addr %s416, 8
          %s418 = scalar_lea.vmem %s1, %s417
        $region56: #{tpu_custom_call.1} parent=47 // pred_fallthru
          _
      $region48: #{tpu_custom_call.1} parent=5 // pred_fallthru
        _
      %p419 = scmp.le.s32.totalorder 1, %s22
      %p420 = scmp.lt.s32.totalorder %s22, 3
      %p421 = pnand %p419, %p420
      %p422 = pneg %p421
      // Predicated region
      $region57: #{tpu_custom_call.1} parent=5 // pred_check
        _
      $region58: #{tpu_custom_call.1} parent=5 // pred_check_branch
        %424 = sbr.rel (%p421) target = $region60
      $region59: #{tpu_custom_call.1} parent=5 // pred_region
        %s425 = ssub.s32 %s22, 1
        // Predicated region
        $region61: #{tpu_custom_call.1} parent=59 // pred_check
          %p426 = pneg %p137
        $region62: #{tpu_custom_call.1} parent=59 // pred_check_branch
          %428 = sbr.rel (%p426) target = $region64
        $region63: #{tpu_custom_call.1} parent=59 // pred_region
          %430 = dma.done [#allocation8], 256
        $region64: #{tpu_custom_call.1} parent=59 // pred_fallthru
          _
        // Predicated region
        $region65: #{tpu_custom_call.1} parent=59 // pred_check
          %p431 = pneg %p179
        $region66: #{tpu_custom_call.1} parent=59 // pred_check_branch
          %433 = sbr.rel (%p431) target = $region68
        $region67: #{tpu_custom_call.1} parent=59 // pred_region
          %435 = dma.done [#allocation11], 256
        $region68: #{tpu_custom_call.1} parent=59 // pred_fallthru
          _
        // Predicated region
        $region69: #{tpu_custom_call.1} parent=59 // pred_check
          %p436 = pneg %p200
        $region70: #{tpu_custom_call.1} parent=59 // pred_check_branch
          %438 = sbr.rel (%p436) target = $region72
        $region71: #{tpu_custom_call.1} parent=59 // pred_region
          %440 = dma.done [#allocation11], 128
        $region72: #{tpu_custom_call.1} parent=59 // pred_fallthru
          _
        // Predicated region
        $region73: #{tpu_custom_call.1} parent=59 // pred_check
          %p441 = pneg %p226
        $region74: #{tpu_custom_call.1} parent=59 // pred_check_branch
          %443 = sbr.rel (%p441) target = $region76
        $region75: #{tpu_custom_call.1} parent=59 // pred_region
          %445 = dma.done [#allocation14], 256
        $region76: #{tpu_custom_call.1} parent=59 // pred_fallthru
          _
        %p446 = scmp.lt.s32.totalorder %s32, 1
        %s447 = scalar_select %p446, %s32, 1
        %p448 = scmp.lt.s32.totalorder %s33, 0
        %s449 = scalar_select %p448, %s33, 0
        %s450 = sadd.s32 %s449, %s447
        %s451 = smul.addr %s450, 8
        %s452 = scalar_lea.vmem %s0, %s451
        %p453 = pneg %p69
        %p454 = pneg %p66
        %p455 = scmp.lt.s32.totalorder %s32, 1
        %s456 = scalar_select %p455, %s32, 1
        %s457 = smul.addr %s456, 8
        %s458 = scalar_lea.vmem %s1, %s457
        %p459 = pneg %p95
        %p460 = pneg %p92
        %p461 = pneg %p116
        %p462 = pneg %p113
        %p463 = pneg %p137
        %p464 = pneg %p134
        %p465 = pneg %p158
        %p466 = pneg %p155
        %p467 = pneg %p179
        %p468 = pneg %p176
        %p469 = pneg %p200
        %p470 = pneg %p197
        %p471 = pneg %p226
        %p472 = pneg %p223
        %p473 = scmp.lt.s32.totalorder %s34, 0
        %s474 = scalar_select %p473, %s34, 0
        %s475 = scalar_lea.vmem %s8, %s474
        %p476 = pneg %p252
        %p477 = pneg %p249
        %s478 = smul.u32 8, %s34
        %p479 = scmp.lt.s32.totalorder %s478, 7
        %s480 = scalar_select %p479, %s478, 7
        %s481 = smul.addr %s480, 4
        %s482 = scalar_lea.vmem %s9, %s481
        %p483 = pneg %p278
        %p484 = pneg %p275
        %p485 = pneg %p306
        %p486 = pneg %p303
        %s487 = sand.u32 %s293, 1
        %s488 = scalar_lea.sflag [#allocation9], %s487
        %s489 = sand.u32 %s293, 1
        %s490 = smul.addr %s489, 8
        %s491 = scalar_lea.vmem [#allocation15], %s490
        %p492 = scmp.lt.s32.totalorder %s32, 1
        %s493 = scalar_select %p492, %s32, 1
        %p494 = scmp.lt.s32.totalorder %s33, 0
        %s495 = scalar_select %p494, %s33, 0
        %s496 = sadd.s32 %s495, %s493
        %s497 = smul.addr %s496, 8
        %s498 = scalar_lea.vmem %s0, %s497
        %p499 = scmp.lt.s32.totalorder %s32, 1
        %s500 = scalar_select %p499, %s32, 1
        %s501 = smul.addr %s500, 8
        %s502 = scalar_lea.vmem %s1, %s501
        %p503 = scmp.lt.s32.totalorder %s34, 0
        %s504 = scalar_select %p503, %s34, 0
        %s505 = scalar_lea.vmem %s8, %s504
        %s506 = smul.u32 8, %s34
        %p507 = scmp.lt.s32.totalorder %s506, 7
        %s508 = scalar_select %p507, %s506, 7
        %s509 = smul.addr %s508, 4
        %s510 = scalar_lea.vmem %s9, %s509
        %s511 = smul.u32 8, %s34
        %p513 = scmp.eq.s32.totalorder %s34, 0
        // Predicated region
        $region77: #{tpu_custom_call.1} parent=59 // pred_check
          %p514 = pneg %p513
        $region78: #{tpu_custom_call.1} parent=59 // pred_check_branch
          %516 = sbr.rel (%p514) target = $region80
        $region79: #{tpu_custom_call.1} parent=59 // pred_region
          %p517 = scmp.eq.s32.totalorder %s33, 0
          // Predicated region
          $region81: #{tpu_custom_call.1} parent=79 // pred_check
            %p518 = pneg %p517
          $region82: #{tpu_custom_call.1} parent=79 // pred_check_branch
            %520 = sbr.rel (%p518) target = $region84
          $region83: #{tpu_custom_call.1} parent=79 // pred_region
            %v521 = vld [vmem:[%s4] sm:$0x1]
            %v522 = vld [vmem:[%s502] sm:$0xff]
            %v523 = vpack.c.bf16 %v522, %v522
            %v524 = vld [vmem:[#allocation7] sm:$0xf]
            %v525 = vld [vmem:[#allocation7 + $0x4] sm:$0xf]
            %v526 = vld [vmem:[#allocation7 + $0x8] sm:$0xf]
            %v527 = vld [vmem:[#allocation7 + $0xc] sm:$0xf]
            %v529 = vperm.slane %v521, 0
            %v535 = vunpack.c.l.b16 %v524
            %v536 = vunpack.c.l.b16 %v525
            %v537 = vunpack.c.l.b16 %v526
            %v538 = vunpack.c.l.b16 %v527
            %v539 = vpack.c.b16 %v536, %v535
            %v540 = vpack.c.b16 %v538, %v537
            %vm543 = vcmask 261120
            %v545 = vsel %vm543, %v523, 0
            %547 = vmatpush.bf16.msra.mxu0 0
            %548 = vmatpush.bf16.msra.mxu0 0
            %549 = vmatpush.bf16.msra.mxu0 0
            %550 = vmatpush.bf16.msra.mxu0 0
            %551 = vmatpush.bf16.msra.mxu0 0
            %552 = vmatpush.bf16.msra.mxu0 0
            %553 = vmatpush.bf16.msra.mxu0 %v540
            %554 = vmatpush.bf16.msra.mxu0 %v539
            %555 = vmatmul.bf16.gmra.mxu0 %v545
            %v556 = vpop.f32.mrf.mxu0
            %v557 = vadd.f32 %v529, %v556
            %v558 = vpop.f32.mrf.mxu0
            %559 = vdwg.mxu0
            %v560 = vpack.c.bf16 %v557, %v557
            %vm561 = vcmask 519168
            %562 = vst.msk [vmem:[#allocation2] sm:$0xf] %vm561, %v560
          $region84: #{tpu_custom_call.1} parent=79 // pred_fallthru
            _
          %v563 = vld [vmem:[%s498] sm:$0xff]
          %v564 = vpack.c.bf16 %v563, %v563
          %v565 = vld [vmem:[%s2] sm:$0xf]
          %v566 = vld [vmem:[%s2 + $0x4] sm:$0xf]
          %v567 = vld [vmem:[%s2 + $0x8] sm:$0xf]
          %v568 = vld [vmem:[%s2 + $0xc] sm:$0xf]
          %v569 = vld [vmem:[#allocation12] sm:$0x1]
          %v570 = vperm.slane %v569, 0
          %v575 = vunpack.c.l.b16 %v565
          %v576 = vunpack.c.l.b16 %v566
          %v577 = vunpack.c.l.b16 %v567
          %v578 = vunpack.c.l.b16 %v568
          %v579 = vpack.c.b16 %v576, %v575
          %v580 = vpack.c.b16 %v578, %v577
          %vm583 = vcmask 261120
          %v585 = vsel %vm583, %v564, 0
          %587 = vmatpush.bf16.msra.mxu0 0
          %588 = vmatpush.bf16.msra.mxu0 0
          %589 = vmatpush.bf16.msra.mxu0 0
          %590 = vmatpush.bf16.msra.mxu0 0
          %591 = vmatpush.bf16.msra.mxu0 0
          %592 = vmatpush.bf16.msra.mxu0 0
          %593 = vmatpush.bf16.msra.mxu0 %v580
          %594 = vmatpush.bf16.msra.mxu0 %v579
          %595 = vmatmul.bf16.gmra.mxu0 %v585
          %v596 = vpop.f32.mrf.mxu0
          %v597 = vadd.f32 %v570, %v596
          %v598 = vpop.f32.mrf.mxu0
          %599 = vdwg.mxu0
          %v600 = vpack.c.bf16 %v597, %v597
          %v601 = vld [vmem:[#allocation2] sm:$0xf]
          %vm602 = vcmask 64512
          %v604 = vsel %vm602, %v600, 0
          %v607 = vsel %vm602, %v601, 0
          %609 = vmatpush.bf16.xpose.msra.mxu0 0
          %610 = vmatpush.bf16.xpose.msra.mxu0 0
          %611 = vmatpush.bf16.xpose.msra.mxu0 0
          %612 = vmatpush.bf16.xpose.msra.mxu0 0
          %613 = vmatpush.bf16.xpose.msra.mxu0 0
          %614 = vmatpush.bf16.xpose.msra.mxu0 0
          %615 = vmatpush.bf16.xpose.msra.mxu0 0
          %616 = vmatpush.bf16.xpose.msra.mxu0 %v607
          %617 = vmatmul.bf16.gmra.mxu0 %v604
          %v618 = vpop.f32.mrf.mxu0
          %v619 = vadd.f32 0.0, %v618
          %v620 = vpop.f32.mrf.mxu0
          %621 = vdwg.mxu0
          %v622 = vmul.f32 %v619, 0.35355338
          %v623 = vsel %vm602, %v622, -inf
          %624 = vmax.xlane.f32.xlu0 %v623
          %v625 = vpop.xlane.xlu0 %624
          %v626 = vsub.f32 %v622, %v625
          %v627 = vmul.f32 %v626, 1.442695
          %v628 = vpow.pop %v627
          %v629 = vsel %vm602, %v628, 0.0
          %630 = vadd.xlane.f32.xlu0 %v629
          %v631 = vpop.xlane.xlu0 %630
          %v632 = vrcp.pop %v631
          %v633 = vmul.f32 %v631, %v632
          %v634 = vsub.f32 1.0, %v633
          %v635 = vmul.f32 %v632, %v634
          %v636 = vadd.f32 %v632, %v635
          %vm637 = vweird.f32 %v631
          %vm638 = vweird.f32 %v632
          %vm639 = vmor %vm637, %vm638
          %v640 = vsel %vm639, %v632, %v636
          %v641 = vand.u32 2147483647, %v631
          %vm642 = vcmp.eq.f32.partialorder %v641, 8.507059e+37
          %v643 = vand.u32 %v631, 2147483648
          %v644 = vor.u32 1.1754944e-38, %v643
          %v645 = vsel %vm642, %v644, %v640
          %v646 = vmul.f32 %v628, %v645
          %v647 = vpack.c.bf16 %v646, %v646
          %v649 = vunpack.c.l.b16 %v601
          %v650 = vpack.c.b16 %v649, %v649
          %651 = vrot.lane.b32.xlu0 %v650, 96
          %v652 = vpop.permute.xlu0 %651
          %v654 = vsel %vm602, %v647, 0
          %vm656 = vcmask 1043456
          %v658 = vsel %vm656, %v652, 0
          %660 = vmatpush.bf16.msra.mxu0 0
          %661 = vmatpush.bf16.msra.mxu0 0
          %662 = vmatpush.bf16.msra.mxu0 0
          %663 = vmatpush.bf16.msra.mxu0 0
          %664 = vmatpush.bf16.msra.mxu0 0
          %665 = vmatpush.bf16.msra.mxu0 0
          %666 = vmatpush.bf16.msra.mxu0 0
          %667 = vmatpush.bf16.msra.mxu0 %v658
          %668 = vmatmul.bf16.gmra.mxu0 %v654
          %v669 = vpop.f32.mrf.mxu0
          %v670 = vadd.f32 0.0, %v669
          %v671 = vpop.f32.mrf.mxu0
          %672 = vdwg.mxu0
          %673 = vst.msk [vmem:[#allocation3] sm:$0xff] %vm602, %v670
          %v674 = vld [vmem:[#allocation2] sm:$0xf]
          %v676 = vunpack.c.l.b16 %v600
          %v677 = vpack.c.b16 %v676, %v676
          %678 = vrot.lane.b32.xlu0 %v677, 120
          %v679 = vpop.permute.xlu0 %678
          %v681 = vunpack.c.l.b16 %v674
          %v682 = vpack.c.b16 %v681, %v681
          %683 = vrot.lane.b32.xlu0 %v682, 120
          %v684 = vpop.permute.xlu0 %683
          %v686 = vsel %vm602, %v679, 0
          %v689 = vsel %vm602, %v684, 0
          %691 = vmatpush.bf16.xpose.msra.mxu0 0
          %692 = vmatpush.bf16.xpose.msra.mxu0 0
          %693 = vmatpush.bf16.xpose.msra.mxu0 0
          %694 = vmatpush.bf16.xpose.msra.mxu0 0
          %695 = vmatpush.bf16.xpose.msra.mxu0 0
          %696 = vmatpush.bf16.xpose.msra.mxu0 0
          %697 = vmatpush.bf16.xpose.msra.mxu0 0
          %698 = vmatpush.bf16.xpose.msra.mxu0 %v689
          %699 = vmatmul.bf16.gmra.mxu0 %v686
          %v700 = vpop.f32.mrf.mxu0
          %v701 = vadd.f32 0.0, %v700
          %v702 = vpop.f32.mrf.mxu0
          %703 = vdwg.mxu0
          %v704 = vmul.f32 %v701, 0.35355338
          %v705 = vsel %vm602, %v704, -inf
          %706 = vmax.xlane.f32.xlu0 %v705
          %v707 = vpop.xlane.xlu0 %706
          %v708 = vsub.f32 %v704, %v707
          %v709 = vmul.f32 %v708, 1.442695
          %v710 = vpow.pop %v709
          %v711 = vsel %vm602, %v710, 0.0
          %712 = vadd.xlane.f32.xlu0 %v711
          %v713 = vpop.xlane.xlu0 %712
          %v714 = vrcp.pop %v713
          %v715 = vmul.f32 %v713, %v714
          %v716 = vsub.f32 1.0, %v715
          %v717 = vmul.f32 %v714, %v716
          %v718 = vadd.f32 %v714, %v717
          %vm719 = vweird.f32 %v713
          %vm720 = vweird.f32 %v714
          %vm721 = vmor %vm719, %vm720
          %v722 = vsel %vm721, %v714, %v718
          %v723 = vand.u32 2147483647, %v713
          %vm724 = vcmp.eq.f32.partialorder %v723, 8.507059e+37
          %v725 = vand.u32 %v713, 2147483648
          %v726 = vor.u32 1.1754944e-38, %v725
          %v727 = vsel %vm724, %v726, %v722
          %v728 = vmul.f32 %v710, %v727
          %v729 = vpack.c.bf16 %v728, %v728
          %730 = vrot.lane.b32.xlu0 %v682, 88
          %v731 = vpop.permute.xlu0 %730
          %v733 = vsel %vm602, %v729, 0
          %v736 = vsel %vm656, %v731, 0
          %738 = vmatpush.bf16.msra.mxu0 0
          %739 = vmatpush.bf16.msra.mxu0 0
          %740 = vmatpush.bf16.msra.mxu0 0
          %741 = vmatpush.bf16.msra.mxu0 0
          %742 = vmatpush.bf16.msra.mxu0 0
          %743 = vmatpush.bf16.msra.mxu0 0
          %744 = vmatpush.bf16.msra.mxu0 0
          %745 = vmatpush.bf16.msra.mxu0 %v736
          %746 = vmatmul.bf16.gmra.mxu0 %v733
          %v747 = vpop.f32.mrf.mxu0
          %v748 = vadd.f32 0.0, %v747
          %v749 = vpop.f32.mrf.mxu0
          %750 = vdwg.mxu0
          %752 = vrot.lane.b32.xlu0 %v748, 8
          %v753 = vpop.permute.xlu0 %752
          %vm755 = vcmask 130112
          %756 = vst.msk [vmem:[#allocation3] sm:$0xff] %vm755, %v753
          %v757 = vld [vmem:[#allocation2] sm:$0xf]
          %758 = vrot.lane.b32.xlu0 %v677, 112
          %v759 = vpop.permute.xlu0 %758
          %v761 = vunpack.c.l.b16 %v757
          %v762 = vpack.c.b16 %v761, %v761
          %763 = vrot.lane.b32.xlu0 %v762, 112
          %v764 = vpop.permute.xlu0 %763
          %v766 = vsel %vm602, %v759, 0
          %v769 = vsel %vm602, %v764, 0
          %771 = vmatpush.bf16.xpose.msra.mxu0 0
          %772 = vmatpush.bf16.xpose.msra.mxu0 0
          %773 = vmatpush.bf16.xpose.msra.mxu0 0
          %774 = vmatpush.bf16.xpose.msra.mxu0 0
          %775 = vmatpush.bf16.xpose.msra.mxu0 0
          %776 = vmatpush.bf16.xpose.msra.mxu0 0
          %777 = vmatpush.bf16.xpose.msra.mxu0 0
          %778 = vmatpush.bf16.xpose.msra.mxu0 %v769
          %779 = vmatmul.bf16.gmra.mxu0 %v766
          %v780 = vpop.f32.mrf.mxu0
          %v781 = vadd.f32 0.0, %v780
          %v782 = vpop.f32.mrf.mxu0
          %783 = vdwg.mxu0
          %v784 = vmul.f32 %v781, 0.35355338
          %v785 = vsel %vm602, %v784, -inf
          %786 = vmax.xlane.f32.xlu0 %v785
          %v787 = vpop.xlane.xlu0 %786
          %v788 = vsub.f32 %v784, %v787
          %v789 = vmul.f32 %v788, 1.442695
          %v790 = vpow.pop %v789
          %v791 = vsel %vm602, %v790, 0.0
          %792 = vadd.xlane.f32.xlu0 %v791
          %v793 = vpop.xlane.xlu0 %792
          %v794 = vrcp.pop %v793
          %v795 = vmul.f32 %v793, %v794
          %v796 = vsub.f32 1.0, %v795
          %v797 = vmul.f32 %v794, %v796
          %v798 = vadd.f32 %v794, %v797
          %vm799 = vweird.f32 %v793
          %vm800 = vweird.f32 %v794
          %vm801 = vmor %vm799, %vm800
          %v802 = vsel %vm801, %v794, %v798
          %v803 = vand.u32 2147483647, %v793
          %vm804 = vcmp.eq.f32.partialorder %v803, 8.507059e+37
          %v805 = vand.u32 %v793, 2147483648
          %v806 = vor.u32 1.1754944e-38, %v805
          %v807 = vsel %vm804, %v806, %v802
          %v808 = vmul.f32 %v790, %v807
          %v809 = vpack.c.bf16 %v808, %v808
          %810 = vrot.lane.b32.xlu0 %v762, 80
          %v811 = vpop.permute.xlu0 %810
          %v813 = vsel %vm602, %v809, 0
          %v816 = vsel %vm656, %v811, 0
          %818 = vmatpush.bf16.msra.mxu0 0
          %819 = vmatpush.bf16.msra.mxu0 0
          %820 = vmatpush.bf16.msra.mxu0 0
          %821 = vmatpush.bf16.msra.mxu0 0
          %822 = vmatpush.bf16.msra.mxu0 0
          %823 = vmatpush.bf16.msra.mxu0 0
          %824 = vmatpush.bf16.msra.mxu0 0
          %825 = vmatpush.bf16.msra.mxu0 %v816
          %826 = vmatmul.bf16.gmra.mxu0 %v813
          %v827 = vpop.f32.mrf.mxu0
          %v828 = vadd.f32 0.0, %v827
          %v829 = vpop.f32.mrf.mxu0
          %830 = vdwg.mxu0
          %832 = vrot.lane.b32.xlu0 %v828, 16
          %v833 = vpop.permute.xlu0 %832
          %vm835 = vcmask 195712
          %836 = vst.msk [vmem:[#allocation3] sm:$0xff] %vm835, %v833
          %v837 = vld [vmem:[#allocation2] sm:$0xf]
          %838 = vrot.lane.b32.xlu0 %v677, 104
          %v839 = vpop.permute.xlu0 %838
          %v841 = vunpack.c.l.b16 %v837
          %v842 = vpack.c.b16 %v841, %v841
          %843 = vrot.lane.b32.xlu0 %v842, 104
          %v844 = vpop.permute.xlu0 %843
          %v846 = vsel %vm602, %v839, 0
          %v849 = vsel %vm602, %v844, 0
          %851 = vmatpush.bf16.xpose.msra.mxu0 0
          %852 = vmatpush.bf16.xpose.msra.mxu0 0
          %853 = vmatpush.bf16.xpose.msra.mxu0 0
          %854 = vmatpush.bf16.xpose.msra.mxu0 0
          %855 = vmatpush.bf16.xpose.msra.mxu0 0
          %856 = vmatpush.bf16.xpose.msra.mxu0 0
          %857 = vmatpush.bf16.xpose.msra.mxu0 0
          %858 = vmatpush.bf16.xpose.msra.mxu0 %v849
          %859 = vmatmul.bf16.gmra.mxu0 %v846
          %v860 = vpop.f32.mrf.mxu0
          %v861 = vadd.f32 0.0, %v860
          %v862 = vpop.f32.mrf.mxu0
          %863 = vdwg.mxu0
          %v864 = vmul.f32 %v861, 0.35355338
          %v865 = vsel %vm602, %v864, -inf
          %866 = vmax.xlane.f32.xlu0 %v865
          %v867 = vpop.xlane.xlu0 %866
          %v868 = vsub.f32 %v864, %v867
          %v869 = vmul.f32 %v868, 1.442695
          %v870 = vpow.pop %v869
          %v871 = vsel %vm602, %v870, 0.0
          %872 = vadd.xlane.f32.xlu0 %v871
          %v873 = vpop.xlane.xlu0 %872
          %v874 = vrcp.pop %v873
          %v875 = vmul.f32 %v873, %v874
          %v876 = vsub.f32 1.0, %v875
          %v877 = vmul.f32 %v874, %v876
          %v878 = vadd.f32 %v874, %v877
          %vm879 = vweird.f32 %v873
          %vm880 = vweird.f32 %v874
          %vm881 = vmor %vm879, %vm880
          %v882 = vsel %vm881, %v874, %v878
          %v883 = vand.u32 2147483647, %v873
          %vm884 = vcmp.eq.f32.partialorder %v883, 8.507059e+37
          %v885 = vand.u32 %v873, 2147483648
          %v886 = vor.u32 1.1754944e-38, %v885
          %v887 = vsel %vm884, %v886, %v882
          %v888 = vmul.f32 %v870, %v887
          %v889 = vpack.c.bf16 %v888, %v888
          %890 = vrot.lane.b32.xlu0 %v842, 72
          %v891 = vpop.permute.xlu0 %890
          %v893 = vsel %vm602, %v889, 0
          %v896 = vsel %vm656, %v891, 0
          %898 = vmatpush.bf16.msra.mxu0 0
          %899 = vmatpush.bf16.msra.mxu0 0
          %900 = vmatpush.bf16.msra.mxu0 0
          %901 = vmatpush.bf16.msra.mxu0 0
          %902 = vmatpush.bf16.msra.mxu0 0
          %903 = vmatpush.bf16.msra.mxu0 0
          %904 = vmatpush.bf16.msra.mxu0 0
          %905 = vmatpush.bf16.msra.mxu0 %v896
          %906 = vmatmul.bf16.gmra.mxu0 %v893
          %v907 = vpop.f32.mrf.mxu0
          %v908 = vadd.f32 0.0, %v907
          %v909 = vpop.f32.mrf.mxu0
          %910 = vdwg.mxu0
          %912 = vrot.lane.b32.xlu0 %v908, 24
          %v913 = vpop.permute.xlu0 %912
          %vm915 = vcmask 261312
          %916 = vst.msk [vmem:[#allocation3] sm:$0xff] %vm915, %v913
          %v917 = vld [vmem:[#allocation3] sm:$0xff]
          %v918 = vpack.c.bf16 %v917, %v917
          %v919 = vld [vmem:[#allocation10] sm:$0xf]
          %v920 = vld [vmem:[#allocation10 + $0x4] sm:$0xf]
          %v921 = vld [vmem:[#allocation10 + $0x8] sm:$0xf]
          %v922 = vld [vmem:[#allocation10 + $0xc] sm:$0xf]
          %v923 = vld [vmem:[#allocation12 + $0x1] sm:$0x1]
          %v924 = vperm.slane %v923, 0
          %v929 = vunpack.c.l.b16 %v919
          %v930 = vunpack.c.l.b16 %v920
          %v931 = vunpack.c.l.b16 %v921
          %v932 = vunpack.c.l.b16 %v922
          %v933 = vpack.c.b16 %v930, %v929
          %v934 = vpack.c.b16 %v932, %v931
          %v938 = vsel %vm583, %v918, 0
          %940 = vmatpush.bf16.msra.mxu0 0
          %941 = vmatpush.bf16.msra.mxu0 0
          %942 = vmatpush.bf16.msra.mxu0 0
          %943 = vmatpush.bf16.msra.mxu0 0
          %944 = vmatpush.bf16.msra.mxu0 0
          %945 = vmatpush.bf16.msra.mxu0 0
          %946 = vmatpush.bf16.msra.mxu0 %v934
          %947 = vmatpush.bf16.msra.mxu0 %v933
          %948 = vmatmul.bf16.gmra.mxu0 %v938
          %v949 = vpop.f32.mrf.mxu0
          %v950 = vadd.f32 %v924, %v949
          %v951 = vpop.f32.mrf.mxu0
          %952 = vdwg.mxu0
          %v953 = vadd.f32 %v563, %v950
          %v954 = vld [vmem:[#allocation12 + $0x2] sm:$0x1]
          %v955 = vld [vmem:[#allocation12 + $0x3] sm:$0x1]
          %v956 = vsel %vm583, %v953, 0.0
          %957 = vadd.xlane.f32.xlu0 %v956
          %v958 = vpop.xlane.xlu0 %957
          %v959 = vrcp.pop 32.0
          %v960 = vmul.f32 32.0, %v959
          %v961 = vsub.f32 1.0, %v960
          %v962 = vmul.f32 %v959, %v961
          %v963 = vadd.f32 %v959, %v962
          %vm964 = vweird.f32 %v959
          %v965 = vsel %vm964, %v959, %v963
          %v966 = vmul.f32 %v958, %v965
          %v967 = vsub.f32 %v953, %v966
          %v968 = vmul.f32 %v967, %v967
          %v969 = vsel %vm583, %v968, 0.0
          %970 = vadd.xlane.f32.xlu0 %v969
          %v971 = vpop.xlane.xlu0 %970
          %v972 = vmul.f32 %v971, %v965
          %v973 = vadd.f32 %v972, 1e-05
          %v974 = vrsqrt.pop %v973
          %v975 = vmul.f32 %v974, %v973
          %v976 = vmul.f32 %v975, %v974
          %v977 = vmul.f32 0.5, %v976
          %v978 = vsub.f32 1.5, %v977
          %v979 = vmul.f32 %v974, %v978
          %vm980 = vweird.f32 %v973
          %vm981 = vweird.f32 %v974
          %vm982 = vmor %vm980, %vm981
          %v983 = vsel %vm982, %v974, %v979
          %v984 = vmul.f32 %v967, %v983
          %v985 = vperm.slane %v954, 0
          %v986 = vmul.f32 %v984, %v985
          %v987 = vperm.slane %v955, 0
          %v988 = vadd.f32 %v986, %v987
          %989 = vst.msk [vmem:[#allocation4] sm:$0xff] %vm583, %v988
          %v990 = vpack.c.bf16 %v988, %v988
          %vm991 = vcmask 257024
          %992 = vst.msk [vmem:[#allocation5] sm:$0xf] %vm991, %v990
          %993 = vst.msk [vmem:[#allocation6] sm:$0xff] %vm583, 0.0
        $region80: #{tpu_custom_call.1} parent=59 // pred_fallthru
          _
        %v994 = vld [vmem:[#allocation5] sm:$0xf]
        %v995 = vld [vmem:[#allocation13] sm:$0xf]
        %v996 = vld [vmem:[#allocation13 + $0x4] sm:$0xf]
        %v997 = vld [vmem:[#allocation13 + $0x8] sm:$0xf]
        %v998 = vld [vmem:[#allocation13 + $0xc] sm:$0xf]
        %v999 = vld [vmem:[%s505] sm:$0x1]
        %v1001 = vperm.slane %v999, 0
        %v1007 = vunpack.c.l.b16 %v995
        %v1008 = vunpack.c.l.b16 %v996
        %v1009 = vunpack.c.l.b16 %v997
        %v1010 = vunpack.c.l.b16 %v998
        %v1011 = vpack.c.b16 %v1008, %v1007
        %v1012 = vpack.c.b16 %v1010, %v1009
        %vm1015 = vcmask 261120
        %v1017 = vsel %vm1015, %v994, 0
        %1019 = vmatpush.bf16.msra.mxu0 0
        %1020 = vmatpush.bf16.msra.mxu0 0
        %1021 = vmatpush.bf16.msra.mxu0 0
        %1022 = vmatpush.bf16.msra.mxu0 0
        %1023 = vmatpush.bf16.msra.mxu0 0
        %1024 = vmatpush.bf16.msra.mxu0 0
        %1025 = vmatpush.bf16.msra.mxu0 %v1012
        %1026 = vmatpush.bf16.msra.mxu0 %v1011
        %1027 = vmatmul.bf16.gmra.mxu0 %v1017
        %v1028 = vpop.f32.mrf.mxu0
        %v1029 = vadd.f32 %v1001, %v1028
        %v1030 = vpop.f32.mrf.mxu0
        %1031 = vdwg.mxu0
        %v1032 = vmax.f32 %v1029, 0.0
        %v1033 = vld [vmem:[#allocation6] sm:$0xff]
        %v1034 = vpack.c.bf16 %v1032, %v1032
        %v1035 = vld [vmem:[%s510] sm:$0xf]
        %v1036 = vld [vmem:[%s510 + $0x4] sm:$0xf]
        %v1037 = vld [vmem:[%s510 + $0x8] sm:$0xf]
        %v1038 = vld [vmem:[%s510 + $0xc] sm:$0xf]
        %v1039 = vld [vmem:[%s510 + $0x10] sm:$0xf]
        %v1040 = vld [vmem:[%s510 + $0x14] sm:$0xf]
        %v1041 = vld [vmem:[%s510 + $0x18] sm:$0xf]
        %v1042 = vld [vmem:[%s510 + $0x1c] sm:$0xf]
        %v1051 = vunpack.c.l.b16 %v1035
        %v1052 = vunpack.c.l.b16 %v1036
        %v1053 = vunpack.c.l.b16 %v1037
        %v1054 = vunpack.c.l.b16 %v1038
        %v1055 = vunpack.c.l.b16 %v1039
        %v1056 = vunpack.c.l.b16 %v1040
        %v1057 = vunpack.c.l.b16 %v1041
        %v1058 = vunpack.c.l.b16 %v1042
        %v1059 = vpack.c.b16 %v1052, %v1051
        %v1060 = vpack.c.b16 %v1054, %v1053
        %v1061 = vpack.c.b16 %v1056, %v1055
        %v1062 = vpack.c.b16 %v1058, %v1057
        %vm1067 = vcmask 523264
        %v1069 = vsel %vm1067, %v1034, 0
        %1071 = vmatpush.bf16.msra.mxu0 0
        %1072 = vmatpush.bf16.msra.mxu0 0
        %1073 = vmatpush.bf16.msra.mxu0 0
        %1074 = vmatpush.bf16.msra.mxu0 0
        %1075 = vmatpush.bf16.msra.mxu0 %v1062
        %1076 = vmatpush.bf16.msra.mxu0 %v1061
        %1077 = vmatpush.bf16.msra.mxu0 %v1060
        %1078 = vmatpush.bf16.msra.mxu0 %v1059
        %1079 = vmatmul.bf16.gmra.mxu0 %v1069
        %v1080 = vpop.f32.mrf.mxu0
        %v1081 = vadd.f32 0.0, %v1080
        %v1082 = vpop.f32.mrf.mxu0
        %1083 = vdwg.mxu0
        %v1084 = vadd.f32 %v1033, %v1081
        %1085 = vst.msk [vmem:[#allocation6] sm:$0xff] %vm1015, %v1084
        // Predicated region
        $region85: #{tpu_custom_call.1} parent=59 // pred_check
          %p1086 = pneg %p513
        $region86: #{tpu_custom_call.1} parent=59 // pred_check_branch
          %1088 = sbr.rel (%p1086) target = $region88
        $region87: #{tpu_custom_call.1} parent=59 // pred_region
          %v1089 = vld [vmem:[#allocation4] sm:$0xff]
          %v1090 = vld [vmem:[#allocation6] sm:$0xff]
          %v1091 = vadd.f32 %v1089, %v1090
          %v1092 = vld [vmem:[#allocation12 + $0x4] sm:$0x1]
          %v1093 = vperm.slane %v1092, 0
          %v1094 = vadd.f32 %v1091, %v1093
          %v1095 = vld [vmem:[#allocation12 + $0x5] sm:$0x1]
          %v1096 = vld [vmem:[#allocation12 + $0x6] sm:$0x1]
          %v1097 = vsel %vm1015, %v1094, 0.0
          %1098 = vadd.xlane.f32.xlu0 %v1097
          %v1099 = vpop.xlane.xlu0 %1098
          %v1100 = vrcp.pop 32.0
          %v1101 = vmul.f32 32.0, %v1100
          %v1102 = vsub.f32 1.0, %v1101
          %v1103 = vmul.f32 %v1100, %v1102
          %v1104 = vadd.f32 %v1100, %v1103
          %vm1105 = vweird.f32 %v1100
          %v1106 = vsel %vm1105, %v1100, %v1104
          %v1107 = vmul.f32 %v1099, %v1106
          %v1108 = vsub.f32 %v1094, %v1107
          %v1109 = vmul.f32 %v1108, %v1108
          %v1110 = vsel %vm1015, %v1109, 0.0
          %1111 = vadd.xlane.f32.xlu0 %v1110
          %v1112 = vpop.xlane.xlu0 %1111
          %v1113 = vmul.f32 %v1112, %v1106
          %v1114 = vadd.f32 %v1113, 1e-05
          %v1115 = vrsqrt.pop %v1114
          %v1116 = vmul.f32 %v1115, %v1114
          %v1117 = vmul.f32 %v1116, %v1115
          %v1118 = vmul.f32 0.5, %v1117
          %v1119 = vsub.f32 1.5, %v1118
          %v1120 = vmul.f32 %v1115, %v1119
          %vm1121 = vweird.f32 %v1114
          %vm1122 = vweird.f32 %v1115
          %vm1123 = vmor %vm1121, %vm1122
          %v1124 = vsel %vm1123, %v1115, %v1120
          %v1125 = vmul.f32 %v1108, %v1124
          %v1126 = vperm.slane %v1095, 0
          %v1127 = vmul.f32 %v1125, %v1126
          %v1128 = vperm.slane %v1096, 0
          %v1129 = vadd.f32 %v1127, %v1128
          %1130 = vst.msk [vmem:[%s491] sm:$0xff] %vm1015, %v1129
        $region88: #{tpu_custom_call.1} parent=59 // pred_fallthru
          _
        %s1131 = sand.u32 %s293, 1
        %s1132 = scalar_lea.sflag [#allocation9], %s1131
        %s1133 = sand.u32 %s293, 1
        %s1134 = smul.addr %s1133, 8
        %s1135 = scalar_lea.vmem [#allocation15], %s1134
        // Predicated region
        $region89: #{tpu_custom_call.1} parent=59 // pred_check
          %p1136 = pneg %p303
        $region90: #{tpu_custom_call.1} parent=59 // pred_check_branch
          %1138 = sbr.rel (%p1136) target = $region92
        $region91: #{tpu_custom_call.1} parent=59 // pred_region
          %1140 = vsyncadd %s1132, 0
          %s1141 = sadd.s32 %s33, %s32
          %s1142 = smul.addr %s1141, 8
          %s1143 = scalar_lea.hbm %s10, %s1142
          %s1145 = sshll.u32 %s1135, 4
          %s1146 = int_to_ptr.vmem [resolvable:$true] %s1145
          %s1147 = sshll.u32 %s1143, 4
          %s1148 = int_to_ptr.hbm [resolvable:$true] %s1147
          %1150 = dma.vmem_to_hbm [thread:$0]  %s1146, 128, %s1148, %s1132
        $region92: #{tpu_custom_call.1} parent=59 // pred_fallthru
          _
      $region60: #{tpu_custom_call.1} parent=5 // pred_fallthru
        _
      %p1151 = scmp.le.s32.totalorder 2, %s22
      // Predicated region
      $region93: #{tpu_custom_call.1} parent=5 // pred_check
        %p1152 = pneg %p1151
      $region94: #{tpu_custom_call.1} parent=5 // pred_check_branch
        %1154 = sbr.rel (%p1152) target = $region96
      $region95: #{tpu_custom_call.1} parent=5 // pred_region
        %s1155 = ssub.s32 %s22, 2
        // Predicated region
        $region97: #{tpu_custom_call.1} parent=95 // pred_check
          %p1156 = pneg %p309
        $region98: #{tpu_custom_call.1} parent=95 // pred_check_branch
          %1158 = sbr.rel (%p1156) target = $region100
        $region99: #{tpu_custom_call.1} parent=95 // pred_region
          %s1159 = sand.u32 %s294, 1
          %s1160 = scalar_lea.sflag [#allocation9], %s1159
          %s1161 = sand.u32 %s294, 1
          %s1162 = smul.addr %s1161, 8
          %s1163 = scalar_lea.vmem [#allocation15], %s1162
          %1165 = dma.done %s1160, 128
        $region100: #{tpu_custom_call.1} parent=95 // pred_fallthru
          _
      $region96: #{tpu_custom_call.1} parent=5 // pred_fallthru
        _
    $region6: #{tpu_custom_call.1} parent=1 // loop_footer
      %s26 = sadd.s32 1, %s22
    $region7: #{tpu_custom_call.1} parent=1 // loop_footer_branch
      %21 = sbr.rel target = $region3
    $region8: #{tpu_custom_call.1} parent=1 // loop_exit
      _
    %1166 = vsyncpa [#allocation8], 1
    %s1167 = scalar_lea.sflag [#allocation8], 1
    %1168 = vsyncpa %s1167, 1
    %1169 = vsyncpa [#allocation11], 1
    %1170 = vsyncpa [#allocation14], 1
    %1171 = vsyncpa [#allocation9], 1
    %s1172 = scalar_lea.sflag [#allocation9], 1
    %1173 = vsyncpa %s1172, 1

</llo_original>
